<compile_context>
chip_gen: v7x
topology: tpu7x:2x2x1
jax: 0.10.0
libtpu: 0.0.40
codegen_flags: <defaults>
</compile_context>

<pallas_src>
import functools

import jax
import jax.numpy as jnp
from jax.experimental import pallas as pl
from jax.experimental.pallas import tpu as pltpu


def _wrapper_fused_kernel(num_labels, pack,
                          logits_ref, w1_ref, b1_ref, w2_ref, b2_ref,
                          out_ref, probs_ref):
    # logits: (T, pack*L) packed rows;  w1: (pack*L, pack*H) block-diagonal;
    # b1: (1, pack*H);  w2: (pack*H, pack) block-diagonal;  b2: (1, 1) scalar in SMEM.
    x = logits_ref[...]
    lane = jax.lax.broadcasted_iota(jnp.int32, x.shape, 1)

    # --- simulated model.predict(x): numerically-stable softmax per num_labels segment ---
    probs = jnp.zeros_like(x)
    for s in range(pack):                       # static, unrolled (pack <= 4 here)
        mask = (lane >= s * num_labels) & (lane < (s + 1) * num_labels)
        xm = jnp.where(mask, x, jnp.float32(-1e30))
        m = jnp.max(xm, axis=-1, keepdims=True)         # XLU reduce
        e = jnp.exp(xm - m)                             # EUP; off-segment lanes underflow to 0
        denom = jnp.sum(e, axis=-1, keepdims=True)      # XLU reduce
        probs = probs + e * pl.reciprocal(denom, approx=False)   # EUP recip, VPU mul
    probs_ref[...] = probs.astype(probs_ref.dtype)      # lane-dense (all 128 lanes) store

    # --- Linear(num_labels -> 128) + ReLU: one MXU matmul on block-diagonal weights ---
    h = jnp.dot(probs, w1_ref[...],
                preferred_element_type=jnp.float32,
                precision=jax.lax.Precision.HIGHEST) + b1_ref[...]
    h = jnp.maximum(h, 0.0)

    # --- Linear(128 -> 1), packed to (T, pack), + Sigmoid (EUP) ---
    y = jnp.dot(h, w2_ref[...],
                preferred_element_type=jnp.float32,
                precision=jax.lax.Precision.HIGHEST) + b2_ref[0, 0]
    out_ref[...] = jax.nn.sigmoid(y).astype(out_ref.dtype)


def model_wrapper_forward(x_logits, params, *, tile_rows=None):
    """
    Mirrors ModelWrapper.forward:
        probs  = model.predict(x)          (simulated: softmax of logits, fused in-kernel)
        output = sigmoid(linear2(relu(linear1(probs))))
        return (output, probs)
    """
    B, L = x_logits.shape
    w1, b1, w2, b2 = params["w1"], params["b1"], params["w2"], params["b2"]
    H = w1.shape[1]

    # Lane-packing factor: pack `pack` batch rows into one 128-lane vreg row when possible.
    pack = 128 // L if (L <= 128 and 128 % L == 0 and B % (128 // L) == 0) else 1
    R = B // pack

    # Largest row tile that divides R (amortizes ~0.35us/step overhead; VMEM is a non-issue).
    if tile_rows is None:
        tile_rows = min(R, 512)
    if R % tile_rows != 0 or (tile_rows % 8 != 0 and tile_rows != R):
        tile_rows = R

    # Block-diagonal packed weights (built once in the wrapper; stay VMEM-resident).
    if pack == 1:
        w1_p, b1_p, w2_p = w1, b1, w2.T                    # (L,H), (1,H), (H,1)
    else:
        w1_p = jnp.zeros((pack * L, pack * H), w1.dtype)
        w2_p = jnp.zeros((pack * H, pack), w2.dtype)
        for s in range(pack):
            w1_p = w1_p.at[s * L:(s + 1) * L, s * H:(s + 1) * H].set(w1)
            w2_p = w2_p.at[s * H:(s + 1) * H, s].set(w2[0])
        b1_p = jnp.tile(b1, (1, pack))

    x_packed = x_logits.reshape(R, pack * L)               # free row-major view

    cost = pl.CostEstimate(
        flops=2 * R * (pack * L) * (pack * H) + 2 * R * (pack * H) * pack + 6 * B * L,
        transcendentals=R * pack * (pack * L) + R * pack + B,
        bytes_accessed=4 * (2 * R * pack * L + (pack * L) * (pack * H)
                            + (pack * H) * (pack + 1) + R * pack + 1),
    )

    kernel = functools.partial(_wrapper_fused_kernel, L, pack)

    out_p, probs_p = pl.pallas_call(
        kernel,
        out_shape=(
            jax.ShapeDtypeStruct((R, pack), jnp.float32),          # packed sigmoid output
            jax.ShapeDtypeStruct((R, pack * L), jnp.float32),      # packed probs
        ),
        grid=(R // tile_rows,),
        in_specs=[
            pl.BlockSpec((tile_rows, pack * L), lambda i: (i, 0)),     # logits: streamed
            pl.BlockSpec((pack * L, pack * H), lambda i: (0, 0)),      # w1: VMEM-resident
            pl.BlockSpec((1, pack * H), lambda i: (0, 0)),             # b1: VMEM-resident
            pl.BlockSpec((pack * H, pack), lambda i: (0, 0)),          # w2: VMEM-resident
            pl.BlockSpec(memory_space=pltpu.MemorySpace.SMEM),         # b2: scalar in SMEM
        ],
        out_specs=(
            pl.BlockSpec((tile_rows, pack), lambda i: (i, 0)),
            pl.BlockSpec((tile_rows, pack * L), lambda i: (i, 0)),
        ),
        compiler_params=pltpu.CompilerParams(
            dimension_semantics=("parallel",)),                        # megacore / v7x 2-TC
        cost_estimate=cost,
    )(x_packed, w1_p, b1_p, w2_p, b2)

    return out_p.reshape(B, 1), probs_p.reshape(B, L)


def init_params(key, num_labels, hidden=128):
    k1, k2, k3, k4 = jax.random.split(key, 4)
    # torch.nn.Linear default init: U(-1/sqrt(fan_in), 1/sqrt(fan_in))
    lim1 = 1.0 / jnp.sqrt(num_labels)
    lim2 = 1.0 / jnp.sqrt(hidden)
    # w1 stored as (in, out) == transposed torch weight, so the kernel does x @ w1
    w1 = jax.random.uniform(k1, (num_labels, hidden), jnp.float32, -lim1, lim1)
    b1 = jax.random.uniform(k2, (1, hidden), jnp.float32, -lim1, lim1)
    # w2 stored as a (1, hidden) lane-dense row (== torch linear2.weight layout)
    w2 = jax.random.uniform(k3, (1, hidden), jnp.float32, -lim2, lim2)
    b2 = jax.random.uniform(k4, (1, 1), jnp.float32, -lim2, lim2)
    return {"w1": w1, "b1": b1, "w2": w2, "b2": b2}


if __name__ == "__main__":
    B = 64            # batch of "texts" (small; divisible by pack=4 and by 8*pack row tiles)
    NUM_LABELS = 32   # args.num_labels
    HIDDEN = 128      # fixed by the module: nn.Linear(num_labels, 128)

    key = jax.random.PRNGKey(0)
    k_in, k_par = jax.random.split(key)

    # Simulated base-model per-label logits for the batch of input texts.
    x_logits = jax.random.normal(k_in, (B, NUM_LABELS), jnp.float32)
    params = init_params(k_par, NUM_LABELS, HIDDEN)

    # tile_rows=8 -> grid=(2,): exercises the parallel B axis with VMEM-resident weights.
    output, probs = model_wrapper_forward(x_logits, params, tile_rows=8)
    jax.block_until_ready((output, probs))

    # Reference in plain JAX (HIGHEST precision to match the in-kernel f32 matmuls).
    probs_ref = jax.nn.softmax(x_logits, axis=-1)
    h_ref = jnp.maximum(
        jnp.dot(probs_ref, params["w1"], precision=jax.lax.Precision.HIGHEST) + params["b1"],
        0.0)
    out_ref = jax.nn.sigmoid(
        jnp.dot(h_ref, params["w2"].T, precision=jax.lax.Precision.HIGHEST) + params["b2"])

    assert output.shape == (B, 1) and probs.shape == (B, NUM_LABELS)
    assert jnp.allclose(probs, probs_ref, atol=1e-5, rtol=1e-5), \
        float(jnp.max(jnp.abs(probs - probs_ref)))
    assert jnp.allclose(output, out_ref, atol=2e-5, rtol=2e-5), \
        float(jnp.max(jnp.abs(output - out_ref)))

    print("KERNEL_OK")
</pallas_src>

<mosaic_0001>
module attributes {stable_mosaic.version = 11 : i64} {
  func.func @_wrapper_fused_kernel(%arg0: i32, %arg1: memref<8x128xf32, #tpu.memory_space<vmem>>, %arg2: memref<128x512xf32, #tpu.memory_space<vmem>>, %arg3: memref<1x512xf32, #tpu.memory_space<vmem>>, %arg4: memref<512x4xf32, #tpu.memory_space<vmem>>, %arg5: memref<1x1xf32, #tpu.memory_space<smem>>, %arg6: memref<8x4xf32, #tpu.memory_space<vmem>>, %arg7: memref<8x128xf32, #tpu.memory_space<vmem>>) attributes {dimension_semantics = [#tpu.dimension_semantics<parallel>], iteration_bounds = array<i64: 2>, scalar_prefetch = 0 : i64, scratch_operands = 0 : i64, tpu.core_type = #tpu.core_type<tc>, window_params = [{transform_indices = @transform_0, window_bounds = array<i64: 8, 128>}, {pipeline_mode = #tpu.pipeline_mode<synchronous>, transform_indices = @transform_1, window_bounds = array<i64: 128, 512>}, {pipeline_mode = #tpu.pipeline_mode<synchronous>, transform_indices = @transform_2, window_bounds = array<i64: 1, 512>}, {pipeline_mode = #tpu.pipeline_mode<synchronous>, transform_indices = @transform_3, window_bounds = array<i64: 512, 4>}, {transform_indices = @transform_4, window_bounds = array<i64: 1, 1>}, {transform_indices = @transform_5, window_bounds = array<i64: 8, 4>}, {transform_indices = @transform_6, window_bounds = array<i64: 8, 128>}]} {
    %c0 = arith.constant 0 : index
    %c0_0 = arith.constant 0 : index
    %0 = vector.load %arg1[%c0, %c0_0] : memref<8x128xf32, #tpu.memory_space<vmem>>, vector<8x128xf32>
    %1 = tpu.iota {dimensions = array<i32: 1>} : vector<8x128xi32>
    %cst = arith.constant 0.000000e+00 : f32
    %2 = vector.broadcast %cst : f32 to vector<8x128xf32>
    %c0_i32 = arith.constant 0 : i32
    %3 = vector.broadcast %c0_i32 : i32 to vector<8x128xi32>
    %4 = arith.cmpi sge, %1, %3 : vector<8x128xi32>
    %c32_i32 = arith.constant 32 : i32
    %5 = vector.broadcast %c32_i32 : i32 to vector<8x128xi32>
    %6 = arith.cmpi slt, %1, %5 : vector<8x128xi32>
    %7 = arith.andi %4, %6 : vector<8x128xi1>
    %cst_1 = arith.constant -1.000000e+30 : f32
    %8 = vector.broadcast %cst_1 : f32 to vector<8x128xf32>
    %9 = arith.select %7, %0, %8 : vector<8x128xi1>, vector<8x128xf32>
    %cst_2 = arith.constant dense<0xFF800000> : vector<8xf32>
    %10 = vector.multi_reduction <maximumf>, %9, %cst_2 [1] : vector<8x128xf32> to vector<8xf32>
    %11 = vector.shape_cast %10 : vector<8xf32> to vector<8x1xf32>
    %12 = vector.broadcast %11 : vector<8x1xf32> to vector<8x128xf32>
    %13 = arith.subf %9, %12 : vector<8x128xf32>
    %14 = math.exp %13 : vector<8x128xf32>
    %cst_3 = arith.constant dense<0.000000e+00> : vector<8xf32>
    %15 = vector.multi_reduction <add>, %14, %cst_3 [1] : vector<8x128xf32> to vector<8xf32>
    %16 = vector.shape_cast %15 : vector<8xf32> to vector<8x1xf32>
    %17 = tpu.reciprocal %16 : vector<8x1xf32> -> vector<8x1xf32>
    %18 = vector.broadcast %17 : vector<8x1xf32> to vector<8x128xf32>
    %19 = arith.mulf %14, %18 : vector<8x128xf32>
    %20 = arith.addf %2, %19 : vector<8x128xf32>
    %c32_i32_4 = arith.constant 32 : i32
    %21 = vector.broadcast %c32_i32_4 : i32 to vector<8x128xi32>
    %22 = arith.cmpi sge, %1, %21 : vector<8x128xi32>
    %c64_i32 = arith.constant 64 : i32
    %23 = vector.broadcast %c64_i32 : i32 to vector<8x128xi32>
    %24 = arith.cmpi slt, %1, %23 : vector<8x128xi32>
    %25 = arith.andi %22, %24 : vector<8x128xi1>
    %cst_5 = arith.constant -1.000000e+30 : f32
    %26 = vector.broadcast %cst_5 : f32 to vector<8x128xf32>
    %27 = arith.select %25, %0, %26 : vector<8x128xi1>, vector<8x128xf32>
    %cst_6 = arith.constant dense<0xFF800000> : vector<8xf32>
    %28 = vector.multi_reduction <maximumf>, %27, %cst_6 [1] : vector<8x128xf32> to vector<8xf32>
    %29 = vector.shape_cast %28 : vector<8xf32> to vector<8x1xf32>
    %30 = vector.broadcast %29 : vector<8x1xf32> to vector<8x128xf32>
    %31 = arith.subf %27, %30 : vector<8x128xf32>
    %32 = math.exp %31 : vector<8x128xf32>
    %cst_7 = arith.constant dense<0.000000e+00> : vector<8xf32>
    %33 = vector.multi_reduction <add>, %32, %cst_7 [1] : vector<8x128xf32> to vector<8xf32>
    %34 = vector.shape_cast %33 : vector<8xf32> to vector<8x1xf32>
    %35 = tpu.reciprocal %34 : vector<8x1xf32> -> vector<8x1xf32>
    %36 = vector.broadcast %35 : vector<8x1xf32> to vector<8x128xf32>
    %37 = arith.mulf %32, %36 : vector<8x128xf32>
    %38 = arith.addf %20, %37 : vector<8x128xf32>
    %c64_i32_8 = arith.constant 64 : i32
    %39 = vector.broadcast %c64_i32_8 : i32 to vector<8x128xi32>
    %40 = arith.cmpi sge, %1, %39 : vector<8x128xi32>
    %c96_i32 = arith.constant 96 : i32
    %41 = vector.broadcast %c96_i32 : i32 to vector<8x128xi32>
    %42 = arith.cmpi slt, %1, %41 : vector<8x128xi32>
    %43 = arith.andi %40, %42 : vector<8x128xi1>
    %cst_9 = arith.constant -1.000000e+30 : f32
    %44 = vector.broadcast %cst_9 : f32 to vector<8x128xf32>
    %45 = arith.select %43, %0, %44 : vector<8x128xi1>, vector<8x128xf32>
    %cst_10 = arith.constant dense<0xFF800000> : vector<8xf32>
    %46 = vector.multi_reduction <maximumf>, %45, %cst_10 [1] : vector<8x128xf32> to vector<8xf32>
    %47 = vector.shape_cast %46 : vector<8xf32> to vector<8x1xf32>
    %48 = vector.broadcast %47 : vector<8x1xf32> to vector<8x128xf32>
    %49 = arith.subf %45, %48 : vector<8x128xf32>
    %50 = math.exp %49 : vector<8x128xf32>
    %cst_11 = arith.constant dense<0.000000e+00> : vector<8xf32>
    %51 = vector.multi_reduction <add>, %50, %cst_11 [1] : vector<8x128xf32> to vector<8xf32>
    %52 = vector.shape_cast %51 : vector<8xf32> to vector<8x1xf32>
    %53 = tpu.reciprocal %52 : vector<8x1xf32> -> vector<8x1xf32>
    %54 = vector.broadcast %53 : vector<8x1xf32> to vector<8x128xf32>
    %55 = arith.mulf %50, %54 : vector<8x128xf32>
    %56 = arith.addf %38, %55 : vector<8x128xf32>
    %c96_i32_12 = arith.constant 96 : i32
    %57 = vector.broadcast %c96_i32_12 : i32 to vector<8x128xi32>
    %58 = arith.cmpi sge, %1, %57 : vector<8x128xi32>
    %c128_i32 = arith.constant 128 : i32
    %59 = vector.broadcast %c128_i32 : i32 to vector<8x128xi32>
    %60 = arith.cmpi slt, %1, %59 : vector<8x128xi32>
    %61 = arith.andi %58, %60 : vector<8x128xi1>
    %cst_13 = arith.constant -1.000000e+30 : f32
    %62 = vector.broadcast %cst_13 : f32 to vector<8x128xf32>
    %63 = arith.select %61, %0, %62 : vector<8x128xi1>, vector<8x128xf32>
    %cst_14 = arith.constant dense<0xFF800000> : vector<8xf32>
    %64 = vector.multi_reduction <maximumf>, %63, %cst_14 [1] : vector<8x128xf32> to vector<8xf32>
    %65 = vector.shape_cast %64 : vector<8xf32> to vector<8x1xf32>
    %66 = vector.broadcast %65 : vector<8x1xf32> to vector<8x128xf32>
    %67 = arith.subf %63, %66 : vector<8x128xf32>
    %68 = math.exp %67 : vector<8x128xf32>
    %cst_15 = arith.constant dense<0.000000e+00> : vector<8xf32>
    %69 = vector.multi_reduction <add>, %68, %cst_15 [1] : vector<8x128xf32> to vector<8xf32>
    %70 = vector.shape_cast %69 : vector<8xf32> to vector<8x1xf32>
    %71 = tpu.reciprocal %70 : vector<8x1xf32> -> vector<8x1xf32>
    %72 = vector.broadcast %71 : vector<8x1xf32> to vector<8x128xf32>
    %73 = arith.mulf %68, %72 : vector<8x128xf32>
    %74 = arith.addf %56, %73 : vector<8x128xf32>
    %c0_16 = arith.constant 0 : index
    %c0_17 = arith.constant 0 : index
    %75 = vector.load %arg7[%c0_16, %c0_17] : memref<8x128xf32, #tpu.memory_space<vmem>>, vector<8x128xf32>
    tpu.vector_store %arg7[%c0_16, %c0_17], %74 {strides = array<i32>} : memref<8x128xf32, #tpu.memory_space<vmem>>, vector<8x128xf32>,
    %c0_18 = arith.constant 0 : index
    %c0_19 = arith.constant 0 : index
    %76 = vector.load %arg2[%c0_18, %c0_19] : memref<128x512xf32, #tpu.memory_space<vmem>>, vector<128x512xf32>
    %cst_20 = arith.constant dense<0.000000e+00> : vector<8x512xf32>
    %77 = tpu.matmul %74, %76, %cst_20 {dimension_numbers = #tpu.dot_dimension_numbers<[1], [0], [0], [1], [0, 0, 1, 1], [], []>, precision = #tpu.contract_precision<fp32>} : vector<8x128xf32>, vector<128x512xf32>, vector<8x512xf32> -> vector<8x512xf32>
    %c0_21 = arith.constant 0 : index
    %c0_22 = arith.constant 0 : index
    %78 = vector.load %arg3[%c0_21, %c0_22] : memref<1x512xf32, #tpu.memory_space<vmem>>, vector<1x512xf32>
    %79 = vector.broadcast %78 : vector<1x512xf32> to vector<8x512xf32>
    %80 = arith.addf %77, %79 : vector<8x512xf32>
    %cst_23 = arith.constant 0.000000e+00 : f32
    %81 = vector.broadcast %cst_23 : f32 to vector<8x512xf32>
    %82 = arith.maximumf %80, %81 : vector<8x512xf32>
    %c0_24 = arith.constant 0 : index
    %c0_25 = arith.constant 0 : index
    %83 = vector.load %arg4[%c0_24, %c0_25] : memref<512x4xf32, #tpu.memory_space<vmem>>, vector<512x4xf32>
    %cst_26 = arith.constant dense<0.000000e+00> : vector<8x4xf32>
    %84 = tpu.matmul %82, %83, %cst_26 {dimension_numbers = #tpu.dot_dimension_numbers<[1], [0], [0], [1], [0, 0, 1, 1], [], []>, precision = #tpu.contract_precision<fp32>} : vector<8x512xf32>, vector<512x4xf32>, vector<8x4xf32> -> vector<8x4xf32>
    %c0_27 = arith.constant 0 : index
    %c0_28 = arith.constant 0 : index
    %85 = memref.load %arg5[%c0_27, %c0_28] : memref<1x1xf32, #tpu.memory_space<smem>>
    %86 = vector.broadcast %85 : f32 to vector<8x4xf32>
    %87 = arith.addf %84, %86 : vector<8x4xf32>
    %88 = arith.negf %87 : vector<8x4xf32>
    %89 = math.exp %88 : vector<8x4xf32>
    %cst_29 = arith.constant 1.000000e+00 : f32
    %90 = vector.broadcast %cst_29 : f32 to vector<8x4xf32>
    %91 = arith.addf %90, %89 : vector<8x4xf32>
    %92 = arith.divf %90, %91 : vector<8x4xf32>
    %c0_30 = arith.constant 0 : index
    %c0_31 = arith.constant 0 : index
    %93 = vector.load %arg6[%c0_30, %c0_31] : memref<8x4xf32, #tpu.memory_space<vmem>>, vector<8x4xf32>
    tpu.vector_store %arg6[%c0_30, %c0_31], %92 {strides = array<i32>} : memref<8x4xf32, #tpu.memory_space<vmem>>, vector<8x4xf32>,
    return
  }
  func.func @transform_0(%arg0: i32) -> (i32, i32) {
    %c0_i32 = arith.constant 0 : i32
    %c0_i32_0 = arith.constant 0 : i32
    return %arg0, %c0_i32 : i32, i32
  }
  func.func @transform_1(%arg0: i32) -> (i32, i32) {
    %c0_i32 = arith.constant 0 : i32
    %c0_i32_0 = arith.constant 0 : i32
    %c0_i32_1 = arith.constant 0 : i32
    return %c0_i32, %c0_i32_0 : i32, i32
  }
  func.func @transform_2(%arg0: i32) -> (i32, i32) {
    %c0_i32 = arith.constant 0 : i32
    %c0_i32_0 = arith.constant 0 : i32
    %c0_i32_1 = arith.constant 0 : i32
    return %c0_i32, %c0_i32_0 : i32, i32
  }
  func.func @transform_3(%arg0: i32) -> (i32, i32) {
    %c0_i32 = arith.constant 0 : i32
    %c0_i32_0 = arith.constant 0 : i32
    %c0_i32_1 = arith.constant 0 : i32
    return %c0_i32, %c0_i32_0 : i32, i32
  }
  func.func @transform_4(%arg0: i32) -> (i32, i32) {
    %c0_i32 = arith.constant 0 : i32
    %c0_i32_0 = arith.constant 0 : i32
    %c0_i32_1 = arith.constant 0 : i32
    return %c0_i32, %c0_i32_0 : i32, i32
  }
  func.func @transform_5(%arg0: i32) -> (i32, i32) {
    %c0_i32 = arith.constant 0 : i32
    %c0_i32_0 = arith.constant 0 : i32
    return %arg0, %c0_i32 : i32, i32
  }
  func.func @transform_6(%arg0: i32) -> (i32, i32) {
    %c0_i32 = arith.constant 0 : i32
    %c0_i32_0 = arith.constant 0 : i32
    return %arg0, %c0_i32 : i32, i32
  }
}

</mosaic_0001>

<llo_original>
// kernel: tpu_custom_call.1
$region0: #{tpu_custom_call.1}
  #allocation0 [shape = 'u32[]', space=smem, size = 0x4, offset = 0x4, fixed_abs, tag = 'smem constant byte address 0x4 - core index']
  #allocation1 [shape = 'u32[144,128]{1,0:T(1,128)}', space=vmem, size = 0x12000, scoped, tag = 'internal scratch']
  #allocation2 [shape = 'f32[1,1]{1,0:T(1,128)S(6)}', space=smem, size = 0x200, scoped, tag = 'scoped memory for tpu_custom_call.1']
  %s0 = inlined_call_operand.vmem [shape: f32[16,128], index: 0, kind: input, shape index: {}]
  %s1 = inlined_call_operand.vmem [shape: f32[128,512], index: 1, kind: input, shape index: {}]
  %s2 = inlined_call_operand.vmem [shape: f32[1,512], index: 2, kind: input, shape index: {}]
  %s3 = inlined_call_operand.vmem [shape: f32[512,4], index: 3, kind: input, shape index: {}]
  %s4 = inlined_call_operand.<no memory space> [shape: f32[1,1], index: 4, kind: input, shape index: {}]
  %s5 = inlined_call_operand.vmem [shape: f32[16,4], index: 5, kind: output, shape index: {0}]
  %s6 = inlined_call_operand.hbm [shape: f32[16,128], index: 6, kind: output, shape index: {1}]
  %7 = xla_tuple %s5, %s6
  %s8 = sld [smem:[#allocation0]]
  $region61: #{tpu_custom_call.1} parent=0
    _
  %s10 = ssub.s32 1, %s8
  %s11 = scalar_select 0, %s10, %s8
  %12 = sst [smem:[#allocation2]] %s4
  $region1: #{tpu_custom_call.1} parent=0
    #allocation3 [shape = 'u8[8192]{0}', space=vmem, size = 0x2000, scoped, tag = 'output window, operand 1']
    #allocation4 [shape = 's32[2]{0}', space=sflag, size = 0x8, scoped, tag = 'scoped memory for tpu_custom_call.1']
    %13 = vsyncpa [#allocation4], 0
    %s14 = scalar_lea.sflag [#allocation4], 1
    %15 = vsyncpa %s14, 0
    loop: start=0, step=1, limit=4
    $region2: #{tpu_custom_call.1} parent=1 // loop_pre_header
      _
    $region3: #{tpu_custom_call.1} parent=1 // loop_header
      %s17 = sphi 0, %s21
      %p18 = scmp.ge.s32.totalorder %s17, 4
      %s27 = sphi 0, %s29
      %s30 = sphi 0, %s27
      %s31 = sphi 0, %s30
      %s47 = sphi 0, %s31
      %s51 = sphi 0, %s51
      %s53 = sphi 0, %s51
      %s54 = sphi 0, %s53
      %s68 = sphi 0, %s54
      %s72 = sphi 0, %s72
      %s74 = sphi 0, %s72
      %s75 = sphi 0, %s74
      %s89 = sphi 0, %s75
      %s93 = sphi 0, %s93
      %s95 = sphi 0, %s93
      %s96 = sphi 0, %s95
      %s110 = sphi 0, %s96
      %s114 = sphi 0, %s114
      %s116 = sphi 0, %s114
      %s117 = sphi 0, %s116
      %s131 = sphi 0, %s117
      %s137 = sphi 0, %s139
      %s140 = sphi 0, %s137
      %s141 = sphi 0, %s140
      %s157 = sphi 0, %s141
      %s163 = sphi 0, %s165
      %s166 = sphi 0, %s163
      %s167 = sphi 0, %s166
      %s183 = sphi 0, %s167
    $region4: #{tpu_custom_call.1} parent=1 // loop_header_branch
      %20 = sbr.rel (%p18) target = $region8
    $region5: #{tpu_custom_call.1} parent=1 // loop_body
      %s22 = ssub.s32 %s17, 1
      %s23 = ssub.s32 %s17, 2
      %s24 = sadd.s32 %s17, 1
      %s25 = ssub.s32 %s17, %s24
      %p26 = scmp.eq.s32.totalorder %s25, 0
      %s28 = sadd.s32 %s27, 1
      %s29 = scalar_select %p26, %s27, %s28
      %p32 = pneg %p26
      %p33 = scmp.eq.s32.totalorder %s17, 1
      %p34 = por %p32, %p33
      %p35 = scmp.ne.s32.totalorder %s27, %s30
      %p36 = scmp.eq.s32.totalorder %s17, 0
      %p37 = por %p35, %p36
      %p38 = scmp.ne.s32.totalorder %s27, %s30
      %p39 = scmp.eq.s32.totalorder %s22, 1
      %p40 = por %p38, %p39
      %p41 = scmp.ne.s32.totalorder %s30, %s31
      %p42 = scmp.eq.s32.totalorder %s22, 0
      %p43 = por %p41, %p42
      %p44 = scmp.ne.s32.totalorder %s30, %s31
      %p45 = scmp.eq.s32.totalorder %s23, 1
      %p46 = por %p44, %p45
      %p48 = scmp.ne.s32.totalorder %s31, %s47
      %p49 = scmp.eq.s32.totalorder %s23, 0
      %p50 = por %p48, %p49
      %s52 = sadd.s32 %s51, 1
      %p55 = scmp.eq.s32.totalorder %s17, 1
      %p56 = scmp.ne.s32.totalorder %s51, %s53
      %p57 = scmp.eq.s32.totalorder %s17, 0
      %p58 = por %p56, %p57
      %p59 = scmp.ne.s32.totalorder %s51, %s53
      %p60 = scmp.eq.s32.totalorder %s22, 1
      %p61 = por %p59, %p60
      %p62 = scmp.ne.s32.totalorder %s53, %s54
      %p63 = scmp.eq.s32.totalorder %s22, 0
      %p64 = por %p62, %p63
      %p65 = scmp.ne.s32.totalorder %s53, %s54
      %p66 = scmp.eq.s32.totalorder %s23, 1
      %p67 = por %p65, %p66
      %p69 = scmp.ne.s32.totalorder %s54, %s68
      %p70 = scmp.eq.s32.totalorder %s23, 0
      %p71 = por %p69, %p70
      %s73 = sadd.s32 %s72, 1
      %p76 = scmp.eq.s32.totalorder %s17, 1
      %p77 = scmp.ne.s32.totalorder %s72, %s74
      %p78 = scmp.eq.s32.totalorder %s17, 0
      %p79 = por %p77, %p78
      %p80 = scmp.ne.s32.totalorder %s72, %s74
      %p81 = scmp.eq.s32.totalorder %s22, 1
      %p82 = por %p80, %p81
      %p83 = scmp.ne.s32.totalorder %s74, %s75
      %p84 = scmp.eq.s32.totalorder %s22, 0
      %p85 = por %p83, %p84
      %p86 = scmp.ne.s32.totalorder %s74, %s75
      %p87 = scmp.eq.s32.totalorder %s23, 1
      %p88 = por %p86, %p87
      %p90 = scmp.ne.s32.totalorder %s75, %s89
      %p91 = scmp.eq.s32.totalorder %s23, 0
      %p92 = por %p90, %p91
      %s94 = sadd.s32 %s93, 1
      %p97 = scmp.eq.s32.totalorder %s17, 1
      %p98 = scmp.ne.s32.totalorder %s93, %s95
      %p99 = scmp.eq.s32.totalorder %s17, 0
      %p100 = por %p98, %p99
      %p101 = scmp.ne.s32.totalorder %s93, %s95
      %p102 = scmp.eq.s32.totalorder %s22, 1
      %p103 = por %p101, %p102
      %p104 = scmp.ne.s32.totalorder %s95, %s96
      %p105 = scmp.eq.s32.totalorder %s22, 0
      %p106 = por %p104, %p105
      %p107 = scmp.ne.s32.totalorder %s95, %s96
      %p108 = scmp.eq.s32.totalorder %s23, 1
      %p109 = por %p107, %p108
      %p111 = scmp.ne.s32.totalorder %s96, %s110
      %p112 = scmp.eq.s32.totalorder %s23, 0
      %p113 = por %p111, %p112
      %s115 = sadd.s32 %s114, 1
      %p118 = scmp.eq.s32.totalorder %s17, 1
      %p119 = scmp.ne.s32.totalorder %s114, %s116
      %p120 = scmp.eq.s32.totalorder %s17, 0
      %p121 = por %p119, %p120
      %p122 = scmp.ne.s32.totalorder %s114, %s116
      %p123 = scmp.eq.s32.totalorder %s22, 1
      %p124 = por %p122, %p123
      %p125 = scmp.ne.s32.totalorder %s116, %s117
      %p126 = scmp.eq.s32.totalorder %s22, 0
      %p127 = por %p125, %p126
      %p128 = scmp.ne.s32.totalorder %s116, %s117
      %p129 = scmp.eq.s32.totalorder %s23, 1
      %p130 = por %p128, %p129
      %p132 = scmp.ne.s32.totalorder %s117, %s131
      %p133 = scmp.eq.s32.totalorder %s23, 0
      %p134 = por %p132, %p133
      %s135 = ssub.s32 %s17, %s24
      %p136 = scmp.eq.s32.totalorder %s135, 0
      %s138 = sadd.s32 %s137, 1
      %s139 = scalar_select %p136, %s137, %s138
      %p142 = pneg %p136
      %p143 = scmp.eq.s32.totalorder %s17, 1
      %p144 = por %p142, %p143
      %p145 = scmp.ne.s32.totalorder %s137, %s140
      %p146 = scmp.eq.s32.totalorder %s17, 0
      %p147 = por %p145, %p146
      %p148 = scmp.ne.s32.totalorder %s137, %s140
      %p149 = scmp.eq.s32.totalorder %s22, 1
      %p150 = por %p148, %p149
      %p151 = scmp.ne.s32.totalorder %s140, %s141
      %p152 = scmp.eq.s32.totalorder %s22, 0
      %p153 = por %p151, %p152
      %p154 = scmp.ne.s32.totalorder %s140, %s141
      %p155 = scmp.eq.s32.totalorder %s23, 1
      %p156 = por %p154, %p155
      %p158 = scmp.ne.s32.totalorder %s141, %s157
      %p159 = scmp.eq.s32.totalorder %s23, 0
      %p160 = por %p158, %p159
      %s161 = ssub.s32 %s17, %s24
      %p162 = scmp.eq.s32.totalorder %s161, 0
      %s164 = sadd.s32 %s163, 1
      %s165 = scalar_select %p162, %s163, %s164
      %p168 = pneg %p162
      %p169 = scmp.eq.s32.totalorder %s17, 1
      %p170 = por %p168, %p169
      %p171 = scmp.ne.s32.totalorder %s163, %s166
      %p172 = scmp.eq.s32.totalorder %s17, 0
      %p173 = por %p171, %p172
      %p174 = scmp.ne.s32.totalorder %s163, %s166
      %p175 = scmp.eq.s32.totalorder %s22, 1
      %p176 = por %p174, %p175
      %p177 = scmp.ne.s32.totalorder %s166, %s167
      %p178 = scmp.eq.s32.totalorder %s22, 0
      %p179 = por %p177, %p178
      %p180 = scmp.ne.s32.totalorder %s166, %s167
      %p181 = scmp.eq.s32.totalorder %s23, 1
      %p182 = por %p180, %p181
      %p184 = scmp.ne.s32.totalorder %s167, %s183
      %p185 = scmp.eq.s32.totalorder %s23, 0
      %p186 = por %p184, %p185
      %p187 = scmp.le.s32.totalorder 1, %s17
      %p188 = scmp.lt.s32.totalorder %s17, 3
      %p189 = pnand %p187, %p188
      %p190 = pneg %p189
      // Predicated region
      $region9: #{tpu_custom_call.1} parent=5 // pred_check
        _
      $region10: #{tpu_custom_call.1} parent=5 // pred_check_branch
        %192 = sbr.rel (%p189) target = $region12
      $region11: #{tpu_custom_call.1} parent=5 // pred_region
        %s193 = ssub.s32 %s17, 1
        // Predicated region
        $region13: #{tpu_custom_call.1} parent=11 // pred_check
          %p194 = pneg %p64
        $region14: #{tpu_custom_call.1} parent=11 // pred_check_branch
          %196 = sbr.rel (%p194) target = $region16
        $region15: #{tpu_custom_call.1} parent=11 // pred_region
          _
        $region16: #{tpu_custom_call.1} parent=11 // pred_fallthru
          _
        // Predicated region
        $region17: #{tpu_custom_call.1} parent=11 // pred_check
          %p197 = pneg %p85
        $region18: #{tpu_custom_call.1} parent=11 // pred_check_branch
          %199 = sbr.rel (%p197) target = $region20
        $region19: #{tpu_custom_call.1} parent=11 // pred_region
          _
        $region20: #{tpu_custom_call.1} parent=11 // pred_fallthru
          _
        // Predicated region
        $region21: #{tpu_custom_call.1} parent=11 // pred_check
          %p200 = pneg %p106
        $region22: #{tpu_custom_call.1} parent=11 // pred_check_branch
          %202 = sbr.rel (%p200) target = $region24
        $region23: #{tpu_custom_call.1} parent=11 // pred_region
          _
        $region24: #{tpu_custom_call.1} parent=11 // pred_fallthru
          _
        // Predicated region
        $region25: #{tpu_custom_call.1} parent=11 // pred_check
          %p203 = pneg %p127
        $region26: #{tpu_custom_call.1} parent=11 // pred_check_branch
          %205 = sbr.rel (%p203) target = $region28
        $region27: #{tpu_custom_call.1} parent=11 // pred_region
          _
        $region28: #{tpu_custom_call.1} parent=11 // pred_fallthru
          _
      $region12: #{tpu_custom_call.1} parent=5 // pred_fallthru
        _
      %p206 = scmp.lt.s32.totalorder %s17, 2
      // Predicated region
      $region29: #{tpu_custom_call.1} parent=5 // pred_check
        %p207 = pneg %p206
      $region30: #{tpu_custom_call.1} parent=5 // pred_check_branch
        %209 = sbr.rel (%p207) target = $region32
      $region31: #{tpu_custom_call.1} parent=5 // pred_region
        // Predicated region
        $region33: #{tpu_custom_call.1} parent=31 // pred_check
          %p210 = pneg %p37
        $region34: #{tpu_custom_call.1} parent=31 // pred_check_branch
          %212 = sbr.rel (%p210) target = $region36
        $region35: #{tpu_custom_call.1} parent=31 // pred_region
          %p213 = scmp.lt.s32.totalorder %s17, 1
          %s214 = scalar_select %p213, %s17, 1
          %s215 = smul.addr %s214, 8
          %s216 = scalar_lea.vmem %s0, %s215
        $region36: #{tpu_custom_call.1} parent=31 // pred_fallthru
          _
      $region32: #{tpu_custom_call.1} parent=5 // pred_fallthru
        _
      %p217 = scmp.le.s32.totalorder 1, %s17
      %p218 = scmp.lt.s32.totalorder %s17, 3
      %p219 = pnand %p217, %p218
      %p220 = pneg %p219
      // Predicated region
      $region37: #{tpu_custom_call.1} parent=5 // pred_check
        _
      $region38: #{tpu_custom_call.1} parent=5 // pred_check_branch
        %222 = sbr.rel (%p219) target = $region40
      $region39: #{tpu_custom_call.1} parent=5 // pred_region
        %s223 = ssub.s32 %s17, 1
        %p224 = scmp.lt.s32.totalorder %s22, 1
        %s225 = scalar_select %p224, %s22, 1
        %s226 = smul.addr %s225, 8
        %s227 = scalar_lea.vmem %s0, %s226
        %p228 = pneg %p43
        %p229 = pneg %p40
        %p230 = pneg %p64
        %p231 = pneg %p61
        %p232 = pneg %p85
        %p233 = pneg %p82
        %p234 = pneg %p106
        %p235 = pneg %p103
        %p236 = pneg %p127
        %p237 = pneg %p124
        %p238 = pneg %p153
        %p239 = pneg %p150
        %p240 = scmp.lt.s32.totalorder %s22, 1
        %s241 = scalar_select %p240, %s22, 1
        %s242 = smul.addr %s241, 8
        %s243 = scalar_lea.vmem %s5, %s242
        %p244 = pneg %p179
        %p245 = pneg %p176
        %s246 = sand.u32 %s166, 1
        %s247 = scalar_lea.sflag [#allocation4], %s246
        %s248 = sand.u32 %s166, 1
        %s249 = smul.addr %s248, 8
        %s250 = scalar_lea.vmem [#allocation3], %s249
        %p251 = scmp.lt.s32.totalorder %s22, 1
        %s252 = scalar_select %p251, %s22, 1
        %s253 = smul.addr %s252, 8
        %s254 = scalar_lea.vmem %s0, %s253
        %p255 = scmp.lt.s32.totalorder %s22, 1
        %s256 = scalar_select %p255, %s22, 1
        %s257 = smul.addr %s256, 8
        %s258 = scalar_lea.vmem %s5, %s257
        %v259 = vld [vmem:[%s254] sm:$0xff]
        %v260 = vlaneseq
        %v261 = vand.u32 %v260, 127
        %vm262 = vcmp.ge.s32.totalorder %v261, 0
        %vm263 = vcmp.lt.s32.totalorder %v261, 32
        %vm264 = vmand %vm262, %vm263
        %v265 = vsel %vm264, %v259, -1e+30
        %266 = vmax.xlane.f32.xlu0 %v265
        %v267 = vpop.xlane.xlu0 %266
        %v268 = vsub.f32 %v265, %v267
        %v269 = vmul.f32 %v268, 1.442695
        %v270 = vpow.pop %v269
        %271 = vadd.xlane.f32.xlu0 %v270
        %v272 = vpop.xlane.xlu0 %271
        %v273 = vrcp.pop %v272
        %v274 = vmul.f32 %v270, %v273
        %v275 = vadd.f32 %v274, 0.0
        %vm276 = vcmp.ge.s32.totalorder %v261, 32
        %vm277 = vcmp.lt.s32.totalorder %v261, 64
        %vm278 = vmand %vm276, %vm277
        %v279 = vsel %vm278, %v259, -1e+30
        %280 = vmax.xlane.f32.xlu0 %v279
        %v281 = vpop.xlane.xlu0 %280
        %v282 = vsub.f32 %v279, %v281
        %v283 = vmul.f32 %v282, 1.442695
        %v284 = vpow.pop %v283
        %285 = vadd.xlane.f32.xlu0 %v284
        %v286 = vpop.xlane.xlu0 %285
        %v287 = vrcp.pop %v286
        %v288 = vmul.f32 %v284, %v287
        %v289 = vadd.f32 %v275, %v288
        %vm290 = vcmp.ge.s32.totalorder %v261, 64
        %vm291 = vcmp.lt.s32.totalorder %v261, 96
        %vm292 = vmand %vm290, %vm291
        %v293 = vsel %vm292, %v259, -1e+30
        %294 = vmax.xlane.f32.xlu0 %v293
        %v295 = vpop.xlane.xlu0 %294
        %v296 = vsub.f32 %v293, %v295
        %v297 = vmul.f32 %v296, 1.442695
        %v298 = vpow.pop %v297
        %299 = vadd.xlane.f32.xlu0 %v298
        %v300 = vpop.xlane.xlu0 %299
        %v301 = vrcp.pop %v300
        %v302 = vmul.f32 %v298, %v301
        %v303 = vadd.f32 %v289, %v302
        %vm304 = vcmp.ge.s32.totalorder %v261, 96
        %vm305 = vcmp.lt.s32.totalorder %v261, 128
        %vm306 = vmand %vm304, %vm305
        %v307 = vsel %vm306, %v259, -1e+30
        %308 = vmax.xlane.f32.xlu0 %v307
        %v309 = vpop.xlane.xlu0 %308
        %v310 = vsub.f32 %v307, %v309
        %v311 = vmul.f32 %v310, 1.442695
        %v312 = vpow.pop %v311
        %313 = vadd.xlane.f32.xlu0 %v312
        %v314 = vpop.xlane.xlu0 %313
        %v315 = vrcp.pop %v314
        %v316 = vmul.f32 %v312, %v315
        %v317 = vadd.f32 %v303, %v316
        %318 = vst [vmem:[%s250] sm:$0xff] %v317
        %v319 = vld [vmem:[%s1] sm:$0xff]
        %v320 = vld [vmem:[%s1 + $0x8] sm:$0xff]
        %v321 = vld [vmem:[%s1 + $0x10] sm:$0xff]
        %v322 = vld [vmem:[%s1 + $0x18] sm:$0xff]
        %v323 = vld [vmem:[%s1 + $0x20] sm:$0xff]
        %v324 = vld [vmem:[%s1 + $0x28] sm:$0xff]
        %v325 = vld [vmem:[%s1 + $0x30] sm:$0xff]
        %v326 = vld [vmem:[%s1 + $0x38] sm:$0xff]
        %v327 = vld [vmem:[%s1 + $0x40] sm:$0xff]
        %v328 = vld [vmem:[%s1 + $0x48] sm:$0xff]
        %v329 = vld [vmem:[%s1 + $0x50] sm:$0xff]
        %v330 = vld [vmem:[%s1 + $0x58] sm:$0xff]
        %v331 = vld [vmem:[%s1 + $0x60] sm:$0xff]
        %v332 = vld [vmem:[%s1 + $0x68] sm:$0xff]
        %v333 = vld [vmem:[%s1 + $0x70] sm:$0xff]
        %v334 = vld [vmem:[%s1 + $0x78] sm:$0xff]
        %v335 = vld [vmem:[%s1 + $0x80] sm:$0xff]
        %v336 = vld [vmem:[%s1 + $0x88] sm:$0xff]
        %v337 = vld [vmem:[%s1 + $0x90] sm:$0xff]
        %v338 = vld [vmem:[%s1 + $0x98] sm:$0xff]
        %v339 = vld [vmem:[%s1 + $0xa0] sm:$0xff]
        %v340 = vld [vmem:[%s1 + $0xa8] sm:$0xff]
        %v341 = vld [vmem:[%s1 + $0xb0] sm:$0xff]
        %v342 = vld [vmem:[%s1 + $0xb8] sm:$0xff]
        %v343 = vld [vmem:[%s1 + $0xc0] sm:$0xff]
        %v344 = vld [vmem:[%s1 + $0xc8] sm:$0xff]
        %v345 = vld [vmem:[%s1 + $0xd0] sm:$0xff]
        %v346 = vld [vmem:[%s1 + $0xd8] sm:$0xff]
        %v347 = vld [vmem:[%s1 + $0xe0] sm:$0xff]
        %v348 = vld [vmem:[%s1 + $0xe8] sm:$0xff]
        %v349 = vld [vmem:[%s1 + $0xf0] sm:$0xff]
        %v350 = vld [vmem:[%s1 + $0xf8] sm:$0xff]
        %v351 = vld [vmem:[%s1 + $0x100] sm:$0xff]
        %v352 = vld [vmem:[%s1 + $0x108] sm:$0xff]
        %v353 = vld [vmem:[%s1 + $0x110] sm:$0xff]
        %v354 = vld [vmem:[%s1 + $0x118] sm:$0xff]
        %v355 = vld [vmem:[%s1 + $0x120] sm:$0xff]
        %v356 = vld [vmem:[%s1 + $0x128] sm:$0xff]
        %v357 = vld [vmem:[%s1 + $0x130] sm:$0xff]
        %v358 = vld [vmem:[%s1 + $0x138] sm:$0xff]
        %v359 = vld [vmem:[%s1 + $0x140] sm:$0xff]
        %v360 = vld [vmem:[%s1 + $0x148] sm:$0xff]
        %v361 = vld [vmem:[%s1 + $0x150] sm:$0xff]
        %v362 = vld [vmem:[%s1 + $0x158] sm:$0xff]
        %v363 = vld [vmem:[%s1 + $0x160] sm:$0xff]
        %v364 = vld [vmem:[%s1 + $0x168] sm:$0xff]
        %v365 = vld [vmem:[%s1 + $0x170] sm:$0xff]
        %v366 = vld [vmem:[%s1 + $0x178] sm:$0xff]
        %v367 = vld [vmem:[%s1 + $0x180] sm:$0xff]
        %v368 = vld [vmem:[%s1 + $0x188] sm:$0xff]
        %v369 = vld [vmem:[%s1 + $0x190] sm:$0xff]
        %v370 = vld [vmem:[%s1 + $0x198] sm:$0xff]
        %v371 = vld [vmem:[%s1 + $0x1a0] sm:$0xff]
        %v372 = vld [vmem:[%s1 + $0x1a8] sm:$0xff]
        %v373 = vld [vmem:[%s1 + $0x1b0] sm:$0xff]
        %v374 = vld [vmem:[%s1 + $0x1b8] sm:$0xff]
        %v375 = vld [vmem:[%s1 + $0x1c0] sm:$0xff]
        %v376 = vld [vmem:[%s1 + $0x1c8] sm:$0xff]
        %v377 = vld [vmem:[%s1 + $0x1d0] sm:$0xff]
        %v378 = vld [vmem:[%s1 + $0x1d8] sm:$0xff]
        %v379 = vld [vmem:[%s1 + $0x1e0] sm:$0xff]
        %v380 = vld [vmem:[%s1 + $0x1e8] sm:$0xff]
        %v381 = vld [vmem:[%s1 + $0x1f0] sm:$0xff]
        %v382 = vld [vmem:[%s1 + $0x1f8] sm:$0xff]
        %v383 = vld [vmem:[%s2] sm:$0xf]
        %v385 = vlaneseq
        %v386 = vshrl.u32 %v385, 7
        %v387 = vsub.s32 0, %v386
        %v388 = vrot.slane %v383, %v387
        %v389 = vlaneseq
        %v390 = vshrl.u32 %v389, 7
        %v391 = vsub.s32 1, %v390
        %v392 = vrot.slane %v383, %v391
        %v393 = vlaneseq
        %v394 = vshrl.u32 %v393, 7
        %v395 = vsub.s32 2, %v394
        %v396 = vrot.slane %v383, %v395
        %v397 = vlaneseq
        %v398 = vshrl.u32 %v397, 7
        %v399 = vsub.s32 3, %v398
        %v400 = vrot.slane %v383, %v399
        %v405 = vand.u32 %v320, 4294901760
        %406 = vmatprep.subr.mxu0 %v405
        %v407 = vand.u32 %v319, 4294901760
        %408 = vmatpush1.msra.mxu0 %v407
        %v409 = vand.u32 %v324, 4294901760
        %410 = vmatprep.subr.mxu0 %v409
        %v411 = vand.u32 %v323, 4294901760
        %412 = vmatpush1.msra.mxu0 %v411
        %v413 = vand.u32 %v328, 4294901760
        %414 = vmatprep.subr.mxu0 %v413
        %v415 = vand.u32 %v327, 4294901760
        %416 = vmatpush1.msra.mxu0 %v415
        %v417 = vand.u32 %v332, 4294901760
        %418 = vmatprep.subr.mxu0 %v417
        %v419 = vand.u32 %v331, 4294901760
        %420 = vmatpush1.msra.mxu0 %v419
        %v421 = vand.u32 %v336, 4294901760
        %422 = vmatprep.subr.mxu0 %v421
        %v423 = vand.u32 %v335, 4294901760
        %424 = vmatpush1.msra.mxu0 %v423
        %v425 = vand.u32 %v340, 4294901760
        %426 = vmatprep.subr.mxu0 %v425
        %v427 = vand.u32 %v339, 4294901760
        %428 = vmatpush1.msra.mxu0 %v427
        %v429 = vand.u32 %v344, 4294901760
        %430 = vmatprep.subr.mxu0 %v429
        %v431 = vand.u32 %v343, 4294901760
        %432 = vmatpush1.msra.mxu0 %v431
        %v433 = vand.u32 %v348, 4294901760
        %434 = vmatprep.subr.mxu0 %v433
        %v435 = vand.u32 %v347, 4294901760
        %436 = vmatpush1.msra.mxu0 %v435
        %v437 = vand.u32 %v352, 4294901760
        %438 = vmatprep.subr.mxu0 %v437
        %v439 = vand.u32 %v351, 4294901760
        %440 = vmatpush1.msra.mxu0 %v439
        %v441 = vand.u32 %v356, 4294901760
        %442 = vmatprep.subr.mxu0 %v441
        %v443 = vand.u32 %v355, 4294901760
        %444 = vmatpush1.msra.mxu0 %v443
        %v445 = vand.u32 %v360, 4294901760
        %446 = vmatprep.subr.mxu0 %v445
        %v447 = vand.u32 %v359, 4294901760
        %448 = vmatpush1.msra.mxu0 %v447
        %v449 = vand.u32 %v364, 4294901760
        %450 = vmatprep.subr.mxu0 %v449
        %v451 = vand.u32 %v363, 4294901760
        %452 = vmatpush1.msra.mxu0 %v451
        %v453 = vand.u32 %v368, 4294901760
        %454 = vmatprep.subr.mxu0 %v453
        %v455 = vand.u32 %v367, 4294901760
        %456 = vmatpush1.msra.mxu0 %v455
        %v457 = vand.u32 %v372, 4294901760
        %458 = vmatprep.subr.mxu0 %v457
        %v459 = vand.u32 %v371, 4294901760
        %460 = vmatpush1.msra.mxu0 %v459
        %v461 = vand.u32 %v376, 4294901760
        %462 = vmatprep.subr.mxu0 %v461
        %v463 = vand.u32 %v375, 4294901760
        %464 = vmatpush1.msra.mxu0 %v463
        %v465 = vand.u32 %v380, 4294901760
        %466 = vmatprep.subr.mxu0 %v465
        %v467 = vand.u32 %v379, 4294901760
        %468 = vmatpush1.msra.mxu0 %v467
        %469 = vmatprep.subr.mxu0 0.0
        %470 = vmatpush1.msra.mxu0 0.0
        %471 = vmatprep.subr.mxu0 0.0
        %472 = vmatpush1.msra.mxu0 0.0
        %473 = vmatprep.subr.mxu0 0.0
        %474 = vmatpush1.msra.mxu0 0.0
        %475 = vmatprep.subr.mxu0 0.0
        %476 = vmatpush1.msra.mxu0 0.0
        %477 = vmatprep.subr.mxu0 0.0
        %478 = vmatpush1.msra.mxu0 0.0
        %479 = vmatprep.subr.mxu0 0.0
        %480 = vmatpush1.msra.mxu0 0.0
        %481 = vmatprep.subr.mxu0 0.0
        %482 = vmatpush1.msra.mxu0 0.0
        %483 = vmatprep.subr.mxu0 0.0
        %484 = vmatpush1.msra.mxu0 0.0
        %485 = vmatprep.subr.mxu0 0.0
        %486 = vmatpush1.msra.mxu0 0.0
        %487 = vmatprep.subr.mxu0 0.0
        %488 = vmatpush1.msra.mxu0 0.0
        %489 = vmatprep.subr.mxu0 0.0
        %490 = vmatpush1.msra.mxu0 0.0
        %491 = vmatprep.subr.mxu0 0.0
        %492 = vmatpush1.msra.mxu0 0.0
        %493 = vmatprep.subr.mxu0 0.0
        %494 = vmatpush1.msra.mxu0 0.0
        %495 = vmatprep.subr.mxu0 0.0
        %496 = vmatpush1.msra.mxu0 0.0
        %497 = vmatprep.subr.mxu0 0.0
        %498 = vmatpush1.msra.mxu0 0.0
        %499 = vmatprep.subr.mxu0 0.0
        %500 = vmatpush1.msra.mxu0 0.0
        %501 = vmatprep.mubr.f32.mxu0 0.0
        %v502 = vand.u32 %v317, 4294901760
        %v503 = vsub.f32 %v317, %v502
        %v504 = vand.u32 %v503, 4294901760
        %v505 = vsub.f32 %v503, %v504
        %v506 = vand.u32 %v505, 4294901760
        %507 = vmatmul.mubr.f32.gmra.mrb[0].mxu0 %v506
        %v508 = vpop.f32.mrb[0].mxu0
        %v509 = vadd.f32 %v388, %v508
        %v510 = vpop.f32.mrb[0].mxu0
        %v511 = vadd.f32 %v392, %v510
        %512 = vdwg.mxu0
        %v513 = vand.u32 %v320, 4294901760
        %v514 = vsub.f32 %v320, %v513
        %v515 = vand.u32 %v514, 4294901760
        %v516 = vsub.f32 %v514, %v515
        %v517 = vand.u32 %v516, 4294901760
        %518 = vmatprep.subr.mxu0 %v517
        %v519 = vand.u32 %v319, 4294901760
        %v520 = vsub.f32 %v319, %v519
        %v521 = vand.u32 %v520, 4294901760
        %v522 = vsub.f32 %v520, %v521
        %v523 = vand.u32 %v522, 4294901760
        %524 = vmatpush1.msra.mxu0 %v523
        %v525 = vand.u32 %v324, 4294901760
        %v526 = vsub.f32 %v324, %v525
        %v527 = vand.u32 %v526, 4294901760
        %v528 = vsub.f32 %v526, %v527
        %v529 = vand.u32 %v528, 4294901760
        %530 = vmatprep.subr.mxu0 %v529
        %v531 = vand.u32 %v323, 4294901760
        %v532 = vsub.f32 %v323, %v531
        %v533 = vand.u32 %v532, 4294901760
        %v534 = vsub.f32 %v532, %v533
        %v535 = vand.u32 %v534, 4294901760
        %536 = vmatpush1.msra.mxu0 %v535
        %v537 = vand.u32 %v328, 4294901760
        %v538 = vsub.f32 %v328, %v537
        %v539 = vand.u32 %v538, 4294901760
        %v540 = vsub.f32 %v538, %v539
        %v541 = vand.u32 %v540, 4294901760
        %542 = vmatprep.subr.mxu0 %v541
        %v543 = vand.u32 %v327, 4294901760
        %v544 = vsub.f32 %v327, %v543
        %v545 = vand.u32 %v544, 4294901760
        %v546 = vsub.f32 %v544, %v545
        %v547 = vand.u32 %v546, 4294901760
        %548 = vmatpush1.msra.mxu0 %v547
        %v549 = vand.u32 %v332, 4294901760
        %v550 = vsub.f32 %v332, %v549
        %v551 = vand.u32 %v550, 4294901760
        %v552 = vsub.f32 %v550, %v551
        %v553 = vand.u32 %v552, 4294901760
        %554 = vmatprep.subr.mxu0 %v553
        %v555 = vand.u32 %v331, 4294901760
        %v556 = vsub.f32 %v331, %v555
        %v557 = vand.u32 %v556, 4294901760
        %v558 = vsub.f32 %v556, %v557
        %v559 = vand.u32 %v558, 4294901760
        %560 = vmatpush1.msra.mxu0 %v559
        %v561 = vand.u32 %v336, 4294901760
        %v562 = vsub.f32 %v336, %v561
        %v563 = vand.u32 %v562, 4294901760
        %v564 = vsub.f32 %v562, %v563
        %v565 = vand.u32 %v564, 4294901760
        %566 = vmatprep.subr.mxu0 %v565
        %v567 = vand.u32 %v335, 4294901760
        %v568 = vsub.f32 %v335, %v567
        %v569 = vand.u32 %v568, 4294901760
        %v570 = vsub.f32 %v568, %v569
        %v571 = vand.u32 %v570, 4294901760
        %572 = vmatpush1.msra.mxu0 %v571
        %v573 = vand.u32 %v340, 4294901760
        %v574 = vsub.f32 %v340, %v573
        %v575 = vand.u32 %v574, 4294901760
        %v576 = vsub.f32 %v574, %v575
        %v577 = vand.u32 %v576, 4294901760
        %578 = vmatprep.subr.mxu0 %v577
        %v579 = vand.u32 %v339, 4294901760
        %v580 = vsub.f32 %v339, %v579
        %v581 = vand.u32 %v580, 4294901760
        %v582 = vsub.f32 %v580, %v581
        %v583 = vand.u32 %v582, 4294901760
        %584 = vmatpush1.msra.mxu0 %v583
        %v585 = vand.u32 %v344, 4294901760
        %v586 = vsub.f32 %v344, %v585
        %v587 = vand.u32 %v586, 4294901760
        %v588 = vsub.f32 %v586, %v587
        %v589 = vand.u32 %v588, 4294901760
        %590 = vmatprep.subr.mxu0 %v589
        %v591 = vand.u32 %v343, 4294901760
        %v592 = vsub.f32 %v343, %v591
        %v593 = vand.u32 %v592, 4294901760
        %v594 = vsub.f32 %v592, %v593
        %v595 = vand.u32 %v594, 4294901760
        %596 = vmatpush1.msra.mxu0 %v595
        %v597 = vand.u32 %v348, 4294901760
        %v598 = vsub.f32 %v348, %v597
        %v599 = vand.u32 %v598, 4294901760
        %v600 = vsub.f32 %v598, %v599
        %v601 = vand.u32 %v600, 4294901760
        %602 = vmatprep.subr.mxu0 %v601
        %v603 = vand.u32 %v347, 4294901760
        %v604 = vsub.f32 %v347, %v603
        %v605 = vand.u32 %v604, 4294901760
        %v606 = vsub.f32 %v604, %v605
        %v607 = vand.u32 %v606, 4294901760
        %608 = vmatpush1.msra.mxu0 %v607
        %v609 = vand.u32 %v352, 4294901760
        %v610 = vsub.f32 %v352, %v609
        %v611 = vand.u32 %v610, 4294901760
        %v612 = vsub.f32 %v610, %v611
        %v613 = vand.u32 %v612, 4294901760
        %614 = vmatprep.subr.mxu0 %v613
        %v615 = vand.u32 %v351, 4294901760
        %v616 = vsub.f32 %v351, %v615
        %v617 = vand.u32 %v616, 4294901760
        %v618 = vsub.f32 %v616, %v617
        %v619 = vand.u32 %v618, 4294901760
        %620 = vmatpush1.msra.mxu0 %v619
        %v621 = vand.u32 %v356, 4294901760
        %v622 = vsub.f32 %v356, %v621
        %v623 = vand.u32 %v622, 4294901760
        %v624 = vsub.f32 %v622, %v623
        %v625 = vand.u32 %v624, 4294901760
        %626 = vmatprep.subr.mxu0 %v625
        %v627 = vand.u32 %v355, 4294901760
        %v628 = vsub.f32 %v355, %v627
        %v629 = vand.u32 %v628, 4294901760
        %v630 = vsub.f32 %v628, %v629
        %v631 = vand.u32 %v630, 4294901760
        %632 = vmatpush1.msra.mxu0 %v631
        %v633 = vand.u32 %v360, 4294901760
        %v634 = vsub.f32 %v360, %v633
        %v635 = vand.u32 %v634, 4294901760
        %v636 = vsub.f32 %v634, %v635
        %v637 = vand.u32 %v636, 4294901760
        %638 = vmatprep.subr.mxu0 %v637
        %v639 = vand.u32 %v359, 4294901760
        %v640 = vsub.f32 %v359, %v639
        %v641 = vand.u32 %v640, 4294901760
        %v642 = vsub.f32 %v640, %v641
        %v643 = vand.u32 %v642, 4294901760
        %644 = vmatpush1.msra.mxu0 %v643
        %v645 = vand.u32 %v364, 4294901760
        %v646 = vsub.f32 %v364, %v645
        %v647 = vand.u32 %v646, 4294901760
        %v648 = vsub.f32 %v646, %v647
        %v649 = vand.u32 %v648, 4294901760
        %650 = vmatprep.subr.mxu0 %v649
        %v651 = vand.u32 %v363, 4294901760
        %v652 = vsub.f32 %v363, %v651
        %v653 = vand.u32 %v652, 4294901760
        %v654 = vsub.f32 %v652, %v653
        %v655 = vand.u32 %v654, 4294901760
        %656 = vmatpush1.msra.mxu0 %v655
        %v657 = vand.u32 %v368, 4294901760
        %v658 = vsub.f32 %v368, %v657
        %v659 = vand.u32 %v658, 4294901760
        %v660 = vsub.f32 %v658, %v659
        %v661 = vand.u32 %v660, 4294901760
        %662 = vmatprep.subr.mxu0 %v661
        %v663 = vand.u32 %v367, 4294901760
        %v664 = vsub.f32 %v367, %v663
        %v665 = vand.u32 %v664, 4294901760
        %v666 = vsub.f32 %v664, %v665
        %v667 = vand.u32 %v666, 4294901760
        %668 = vmatpush1.msra.mxu0 %v667
        %v669 = vand.u32 %v372, 4294901760
        %v670 = vsub.f32 %v372, %v669
        %v671 = vand.u32 %v670, 4294901760
        %v672 = vsub.f32 %v670, %v671
        %v673 = vand.u32 %v672, 4294901760
        %674 = vmatprep.subr.mxu0 %v673
        %v675 = vand.u32 %v371, 4294901760
        %v676 = vsub.f32 %v371, %v675
        %v677 = vand.u32 %v676, 4294901760
        %v678 = vsub.f32 %v676, %v677
        %v679 = vand.u32 %v678, 4294901760
        %680 = vmatpush1.msra.mxu0 %v679
        %v681 = vand.u32 %v376, 4294901760
        %v682 = vsub.f32 %v376, %v681
        %v683 = vand.u32 %v682, 4294901760
        %v684 = vsub.f32 %v682, %v683
        %v685 = vand.u32 %v684, 4294901760
        %686 = vmatprep.subr.mxu0 %v685
        %v687 = vand.u32 %v375, 4294901760
        %v688 = vsub.f32 %v375, %v687
        %v689 = vand.u32 %v688, 4294901760
        %v690 = vsub.f32 %v688, %v689
        %v691 = vand.u32 %v690, 4294901760
        %692 = vmatpush1.msra.mxu0 %v691
        %v693 = vand.u32 %v380, 4294901760
        %v694 = vsub.f32 %v380, %v693
        %v695 = vand.u32 %v694, 4294901760
        %v696 = vsub.f32 %v694, %v695
        %v697 = vand.u32 %v696, 4294901760
        %698 = vmatprep.subr.mxu0 %v697
        %v699 = vand.u32 %v379, 4294901760
        %v700 = vsub.f32 %v379, %v699
        %v701 = vand.u32 %v700, 4294901760
        %v702 = vsub.f32 %v700, %v701
        %v703 = vand.u32 %v702, 4294901760
        %704 = vmatpush1.msra.mxu0 %v703
        %705 = vmatprep.subr.mxu0 0.0
        %706 = vmatpush1.msra.mxu0 0.0
        %707 = vmatprep.subr.mxu0 0.0
        %708 = vmatpush1.msra.mxu0 0.0
        %709 = vmatprep.subr.mxu0 0.0
        %710 = vmatpush1.msra.mxu0 0.0
        %711 = vmatprep.subr.mxu0 0.0
        %712 = vmatpush1.msra.mxu0 0.0
        %713 = vmatprep.subr.mxu0 0.0
        %714 = vmatpush1.msra.mxu0 0.0
        %715 = vmatprep.subr.mxu0 0.0
        %716 = vmatpush1.msra.mxu0 0.0
        %717 = vmatprep.subr.mxu0 0.0
        %718 = vmatpush1.msra.mxu0 0.0
        %719 = vmatprep.subr.mxu0 0.0
        %720 = vmatpush1.msra.mxu0 0.0
        %721 = vmatprep.subr.mxu0 0.0
        %722 = vmatpush1.msra.mxu0 0.0
        %723 = vmatprep.subr.mxu0 0.0
        %724 = vmatpush1.msra.mxu0 0.0
        %725 = vmatprep.subr.mxu0 0.0
        %726 = vmatpush1.msra.mxu0 0.0
        %727 = vmatprep.subr.mxu0 0.0
        %728 = vmatpush1.msra.mxu0 0.0
        %729 = vmatprep.subr.mxu0 0.0
        %730 = vmatpush1.msra.mxu0 0.0
        %731 = vmatprep.subr.mxu0 0.0
        %732 = vmatpush1.msra.mxu0 0.0
        %733 = vmatprep.subr.mxu0 0.0
        %734 = vmatpush1.msra.mxu0 0.0
        %735 = vmatprep.subr.mxu0 0.0
        %736 = vmatpush1.msra.mxu0 0.0
        %737 = vmatprep.mubr.f32.mxu0 0.0
        %v738 = vand.u32 %v317, 4294901760
        %739 = vmatmul.mubr.f32.gmra.mrb[0].mxu0 %v738
        %v740 = vpop.f32.mrb[0].mxu0
        %v741 = vadd.f32 %v509, %v740
        %v742 = vpop.f32.mrb[0].mxu0
        %v743 = vadd.f32 %v511, %v742
        %744 = vdwg.mxu0
        %v745 = vand.u32 %v320, 4294901760
        %v746 = vsub.f32 %v320, %v745
        %747 = vmatprep.subr.mxu0 %v746
        %v748 = vand.u32 %v319, 4294901760
        %v749 = vsub.f32 %v319, %v748
        %750 = vmatpush1.msra.mxu0 %v749
        %v751 = vand.u32 %v324, 4294901760
        %v752 = vsub.f32 %v324, %v751
        %753 = vmatprep.subr.mxu0 %v752
        %v754 = vand.u32 %v323, 4294901760
        %v755 = vsub.f32 %v323, %v754
        %756 = vmatpush1.msra.mxu0 %v755
        %v757 = vand.u32 %v328, 4294901760
        %v758 = vsub.f32 %v328, %v757
        %759 = vmatprep.subr.mxu0 %v758
        %v760 = vand.u32 %v327, 4294901760
        %v761 = vsub.f32 %v327, %v760
        %762 = vmatpush1.msra.mxu0 %v761
        %v763 = vand.u32 %v332, 4294901760
        %v764 = vsub.f32 %v332, %v763
        %765 = vmatprep.subr.mxu0 %v764
        %v766 = vand.u32 %v331, 4294901760
        %v767 = vsub.f32 %v331, %v766
        %768 = vmatpush1.msra.mxu0 %v767
        %v769 = vand.u32 %v336, 4294901760
        %v770 = vsub.f32 %v336, %v769
        %771 = vmatprep.subr.mxu0 %v770
        %v772 = vand.u32 %v335, 4294901760
        %v773 = vsub.f32 %v335, %v772
        %774 = vmatpush1.msra.mxu0 %v773
        %v775 = vand.u32 %v340, 4294901760
        %v776 = vsub.f32 %v340, %v775
        %777 = vmatprep.subr.mxu0 %v776
        %v778 = vand.u32 %v339, 4294901760
        %v779 = vsub.f32 %v339, %v778
        %780 = vmatpush1.msra.mxu0 %v779
        %v781 = vand.u32 %v344, 4294901760
        %v782 = vsub.f32 %v344, %v781
        %783 = vmatprep.subr.mxu0 %v782
        %v784 = vand.u32 %v343, 4294901760
        %v785 = vsub.f32 %v343, %v784
        %786 = vmatpush1.msra.mxu0 %v785
        %v787 = vand.u32 %v348, 4294901760
        %v788 = vsub.f32 %v348, %v787
        %789 = vmatprep.subr.mxu0 %v788
        %v790 = vand.u32 %v347, 4294901760
        %v791 = vsub.f32 %v347, %v790
        %792 = vmatpush1.msra.mxu0 %v791
        %v793 = vand.u32 %v352, 4294901760
        %v794 = vsub.f32 %v352, %v793
        %795 = vmatprep.subr.mxu0 %v794
        %v796 = vand.u32 %v351, 4294901760
        %v797 = vsub.f32 %v351, %v796
        %798 = vmatpush1.msra.mxu0 %v797
        %v799 = vand.u32 %v356, 4294901760
        %v800 = vsub.f32 %v356, %v799
        %801 = vmatprep.subr.mxu0 %v800
        %v802 = vand.u32 %v355, 4294901760
        %v803 = vsub.f32 %v355, %v802
        %804 = vmatpush1.msra.mxu0 %v803
        %v805 = vand.u32 %v360, 4294901760
        %v806 = vsub.f32 %v360, %v805
        %807 = vmatprep.subr.mxu0 %v806
        %v808 = vand.u32 %v359, 4294901760
        %v809 = vsub.f32 %v359, %v808
        %810 = vmatpush1.msra.mxu0 %v809
        %v811 = vand.u32 %v364, 4294901760
        %v812 = vsub.f32 %v364, %v811
        %813 = vmatprep.subr.mxu0 %v812
        %v814 = vand.u32 %v363, 4294901760
        %v815 = vsub.f32 %v363, %v814
        %816 = vmatpush1.msra.mxu0 %v815
        %v817 = vand.u32 %v368, 4294901760
        %v818 = vsub.f32 %v368, %v817
        %819 = vmatprep.subr.mxu0 %v818
        %v820 = vand.u32 %v367, 4294901760
        %v821 = vsub.f32 %v367, %v820
        %822 = vmatpush1.msra.mxu0 %v821
        %v823 = vand.u32 %v372, 4294901760
        %v824 = vsub.f32 %v372, %v823
        %825 = vmatprep.subr.mxu0 %v824
        %v826 = vand.u32 %v371, 4294901760
        %v827 = vsub.f32 %v371, %v826
        %828 = vmatpush1.msra.mxu0 %v827
        %v829 = vand.u32 %v376, 4294901760
        %v830 = vsub.f32 %v376, %v829
        %831 = vmatprep.subr.mxu0 %v830
        %v832 = vand.u32 %v375, 4294901760
        %v833 = vsub.f32 %v375, %v832
        %834 = vmatpush1.msra.mxu0 %v833
        %v835 = vand.u32 %v380, 4294901760
        %v836 = vsub.f32 %v380, %v835
        %837 = vmatprep.subr.mxu0 %v836
        %v838 = vand.u32 %v379, 4294901760
        %v839 = vsub.f32 %v379, %v838
        %840 = vmatpush1.msra.mxu0 %v839
        %841 = vmatprep.subr.mxu0 0.0
        %842 = vmatpush1.msra.mxu0 0.0
        %843 = vmatprep.subr.mxu0 0.0
        %844 = vmatpush1.msra.mxu0 0.0
        %845 = vmatprep.subr.mxu0 0.0
        %846 = vmatpush1.msra.mxu0 0.0
        %847 = vmatprep.subr.mxu0 0.0
        %848 = vmatpush1.msra.mxu0 0.0
        %849 = vmatprep.subr.mxu0 0.0
        %850 = vmatpush1.msra.mxu0 0.0
        %851 = vmatprep.subr.mxu0 0.0
        %852 = vmatpush1.msra.mxu0 0.0
        %853 = vmatprep.subr.mxu0 0.0
        %854 = vmatpush1.msra.mxu0 0.0
        %855 = vmatprep.subr.mxu0 0.0
        %856 = vmatpush1.msra.mxu0 0.0
        %857 = vmatprep.subr.mxu0 0.0
        %858 = vmatpush1.msra.mxu0 0.0
        %859 = vmatprep.subr.mxu0 0.0
        %860 = vmatpush1.msra.mxu0 0.0
        %861 = vmatprep.subr.mxu0 0.0
        %862 = vmatpush1.msra.mxu0 0.0
        %863 = vmatprep.subr.mxu0 0.0
        %864 = vmatpush1.msra.mxu0 0.0
        %865 = vmatprep.subr.mxu0 0.0
        %866 = vmatpush1.msra.mxu0 0.0
        %867 = vmatprep.subr.mxu0 0.0
        %868 = vmatpush1.msra.mxu0 0.0
        %869 = vmatprep.subr.mxu0 0.0
        %870 = vmatpush1.msra.mxu0 0.0
        %871 = vmatprep.subr.mxu0 0.0
        %872 = vmatpush1.msra.mxu0 0.0
        %873 = vmatprep.mubr.f32.mxu0 0.0
        %v874 = vand.u32 %v317, 4294901760
        %v875 = vsub.f32 %v317, %v874
        %876 = vmatmul.mubr.f32.gmra.mrb[0].mxu0 %v875
        %v877 = vpop.f32.mrb[0].mxu0
        %v878 = vadd.f32 %v741, %v877
        %v879 = vpop.f32.mrb[0].mxu0
        %v880 = vadd.f32 %v743, %v879
        %881 = vdwg.mxu0
        %v882 = vand.u32 %v320, 4294901760
        %883 = vmatprep.subr.mxu0 %v882
        %v884 = vand.u32 %v319, 4294901760
        %885 = vmatpush1.msra.mxu0 %v884
        %v886 = vand.u32 %v324, 4294901760
        %887 = vmatprep.subr.mxu0 %v886
        %v888 = vand.u32 %v323, 4294901760
        %889 = vmatpush1.msra.mxu0 %v888
        %v890 = vand.u32 %v328, 4294901760
        %891 = vmatprep.subr.mxu0 %v890
        %v892 = vand.u32 %v327, 4294901760
        %893 = vmatpush1.msra.mxu0 %v892
        %v894 = vand.u32 %v332, 4294901760
        %895 = vmatprep.subr.mxu0 %v894
        %v896 = vand.u32 %v331, 4294901760
        %897 = vmatpush1.msra.mxu0 %v896
        %v898 = vand.u32 %v336, 4294901760
        %899 = vmatprep.subr.mxu0 %v898
        %v900 = vand.u32 %v335, 4294901760
        %901 = vmatpush1.msra.mxu0 %v900
        %v902 = vand.u32 %v340, 4294901760
        %903 = vmatprep.subr.mxu0 %v902
        %v904 = vand.u32 %v339, 4294901760
        %905 = vmatpush1.msra.mxu0 %v904
        %v906 = vand.u32 %v344, 4294901760
        %907 = vmatprep.subr.mxu0 %v906
        %v908 = vand.u32 %v343, 4294901760
        %909 = vmatpush1.msra.mxu0 %v908
        %v910 = vand.u32 %v348, 4294901760
        %911 = vmatprep.subr.mxu0 %v910
        %v912 = vand.u32 %v347, 4294901760
        %913 = vmatpush1.msra.mxu0 %v912
        %v914 = vand.u32 %v352, 4294901760
        %915 = vmatprep.subr.mxu0 %v914
        %v916 = vand.u32 %v351, 4294901760
        %917 = vmatpush1.msra.mxu0 %v916
        %v918 = vand.u32 %v356, 4294901760
        %919 = vmatprep.subr.mxu0 %v918
        %v920 = vand.u32 %v355, 4294901760
        %921 = vmatpush1.msra.mxu0 %v920
        %v922 = vand.u32 %v360, 4294901760
        %923 = vmatprep.subr.mxu0 %v922
        %v924 = vand.u32 %v359, 4294901760
        %925 = vmatpush1.msra.mxu0 %v924
        %v926 = vand.u32 %v364, 4294901760
        %927 = vmatprep.subr.mxu0 %v926
        %v928 = vand.u32 %v363, 4294901760
        %929 = vmatpush1.msra.mxu0 %v928
        %v930 = vand.u32 %v368, 4294901760
        %931 = vmatprep.subr.mxu0 %v930
        %v932 = vand.u32 %v367, 4294901760
        %933 = vmatpush1.msra.mxu0 %v932
        %v934 = vand.u32 %v372, 4294901760
        %935 = vmatprep.subr.mxu0 %v934
        %v936 = vand.u32 %v371, 4294901760
        %937 = vmatpush1.msra.mxu0 %v936
        %v938 = vand.u32 %v376, 4294901760
        %939 = vmatprep.subr.mxu0 %v938
        %v940 = vand.u32 %v375, 4294901760
        %941 = vmatpush1.msra.mxu0 %v940
        %v942 = vand.u32 %v380, 4294901760
        %943 = vmatprep.subr.mxu0 %v942
        %v944 = vand.u32 %v379, 4294901760
        %945 = vmatpush1.msra.mxu0 %v944
        %946 = vmatprep.subr.mxu0 0.0
        %947 = vmatpush1.msra.mxu0 0.0
        %948 = vmatprep.subr.mxu0 0.0
        %949 = vmatpush1.msra.mxu0 0.0
        %950 = vmatprep.subr.mxu0 0.0
        %951 = vmatpush1.msra.mxu0 0.0
        %952 = vmatprep.subr.mxu0 0.0
        %953 = vmatpush1.msra.mxu0 0.0
        %954 = vmatprep.subr.mxu0 0.0
        %955 = vmatpush1.msra.mxu0 0.0
        %956 = vmatprep.subr.mxu0 0.0
        %957 = vmatpush1.msra.mxu0 0.0
        %958 = vmatprep.subr.mxu0 0.0
        %959 = vmatpush1.msra.mxu0 0.0
        %960 = vmatprep.subr.mxu0 0.0
        %961 = vmatpush1.msra.mxu0 0.0
        %962 = vmatprep.subr.mxu0 0.0
        %963 = vmatpush1.msra.mxu0 0.0
        %964 = vmatprep.subr.mxu0 0.0
        %965 = vmatpush1.msra.mxu0 0.0
        %966 = vmatprep.subr.mxu0 0.0
        %967 = vmatpush1.msra.mxu0 0.0
        %968 = vmatprep.subr.mxu0 0.0
        %969 = vmatpush1.msra.mxu0 0.0
        %970 = vmatprep.subr.mxu0 0.0
        %971 = vmatpush1.msra.mxu0 0.0
        %972 = vmatprep.subr.mxu0 0.0
        %973 = vmatpush1.msra.mxu0 0.0
        %974 = vmatprep.subr.mxu0 0.0
        %975 = vmatpush1.msra.mxu0 0.0
        %976 = vmatprep.subr.mxu0 0.0
        %977 = vmatpush1.msra.mxu0 0.0
        %978 = vmatprep.mubr.f32.mxu0 0.0
        %v979 = vand.u32 %v317, 4294901760
        %v980 = vsub.f32 %v317, %v979
        %v981 = vand.u32 %v980, 4294901760
        %982 = vmatmul.mubr.f32.gmra.mrb[0].mxu0 %v981
        %v983 = vpop.f32.mrb[0].mxu0
        %v984 = vadd.f32 %v878, %v983
        %v985 = vpop.f32.mrb[0].mxu0
        %v986 = vadd.f32 %v880, %v985
        %987 = vdwg.mxu0
        %v988 = vand.u32 %v320, 4294901760
        %v989 = vsub.f32 %v320, %v988
        %v990 = vand.u32 %v989, 4294901760
        %991 = vmatprep.subr.mxu0 %v990
        %v992 = vand.u32 %v319, 4294901760
        %v993 = vsub.f32 %v319, %v992
        %v994 = vand.u32 %v993, 4294901760
        %995 = vmatpush1.msra.mxu0 %v994
        %v996 = vand.u32 %v324, 4294901760
        %v997 = vsub.f32 %v324, %v996
        %v998 = vand.u32 %v997, 4294901760
        %999 = vmatprep.subr.mxu0 %v998
        %v1000 = vand.u32 %v323, 4294901760
        %v1001 = vsub.f32 %v323, %v1000
        %v1002 = vand.u32 %v1001, 4294901760
        %1003 = vmatpush1.msra.mxu0 %v1002
        %v1004 = vand.u32 %v328, 4294901760
        %v1005 = vsub.f32 %v328, %v1004
        %v1006 = vand.u32 %v1005, 4294901760
        %1007 = vmatprep.subr.mxu0 %v1006
        %v1008 = vand.u32 %v327, 4294901760
        %v1009 = vsub.f32 %v327, %v1008
        %v1010 = vand.u32 %v1009, 4294901760
        %1011 = vmatpush1.msra.mxu0 %v1010
        %v1012 = vand.u32 %v332, 4294901760
        %v1013 = vsub.f32 %v332, %v1012
        %v1014 = vand.u32 %v1013, 4294901760
        %1015 = vmatprep.subr.mxu0 %v1014
        %v1016 = vand.u32 %v331, 4294901760
        %v1017 = vsub.f32 %v331, %v1016
        %v1018 = vand.u32 %v1017, 4294901760
        %1019 = vmatpush1.msra.mxu0 %v1018
        %v1020 = vand.u32 %v336, 4294901760
        %v1021 = vsub.f32 %v336, %v1020
        %v1022 = vand.u32 %v1021, 4294901760
        %1023 = vmatprep.subr.mxu0 %v1022
        %v1024 = vand.u32 %v335, 4294901760
        %v1025 = vsub.f32 %v335, %v1024
        %v1026 = vand.u32 %v1025, 4294901760
        %1027 = vmatpush1.msra.mxu0 %v1026
        %v1028 = vand.u32 %v340, 4294901760
        %v1029 = vsub.f32 %v340, %v1028
        %v1030 = vand.u32 %v1029, 4294901760
        %1031 = vmatprep.subr.mxu0 %v1030
        %v1032 = vand.u32 %v339, 4294901760
        %v1033 = vsub.f32 %v339, %v1032
        %v1034 = vand.u32 %v1033, 4294901760
        %1035 = vmatpush1.msra.mxu0 %v1034
        %v1036 = vand.u32 %v344, 4294901760
        %v1037 = vsub.f32 %v344, %v1036
        %v1038 = vand.u32 %v1037, 4294901760
        %1039 = vmatprep.subr.mxu0 %v1038
        %v1040 = vand.u32 %v343, 4294901760
        %v1041 = vsub.f32 %v343, %v1040
        %v1042 = vand.u32 %v1041, 4294901760
        %1043 = vmatpush1.msra.mxu0 %v1042
        %v1044 = vand.u32 %v348, 4294901760
        %v1045 = vsub.f32 %v348, %v1044
        %v1046 = vand.u32 %v1045, 4294901760
        %1047 = vmatprep.subr.mxu0 %v1046
        %v1048 = vand.u32 %v347, 4294901760
        %v1049 = vsub.f32 %v347, %v1048
        %v1050 = vand.u32 %v1049, 4294901760
        %1051 = vmatpush1.msra.mxu0 %v1050
        %v1052 = vand.u32 %v352, 4294901760
        %v1053 = vsub.f32 %v352, %v1052
        %v1054 = vand.u32 %v1053, 4294901760
        %1055 = vmatprep.subr.mxu0 %v1054
        %v1056 = vand.u32 %v351, 4294901760
        %v1057 = vsub.f32 %v351, %v1056
        %v1058 = vand.u32 %v1057, 4294901760
        %1059 = vmatpush1.msra.mxu0 %v1058
        %v1060 = vand.u32 %v356, 4294901760
        %v1061 = vsub.f32 %v356, %v1060
        %v1062 = vand.u32 %v1061, 4294901760
        %1063 = vmatprep.subr.mxu0 %v1062
        %v1064 = vand.u32 %v355, 4294901760
        %v1065 = vsub.f32 %v355, %v1064
        %v1066 = vand.u32 %v1065, 4294901760
        %1067 = vmatpush1.msra.mxu0 %v1066
        %v1068 = vand.u32 %v360, 4294901760
        %v1069 = vsub.f32 %v360, %v1068
        %v1070 = vand.u32 %v1069, 4294901760
        %1071 = vmatprep.subr.mxu0 %v1070
        %v1072 = vand.u32 %v359, 4294901760
        %v1073 = vsub.f32 %v359, %v1072
        %v1074 = vand.u32 %v1073, 4294901760
        %1075 = vmatpush1.msra.mxu0 %v1074
        %v1076 = vand.u32 %v364, 4294901760
        %v1077 = vsub.f32 %v364, %v1076
        %v1078 = vand.u32 %v1077, 4294901760
        %1079 = vmatprep.subr.mxu0 %v1078
        %v1080 = vand.u32 %v363, 4294901760
        %v1081 = vsub.f32 %v363, %v1080
        %v1082 = vand.u32 %v1081, 4294901760
        %1083 = vmatpush1.msra.mxu0 %v1082
        %v1084 = vand.u32 %v368, 4294901760
        %v1085 = vsub.f32 %v368, %v1084
        %v1086 = vand.u32 %v1085, 4294901760
        %1087 = vmatprep.subr.mxu0 %v1086
        %v1088 = vand.u32 %v367, 4294901760
        %v1089 = vsub.f32 %v367, %v1088
        %v1090 = vand.u32 %v1089, 4294901760
        %1091 = vmatpush1.msra.mxu0 %v1090
        %v1092 = vand.u32 %v372, 4294901760
        %v1093 = vsub.f32 %v372, %v1092
        %v1094 = vand.u32 %v1093, 4294901760
        %1095 = vmatprep.subr.mxu0 %v1094
        %v1096 = vand.u32 %v371, 4294901760
        %v1097 = vsub.f32 %v371, %v1096
        %v1098 = vand.u32 %v1097, 4294901760
        %1099 = vmatpush1.msra.mxu0 %v1098
        %v1100 = vand.u32 %v376, 4294901760
        %v1101 = vsub.f32 %v376, %v1100
        %v1102 = vand.u32 %v1101, 4294901760
        %1103 = vmatprep.subr.mxu0 %v1102
        %v1104 = vand.u32 %v375, 4294901760
        %v1105 = vsub.f32 %v375, %v1104
        %v1106 = vand.u32 %v1105, 4294901760
        %1107 = vmatpush1.msra.mxu0 %v1106
        %v1108 = vand.u32 %v380, 4294901760
        %v1109 = vsub.f32 %v380, %v1108
        %v1110 = vand.u32 %v1109, 4294901760
        %1111 = vmatprep.subr.mxu0 %v1110
        %v1112 = vand.u32 %v379, 4294901760
        %v1113 = vsub.f32 %v379, %v1112
        %v1114 = vand.u32 %v1113, 4294901760
        %1115 = vmatpush1.msra.mxu0 %v1114
        %1116 = vmatprep.subr.mxu0 0.0
        %1117 = vmatpush1.msra.mxu0 0.0
        %1118 = vmatprep.subr.mxu0 0.0
        %1119 = vmatpush1.msra.mxu0 0.0
        %1120 = vmatprep.subr.mxu0 0.0
        %1121 = vmatpush1.msra.mxu0 0.0
        %1122 = vmatprep.subr.mxu0 0.0
        %1123 = vmatpush1.msra.mxu0 0.0
        %1124 = vmatprep.subr.mxu0 0.0
        %1125 = vmatpush1.msra.mxu0 0.0
        %1126 = vmatprep.subr.mxu0 0.0
        %1127 = vmatpush1.msra.mxu0 0.0
        %1128 = vmatprep.subr.mxu0 0.0
        %1129 = vmatpush1.msra.mxu0 0.0
        %1130 = vmatprep.subr.mxu0 0.0
        %1131 = vmatpush1.msra.mxu0 0.0
        %1132 = vmatprep.subr.mxu0 0.0
        %1133 = vmatpush1.msra.mxu0 0.0
        %1134 = vmatprep.subr.mxu0 0.0
        %1135 = vmatpush1.msra.mxu0 0.0
        %1136 = vmatprep.subr.mxu0 0.0
        %1137 = vmatpush1.msra.mxu0 0.0
        %1138 = vmatprep.subr.mxu0 0.0
        %1139 = vmatpush1.msra.mxu0 0.0
        %1140 = vmatprep.subr.mxu0 0.0
        %1141 = vmatpush1.msra.mxu0 0.0
        %1142 = vmatprep.subr.mxu0 0.0
        %1143 = vmatpush1.msra.mxu0 0.0
        %1144 = vmatprep.subr.mxu0 0.0
        %1145 = vmatpush1.msra.mxu0 0.0
        %1146 = vmatprep.subr.mxu0 0.0
        %1147 = vmatpush1.msra.mxu0 0.0
        %1148 = vmatprep.mubr.f32.mxu0 0.0
        %v1149 = vand.u32 %v317, 4294901760
        %1150 = vmatmul.mubr.f32.gmra.mrb[0].mxu0 %v1149
        %v1151 = vpop.f32.mrb[0].mxu0
        %v1152 = vadd.f32 %v984, %v1151
        %v1153 = vpop.f32.mrb[0].mxu0
        %v1154 = vadd.f32 %v986, %v1153
        %1155 = vdwg.mxu0
        %v1156 = vand.u32 %v320, 4294901760
        %1157 = vmatprep.subr.mxu0 %v1156
        %v1158 = vand.u32 %v319, 4294901760
        %1159 = vmatpush1.msra.mxu0 %v1158
        %v1160 = vand.u32 %v324, 4294901760
        %1161 = vmatprep.subr.mxu0 %v1160
        %v1162 = vand.u32 %v323, 4294901760
        %1163 = vmatpush1.msra.mxu0 %v1162
        %v1164 = vand.u32 %v328, 4294901760
        %1165 = vmatprep.subr.mxu0 %v1164
        %v1166 = vand.u32 %v327, 4294901760
        %1167 = vmatpush1.msra.mxu0 %v1166
        %v1168 = vand.u32 %v332, 4294901760
        %1169 = vmatprep.subr.mxu0 %v1168
        %v1170 = vand.u32 %v331, 4294901760
        %1171 = vmatpush1.msra.mxu0 %v1170
        %v1172 = vand.u32 %v336, 4294901760
        %1173 = vmatprep.subr.mxu0 %v1172
        %v1174 = vand.u32 %v335, 4294901760
        %1175 = vmatpush1.msra.mxu0 %v1174
        %v1176 = vand.u32 %v340, 4294901760
        %1177 = vmatprep.subr.mxu0 %v1176
        %v1178 = vand.u32 %v339, 4294901760
        %1179 = vmatpush1.msra.mxu0 %v1178
        %v1180 = vand.u32 %v344, 4294901760
        %1181 = vmatprep.subr.mxu0 %v1180
        %v1182 = vand.u32 %v343, 4294901760
        %1183 = vmatpush1.msra.mxu0 %v1182
        %v1184 = vand.u32 %v348, 4294901760
        %1185 = vmatprep.subr.mxu0 %v1184
        %v1186 = vand.u32 %v347, 4294901760
        %1187 = vmatpush1.msra.mxu0 %v1186
        %v1188 = vand.u32 %v352, 4294901760
        %1189 = vmatprep.subr.mxu0 %v1188
        %v1190 = vand.u32 %v351, 4294901760
        %1191 = vmatpush1.msra.mxu0 %v1190
        %v1192 = vand.u32 %v356, 4294901760
        %1193 = vmatprep.subr.mxu0 %v1192
        %v1194 = vand.u32 %v355, 4294901760
        %1195 = vmatpush1.msra.mxu0 %v1194
        %v1196 = vand.u32 %v360, 4294901760
        %1197 = vmatprep.subr.mxu0 %v1196
        %v1198 = vand.u32 %v359, 4294901760
        %1199 = vmatpush1.msra.mxu0 %v1198
        %v1200 = vand.u32 %v364, 4294901760
        %1201 = vmatprep.subr.mxu0 %v1200
        %v1202 = vand.u32 %v363, 4294901760
        %1203 = vmatpush1.msra.mxu0 %v1202
        %v1204 = vand.u32 %v368, 4294901760
        %1205 = vmatprep.subr.mxu0 %v1204
        %v1206 = vand.u32 %v367, 4294901760
        %1207 = vmatpush1.msra.mxu0 %v1206
        %v1208 = vand.u32 %v372, 4294901760
        %1209 = vmatprep.subr.mxu0 %v1208
        %v1210 = vand.u32 %v371, 4294901760
        %1211 = vmatpush1.msra.mxu0 %v1210
        %v1212 = vand.u32 %v376, 4294901760
        %1213 = vmatprep.subr.mxu0 %v1212
        %v1214 = vand.u32 %v375, 4294901760
        %1215 = vmatpush1.msra.mxu0 %v1214
        %v1216 = vand.u32 %v380, 4294901760
        %1217 = vmatprep.subr.mxu0 %v1216
        %v1218 = vand.u32 %v379, 4294901760
        %1219 = vmatpush1.msra.mxu0 %v1218
        %1220 = vmatprep.subr.mxu0 0.0
        %1221 = vmatpush1.msra.mxu0 0.0
        %1222 = vmatprep.subr.mxu0 0.0
        %1223 = vmatpush1.msra.mxu0 0.0
        %1224 = vmatprep.subr.mxu0 0.0
        %1225 = vmatpush1.msra.mxu0 0.0
        %1226 = vmatprep.subr.mxu0 0.0
        %1227 = vmatpush1.msra.mxu0 0.0
        %1228 = vmatprep.subr.mxu0 0.0
        %1229 = vmatpush1.msra.mxu0 0.0
        %1230 = vmatprep.subr.mxu0 0.0
        %1231 = vmatpush1.msra.mxu0 0.0
        %1232 = vmatprep.subr.mxu0 0.0
        %1233 = vmatpush1.msra.mxu0 0.0
        %1234 = vmatprep.subr.mxu0 0.0
        %1235 = vmatpush1.msra.mxu0 0.0
        %1236 = vmatprep.subr.mxu0 0.0
        %1237 = vmatpush1.msra.mxu0 0.0
        %1238 = vmatprep.subr.mxu0 0.0
        %1239 = vmatpush1.msra.mxu0 0.0
        %1240 = vmatprep.subr.mxu0 0.0
        %1241 = vmatpush1.msra.mxu0 0.0
        %1242 = vmatprep.subr.mxu0 0.0
        %1243 = vmatpush1.msra.mxu0 0.0
        %1244 = vmatprep.subr.mxu0 0.0
        %1245 = vmatpush1.msra.mxu0 0.0
        %1246 = vmatprep.subr.mxu0 0.0
        %1247 = vmatpush1.msra.mxu0 0.0
        %1248 = vmatprep.subr.mxu0 0.0
        %1249 = vmatpush1.msra.mxu0 0.0
        %1250 = vmatprep.subr.mxu0 0.0
        %1251 = vmatpush1.msra.mxu0 0.0
        %1252 = vmatprep.mubr.f32.mxu0 0.0
        %v1253 = vand.u32 %v317, 4294901760
        %1254 = vmatmul.mubr.f32.gmra.mrb[0].mxu0 %v1253
        %v1255 = vpop.f32.mrb[0].mxu0
        %v1256 = vadd.f32 %v1152, %v1255
        %v1257 = vpop.f32.mrb[0].mxu0
        %v1258 = vadd.f32 %v1154, %v1257
        %1259 = vdwg.mxu0
        %v1260 = vand.u32 %v322, 4294901760
        %1261 = vmatprep.subr.mxu0 %v1260
        %v1262 = vand.u32 %v321, 4294901760
        %1263 = vmatpush1.msra.mxu0 %v1262
        %v1264 = vand.u32 %v326, 4294901760
        %1265 = vmatprep.subr.mxu0 %v1264
        %v1266 = vand.u32 %v325, 4294901760
        %1267 = vmatpush1.msra.mxu0 %v1266
        %v1268 = vand.u32 %v330, 4294901760
        %1269 = vmatprep.subr.mxu0 %v1268
        %v1270 = vand.u32 %v329, 4294901760
        %1271 = vmatpush1.msra.mxu0 %v1270
        %v1272 = vand.u32 %v334, 4294901760
        %1273 = vmatprep.subr.mxu0 %v1272
        %v1274 = vand.u32 %v333, 4294901760
        %1275 = vmatpush1.msra.mxu0 %v1274
        %v1276 = vand.u32 %v338, 4294901760
        %1277 = vmatprep.subr.mxu0 %v1276
        %v1278 = vand.u32 %v337, 4294901760
        %1279 = vmatpush1.msra.mxu0 %v1278
        %v1280 = vand.u32 %v342, 4294901760
        %1281 = vmatprep.subr.mxu0 %v1280
        %v1282 = vand.u32 %v341, 4294901760
        %1283 = vmatpush1.msra.mxu0 %v1282
        %v1284 = vand.u32 %v346, 4294901760
        %1285 = vmatprep.subr.mxu0 %v1284
        %v1286 = vand.u32 %v345, 4294901760
        %1287 = vmatpush1.msra.mxu0 %v1286
        %v1288 = vand.u32 %v350, 4294901760
        %1289 = vmatprep.subr.mxu0 %v1288
        %v1290 = vand.u32 %v349, 4294901760
        %1291 = vmatpush1.msra.mxu0 %v1290
        %v1292 = vand.u32 %v354, 4294901760
        %1293 = vmatprep.subr.mxu0 %v1292
        %v1294 = vand.u32 %v353, 4294901760
        %1295 = vmatpush1.msra.mxu0 %v1294
        %v1296 = vand.u32 %v358, 4294901760
        %1297 = vmatprep.subr.mxu0 %v1296
        %v1298 = vand.u32 %v357, 4294901760
        %1299 = vmatpush1.msra.mxu0 %v1298
        %v1300 = vand.u32 %v362, 4294901760
        %1301 = vmatprep.subr.mxu0 %v1300
        %v1302 = vand.u32 %v361, 4294901760
        %1303 = vmatpush1.msra.mxu0 %v1302
        %v1304 = vand.u32 %v366, 4294901760
        %1305 = vmatprep.subr.mxu0 %v1304
        %v1306 = vand.u32 %v365, 4294901760
        %1307 = vmatpush1.msra.mxu0 %v1306
        %v1308 = vand.u32 %v370, 4294901760
        %1309 = vmatprep.subr.mxu0 %v1308
        %v1310 = vand.u32 %v369, 4294901760
        %1311 = vmatpush1.msra.mxu0 %v1310
        %v1312 = vand.u32 %v374, 4294901760
        %1313 = vmatprep.subr.mxu0 %v1312
        %v1314 = vand.u32 %v373, 4294901760
        %1315 = vmatpush1.msra.mxu0 %v1314
        %v1316 = vand.u32 %v378, 4294901760
        %1317 = vmatprep.subr.mxu0 %v1316
        %v1318 = vand.u32 %v377, 4294901760
        %1319 = vmatpush1.msra.mxu0 %v1318
        %v1320 = vand.u32 %v382, 4294901760
        %1321 = vmatprep.subr.mxu0 %v1320
        %v1322 = vand.u32 %v381, 4294901760
        %1323 = vmatpush1.msra.mxu0 %v1322
        %1324 = vmatprep.subr.mxu0 0.0
        %1325 = vmatpush1.msra.mxu0 0.0
        %1326 = vmatprep.subr.mxu0 0.0
        %1327 = vmatpush1.msra.mxu0 0.0
        %1328 = vmatprep.subr.mxu0 0.0
        %1329 = vmatpush1.msra.mxu0 0.0
        %1330 = vmatprep.subr.mxu0 0.0
        %1331 = vmatpush1.msra.mxu0 0.0
        %1332 = vmatprep.subr.mxu0 0.0
        %1333 = vmatpush1.msra.mxu0 0.0
        %1334 = vmatprep.subr.mxu0 0.0
        %1335 = vmatpush1.msra.mxu0 0.0
        %1336 = vmatprep.subr.mxu0 0.0
        %1337 = vmatpush1.msra.mxu0 0.0
        %1338 = vmatprep.subr.mxu0 0.0
        %1339 = vmatpush1.msra.mxu0 0.0
        %1340 = vmatprep.subr.mxu0 0.0
        %1341 = vmatpush1.msra.mxu0 0.0
        %1342 = vmatprep.subr.mxu0 0.0
        %1343 = vmatpush1.msra.mxu0 0.0
        %1344 = vmatprep.subr.mxu0 0.0
        %1345 = vmatpush1.msra.mxu0 0.0
        %1346 = vmatprep.subr.mxu0 0.0
        %1347 = vmatpush1.msra.mxu0 0.0
        %1348 = vmatprep.subr.mxu0 0.0
        %1349 = vmatpush1.msra.mxu0 0.0
        %1350 = vmatprep.subr.mxu0 0.0
        %1351 = vmatpush1.msra.mxu0 0.0
        %1352 = vmatprep.subr.mxu0 0.0
        %1353 = vmatpush1.msra.mxu0 0.0
        %1354 = vmatprep.subr.mxu0 0.0
        %1355 = vmatpush1.msra.mxu0 0.0
        %1356 = vmatprep.mubr.f32.mxu0 0.0
        %v1357 = vand.u32 %v317, 4294901760
        %v1358 = vsub.f32 %v317, %v1357
        %v1359 = vand.u32 %v1358, 4294901760
        %v1360 = vsub.f32 %v1358, %v1359
        %v1361 = vand.u32 %v1360, 4294901760
        %1362 = vmatmul.mubr.f32.gmra.mrb[0].mxu0 %v1361
        %v1363 = vpop.f32.mrb[0].mxu0
        %v1364 = vadd.f32 %v396, %v1363
        %v1365 = vpop.f32.mrb[0].mxu0
        %v1366 = vadd.f32 %v400, %v1365
        %1367 = vdwg.mxu0
        %v1368 = vand.u32 %v322, 4294901760
        %v1369 = vsub.f32 %v322, %v1368
        %v1370 = vand.u32 %v1369, 4294901760
        %v1371 = vsub.f32 %v1369, %v1370
        %v1372 = vand.u32 %v1371, 4294901760
        %1373 = vmatprep.subr.mxu0 %v1372
        %v1374 = vand.u32 %v321, 4294901760
        %v1375 = vsub.f32 %v321, %v1374
        %v1376 = vand.u32 %v1375, 4294901760
        %v1377 = vsub.f32 %v1375, %v1376
        %v1378 = vand.u32 %v1377, 4294901760
        %1379 = vmatpush1.msra.mxu0 %v1378
        %v1380 = vand.u32 %v326, 4294901760
        %v1381 = vsub.f32 %v326, %v1380
        %v1382 = vand.u32 %v1381, 4294901760
        %v1383 = vsub.f32 %v1381, %v1382
        %v1384 = vand.u32 %v1383, 4294901760
        %1385 = vmatprep.subr.mxu0 %v1384
        %v1386 = vand.u32 %v325, 4294901760
        %v1387 = vsub.f32 %v325, %v1386
        %v1388 = vand.u32 %v1387, 4294901760
        %v1389 = vsub.f32 %v1387, %v1388
        %v1390 = vand.u32 %v1389, 4294901760
        %1391 = vmatpush1.msra.mxu0 %v1390
        %v1392 = vand.u32 %v330, 4294901760
        %v1393 = vsub.f32 %v330, %v1392
        %v1394 = vand.u32 %v1393, 4294901760
        %v1395 = vsub.f32 %v1393, %v1394
        %v1396 = vand.u32 %v1395, 4294901760
        %1397 = vmatprep.subr.mxu0 %v1396
        %v1398 = vand.u32 %v329, 4294901760
        %v1399 = vsub.f32 %v329, %v1398
        %v1400 = vand.u32 %v1399, 4294901760
        %v1401 = vsub.f32 %v1399, %v1400
        %v1402 = vand.u32 %v1401, 4294901760
        %1403 = vmatpush1.msra.mxu0 %v1402
        %v1404 = vand.u32 %v334, 4294901760
        %v1405 = vsub.f32 %v334, %v1404
        %v1406 = vand.u32 %v1405, 4294901760
        %v1407 = vsub.f32 %v1405, %v1406
        %v1408 = vand.u32 %v1407, 4294901760
        %1409 = vmatprep.subr.mxu0 %v1408
        %v1410 = vand.u32 %v333, 4294901760
        %v1411 = vsub.f32 %v333, %v1410
        %v1412 = vand.u32 %v1411, 4294901760
        %v1413 = vsub.f32 %v1411, %v1412
        %v1414 = vand.u32 %v1413, 4294901760
        %1415 = vmatpush1.msra.mxu0 %v1414
        %v1416 = vand.u32 %v338, 4294901760
        %v1417 = vsub.f32 %v338, %v1416
        %v1418 = vand.u32 %v1417, 4294901760
        %v1419 = vsub.f32 %v1417, %v1418
        %v1420 = vand.u32 %v1419, 4294901760
        %1421 = vmatprep.subr.mxu0 %v1420
        %v1422 = vand.u32 %v337, 4294901760
        %v1423 = vsub.f32 %v337, %v1422
        %v1424 = vand.u32 %v1423, 4294901760
        %v1425 = vsub.f32 %v1423, %v1424
        %v1426 = vand.u32 %v1425, 4294901760
        %1427 = vmatpush1.msra.mxu0 %v1426
        %v1428 = vand.u32 %v342, 4294901760
        %v1429 = vsub.f32 %v342, %v1428
        %v1430 = vand.u32 %v1429, 4294901760
        %v1431 = vsub.f32 %v1429, %v1430
        %v1432 = vand.u32 %v1431, 4294901760
        %1433 = vmatprep.subr.mxu0 %v1432
        %v1434 = vand.u32 %v341, 4294901760
        %v1435 = vsub.f32 %v341, %v1434
        %v1436 = vand.u32 %v1435, 4294901760
        %v1437 = vsub.f32 %v1435, %v1436
        %v1438 = vand.u32 %v1437, 4294901760
        %1439 = vmatpush1.msra.mxu0 %v1438
        %v1440 = vand.u32 %v346, 4294901760
        %v1441 = vsub.f32 %v346, %v1440
        %v1442 = vand.u32 %v1441, 4294901760
        %v1443 = vsub.f32 %v1441, %v1442
        %v1444 = vand.u32 %v1443, 4294901760
        %1445 = vmatprep.subr.mxu0 %v1444
        %v1446 = vand.u32 %v345, 4294901760
        %v1447 = vsub.f32 %v345, %v1446
        %v1448 = vand.u32 %v1447, 4294901760
        %v1449 = vsub.f32 %v1447, %v1448
        %v1450 = vand.u32 %v1449, 4294901760
        %1451 = vmatpush1.msra.mxu0 %v1450
        %v1452 = vand.u32 %v350, 4294901760
        %v1453 = vsub.f32 %v350, %v1452
        %v1454 = vand.u32 %v1453, 4294901760
        %v1455 = vsub.f32 %v1453, %v1454
        %v1456 = vand.u32 %v1455, 4294901760
        %1457 = vmatprep.subr.mxu0 %v1456
        %v1458 = vand.u32 %v349, 4294901760
        %v1459 = vsub.f32 %v349, %v1458
        %v1460 = vand.u32 %v1459, 4294901760
        %v1461 = vsub.f32 %v1459, %v1460
        %v1462 = vand.u32 %v1461, 4294901760
        %1463 = vmatpush1.msra.mxu0 %v1462
        %v1464 = vand.u32 %v354, 4294901760
        %v1465 = vsub.f32 %v354, %v1464
        %v1466 = vand.u32 %v1465, 4294901760
        %v1467 = vsub.f32 %v1465, %v1466
        %v1468 = vand.u32 %v1467, 4294901760
        %1469 = vmatprep.subr.mxu0 %v1468
        %v1470 = vand.u32 %v353, 4294901760
        %v1471 = vsub.f32 %v353, %v1470
        %v1472 = vand.u32 %v1471, 4294901760
        %v1473 = vsub.f32 %v1471, %v1472
        %v1474 = vand.u32 %v1473, 4294901760
        %1475 = vmatpush1.msra.mxu0 %v1474
        %v1476 = vand.u32 %v358, 4294901760
        %v1477 = vsub.f32 %v358, %v1476
        %v1478 = vand.u32 %v1477, 4294901760
        %v1479 = vsub.f32 %v1477, %v1478
        %v1480 = vand.u32 %v1479, 4294901760
        %1481 = vmatprep.subr.mxu0 %v1480
        %v1482 = vand.u32 %v357, 4294901760
        %v1483 = vsub.f32 %v357, %v1482
        %v1484 = vand.u32 %v1483, 4294901760
        %v1485 = vsub.f32 %v1483, %v1484
        %v1486 = vand.u32 %v1485, 4294901760
        %1487 = vmatpush1.msra.mxu0 %v1486
        %v1488 = vand.u32 %v362, 4294901760
        %v1489 = vsub.f32 %v362, %v1488
        %v1490 = vand.u32 %v1489, 4294901760
        %v1491 = vsub.f32 %v1489, %v1490
        %v1492 = vand.u32 %v1491, 4294901760
        %1493 = vmatprep.subr.mxu0 %v1492
        %v1494 = vand.u32 %v361, 4294901760
        %v1495 = vsub.f32 %v361, %v1494
        %v1496 = vand.u32 %v1495, 4294901760
        %v1497 = vsub.f32 %v1495, %v1496
        %v1498 = vand.u32 %v1497, 4294901760
        %1499 = vmatpush1.msra.mxu0 %v1498
        %v1500 = vand.u32 %v366, 4294901760
        %v1501 = vsub.f32 %v366, %v1500
        %v1502 = vand.u32 %v1501, 4294901760
        %v1503 = vsub.f32 %v1501, %v1502
        %v1504 = vand.u32 %v1503, 4294901760
        %1505 = vmatprep.subr.mxu0 %v1504
        %v1506 = vand.u32 %v365, 4294901760
        %v1507 = vsub.f32 %v365, %v1506
        %v1508 = vand.u32 %v1507, 4294901760
        %v1509 = vsub.f32 %v1507, %v1508
        %v1510 = vand.u32 %v1509, 4294901760
        %1511 = vmatpush1.msra.mxu0 %v1510
        %v1512 = vand.u32 %v370, 4294901760
        %v1513 = vsub.f32 %v370, %v1512
        %v1514 = vand.u32 %v1513, 4294901760
        %v1515 = vsub.f32 %v1513, %v1514
        %v1516 = vand.u32 %v1515, 4294901760
        %1517 = vmatprep.subr.mxu0 %v1516
        %v1518 = vand.u32 %v369, 4294901760
        %v1519 = vsub.f32 %v369, %v1518
        %v1520 = vand.u32 %v1519, 4294901760
        %v1521 = vsub.f32 %v1519, %v1520
        %v1522 = vand.u32 %v1521, 4294901760
        %1523 = vmatpush1.msra.mxu0 %v1522
        %v1524 = vand.u32 %v374, 4294901760
        %v1525 = vsub.f32 %v374, %v1524
        %v1526 = vand.u32 %v1525, 4294901760
        %v1527 = vsub.f32 %v1525, %v1526
        %v1528 = vand.u32 %v1527, 4294901760
        %1529 = vmatprep.subr.mxu0 %v1528
        %v1530 = vand.u32 %v373, 4294901760
        %v1531 = vsub.f32 %v373, %v1530
        %v1532 = vand.u32 %v1531, 4294901760
        %v1533 = vsub.f32 %v1531, %v1532
        %v1534 = vand.u32 %v1533, 4294901760
        %1535 = vmatpush1.msra.mxu0 %v1534
        %v1536 = vand.u32 %v378, 4294901760
        %v1537 = vsub.f32 %v378, %v1536
        %v1538 = vand.u32 %v1537, 4294901760
        %v1539 = vsub.f32 %v1537, %v1538
        %v1540 = vand.u32 %v1539, 4294901760
        %1541 = vmatprep.subr.mxu0 %v1540
        %v1542 = vand.u32 %v377, 4294901760
        %v1543 = vsub.f32 %v377, %v1542
        %v1544 = vand.u32 %v1543, 4294901760
        %v1545 = vsub.f32 %v1543, %v1544
        %v1546 = vand.u32 %v1545, 4294901760
        %1547 = vmatpush1.msra.mxu0 %v1546
        %v1548 = vand.u32 %v382, 4294901760
        %v1549 = vsub.f32 %v382, %v1548
        %v1550 = vand.u32 %v1549, 4294901760
        %v1551 = vsub.f32 %v1549, %v1550
        %v1552 = vand.u32 %v1551, 4294901760
        %1553 = vmatprep.subr.mxu0 %v1552
        %v1554 = vand.u32 %v381, 4294901760
        %v1555 = vsub.f32 %v381, %v1554
        %v1556 = vand.u32 %v1555, 4294901760
        %v1557 = vsub.f32 %v1555, %v1556
        %v1558 = vand.u32 %v1557, 4294901760
        %1559 = vmatpush1.msra.mxu0 %v1558
        %1560 = vmatprep.subr.mxu0 0.0
        %1561 = vmatpush1.msra.mxu0 0.0
        %1562 = vmatprep.subr.mxu0 0.0
        %1563 = vmatpush1.msra.mxu0 0.0
        %1564 = vmatprep.subr.mxu0 0.0
        %1565 = vmatpush1.msra.mxu0 0.0
        %1566 = vmatprep.subr.mxu0 0.0
        %1567 = vmatpush1.msra.mxu0 0.0
        %1568 = vmatprep.subr.mxu0 0.0
        %1569 = vmatpush1.msra.mxu0 0.0
        %1570 = vmatprep.subr.mxu0 0.0
        %1571 = vmatpush1.msra.mxu0 0.0
        %1572 = vmatprep.subr.mxu0 0.0
        %1573 = vmatpush1.msra.mxu0 0.0
        %1574 = vmatprep.subr.mxu0 0.0
        %1575 = vmatpush1.msra.mxu0 0.0
        %1576 = vmatprep.subr.mxu0 0.0
        %1577 = vmatpush1.msra.mxu0 0.0
        %1578 = vmatprep.subr.mxu0 0.0
        %1579 = vmatpush1.msra.mxu0 0.0
        %1580 = vmatprep.subr.mxu0 0.0
        %1581 = vmatpush1.msra.mxu0 0.0
        %1582 = vmatprep.subr.mxu0 0.0
        %1583 = vmatpush1.msra.mxu0 0.0
        %1584 = vmatprep.subr.mxu0 0.0
        %1585 = vmatpush1.msra.mxu0 0.0
        %1586 = vmatprep.subr.mxu0 0.0
        %1587 = vmatpush1.msra.mxu0 0.0
        %1588 = vmatprep.subr.mxu0 0.0
        %1589 = vmatpush1.msra.mxu0 0.0
        %1590 = vmatprep.subr.mxu0 0.0
        %1591 = vmatpush1.msra.mxu0 0.0
        %1592 = vmatprep.mubr.f32.mxu0 0.0
        %v1593 = vand.u32 %v317, 4294901760
        %1594 = vmatmul.mubr.f32.gmra.mrb[0].mxu0 %v1593
        %v1595 = vpop.f32.mrb[0].mxu0
        %v1596 = vadd.f32 %v1364, %v1595
        %v1597 = vpop.f32.mrb[0].mxu0
        %v1598 = vadd.f32 %v1366, %v1597
        %1599 = vdwg.mxu0
        %v1600 = vand.u32 %v322, 4294901760
        %v1601 = vsub.f32 %v322, %v1600
        %1602 = vmatprep.subr.mxu0 %v1601
        %v1603 = vand.u32 %v321, 4294901760
        %v1604 = vsub.f32 %v321, %v1603
        %1605 = vmatpush1.msra.mxu0 %v1604
        %v1606 = vand.u32 %v326, 4294901760
        %v1607 = vsub.f32 %v326, %v1606
        %1608 = vmatprep.subr.mxu0 %v1607
        %v1609 = vand.u32 %v325, 4294901760
        %v1610 = vsub.f32 %v325, %v1609
        %1611 = vmatpush1.msra.mxu0 %v1610
        %v1612 = vand.u32 %v330, 4294901760
        %v1613 = vsub.f32 %v330, %v1612
        %1614 = vmatprep.subr.mxu0 %v1613
        %v1615 = vand.u32 %v329, 4294901760
        %v1616 = vsub.f32 %v329, %v1615
        %1617 = vmatpush1.msra.mxu0 %v1616
        %v1618 = vand.u32 %v334, 4294901760
        %v1619 = vsub.f32 %v334, %v1618
        %1620 = vmatprep.subr.mxu0 %v1619
        %v1621 = vand.u32 %v333, 4294901760
        %v1622 = vsub.f32 %v333, %v1621
        %1623 = vmatpush1.msra.mxu0 %v1622
        %v1624 = vand.u32 %v338, 4294901760
        %v1625 = vsub.f32 %v338, %v1624
        %1626 = vmatprep.subr.mxu0 %v1625
        %v1627 = vand.u32 %v337, 4294901760
        %v1628 = vsub.f32 %v337, %v1627
        %1629 = vmatpush1.msra.mxu0 %v1628
        %v1630 = vand.u32 %v342, 4294901760
        %v1631 = vsub.f32 %v342, %v1630
        %1632 = vmatprep.subr.mxu0 %v1631
        %v1633 = vand.u32 %v341, 4294901760
        %v1634 = vsub.f32 %v341, %v1633
        %1635 = vmatpush1.msra.mxu0 %v1634
        %v1636 = vand.u32 %v346, 4294901760
        %v1637 = vsub.f32 %v346, %v1636
        %1638 = vmatprep.subr.mxu0 %v1637
        %v1639 = vand.u32 %v345, 4294901760
        %v1640 = vsub.f32 %v345, %v1639
        %1641 = vmatpush1.msra.mxu0 %v1640
        %v1642 = vand.u32 %v350, 4294901760
        %v1643 = vsub.f32 %v350, %v1642
        %1644 = vmatprep.subr.mxu0 %v1643
        %v1645 = vand.u32 %v349, 4294901760
        %v1646 = vsub.f32 %v349, %v1645
        %1647 = vmatpush1.msra.mxu0 %v1646
        %v1648 = vand.u32 %v354, 4294901760
        %v1649 = vsub.f32 %v354, %v1648
        %1650 = vmatprep.subr.mxu0 %v1649
        %v1651 = vand.u32 %v353, 4294901760
        %v1652 = vsub.f32 %v353, %v1651
        %1653 = vmatpush1.msra.mxu0 %v1652
        %v1654 = vand.u32 %v358, 4294901760
        %v1655 = vsub.f32 %v358, %v1654
        %1656 = vmatprep.subr.mxu0 %v1655
        %v1657 = vand.u32 %v357, 4294901760
        %v1658 = vsub.f32 %v357, %v1657
        %1659 = vmatpush1.msra.mxu0 %v1658
        %v1660 = vand.u32 %v362, 4294901760
        %v1661 = vsub.f32 %v362, %v1660
        %1662 = vmatprep.subr.mxu0 %v1661
        %v1663 = vand.u32 %v361, 4294901760
        %v1664 = vsub.f32 %v361, %v1663
        %1665 = vmatpush1.msra.mxu0 %v1664
        %v1666 = vand.u32 %v366, 4294901760
        %v1667 = vsub.f32 %v366, %v1666
        %1668 = vmatprep.subr.mxu0 %v1667
        %v1669 = vand.u32 %v365, 4294901760
        %v1670 = vsub.f32 %v365, %v1669
        %1671 = vmatpush1.msra.mxu0 %v1670
        %v1672 = vand.u32 %v370, 4294901760
        %v1673 = vsub.f32 %v370, %v1672
        %1674 = vmatprep.subr.mxu0 %v1673
        %v1675 = vand.u32 %v369, 4294901760
        %v1676 = vsub.f32 %v369, %v1675
        %1677 = vmatpush1.msra.mxu0 %v1676
        %v1678 = vand.u32 %v374, 4294901760
        %v1679 = vsub.f32 %v374, %v1678
        %1680 = vmatprep.subr.mxu0 %v1679
        %v1681 = vand.u32 %v373, 4294901760
        %v1682 = vsub.f32 %v373, %v1681
        %1683 = vmatpush1.msra.mxu0 %v1682
        %v1684 = vand.u32 %v378, 4294901760
        %v1685 = vsub.f32 %v378, %v1684
        %1686 = vmatprep.subr.mxu0 %v1685
        %v1687 = vand.u32 %v377, 4294901760
        %v1688 = vsub.f32 %v377, %v1687
        %1689 = vmatpush1.msra.mxu0 %v1688
        %v1690 = vand.u32 %v382, 4294901760
        %v1691 = vsub.f32 %v382, %v1690
        %1692 = vmatprep.subr.mxu0 %v1691
        %v1693 = vand.u32 %v381, 4294901760
        %v1694 = vsub.f32 %v381, %v1693
        %1695 = vmatpush1.msra.mxu0 %v1694
        %1696 = vmatprep.subr.mxu0 0.0
        %1697 = vmatpush1.msra.mxu0 0.0
        %1698 = vmatprep.subr.mxu0 0.0
        %1699 = vmatpush1.msra.mxu0 0.0
        %1700 = vmatprep.subr.mxu0 0.0
        %1701 = vmatpush1.msra.mxu0 0.0
        %1702 = vmatprep.subr.mxu0 0.0
        %1703 = vmatpush1.msra.mxu0 0.0
        %1704 = vmatprep.subr.mxu0 0.0
        %1705 = vmatpush1.msra.mxu0 0.0
        %1706 = vmatprep.subr.mxu0 0.0
        %1707 = vmatpush1.msra.mxu0 0.0
        %1708 = vmatprep.subr.mxu0 0.0
        %1709 = vmatpush1.msra.mxu0 0.0
        %1710 = vmatprep.subr.mxu0 0.0
        %1711 = vmatpush1.msra.mxu0 0.0
        %1712 = vmatprep.subr.mxu0 0.0
        %1713 = vmatpush1.msra.mxu0 0.0
        %1714 = vmatprep.subr.mxu0 0.0
        %1715 = vmatpush1.msra.mxu0 0.0
        %1716 = vmatprep.subr.mxu0 0.0
        %1717 = vmatpush1.msra.mxu0 0.0
        %1718 = vmatprep.subr.mxu0 0.0
        %1719 = vmatpush1.msra.mxu0 0.0
        %1720 = vmatprep.subr.mxu0 0.0
        %1721 = vmatpush1.msra.mxu0 0.0
        %1722 = vmatprep.subr.mxu0 0.0
        %1723 = vmatpush1.msra.mxu0 0.0
        %1724 = vmatprep.subr.mxu0 0.0
        %1725 = vmatpush1.msra.mxu0 0.0
        %1726 = vmatprep.subr.mxu0 0.0
        %1727 = vmatpush1.msra.mxu0 0.0
        %1728 = vmatprep.mubr.f32.mxu0 0.0
        %v1729 = vand.u32 %v317, 4294901760
        %v1730 = vsub.f32 %v317, %v1729
        %1731 = vmatmul.mubr.f32.gmra.mrb[0].mxu0 %v1730
        %v1732 = vpop.f32.mrb[0].mxu0
        %v1733 = vadd.f32 %v1596, %v1732
        %v1734 = vpop.f32.mrb[0].mxu0
        %v1735 = vadd.f32 %v1598, %v1734
        %1736 = vdwg.mxu0
        %v1737 = vand.u32 %v322, 4294901760
        %1738 = vmatprep.subr.mxu0 %v1737
        %v1739 = vand.u32 %v321, 4294901760
        %1740 = vmatpush1.msra.mxu0 %v1739
        %v1741 = vand.u32 %v326, 4294901760
        %1742 = vmatprep.subr.mxu0 %v1741
        %v1743 = vand.u32 %v325, 4294901760
        %1744 = vmatpush1.msra.mxu0 %v1743
        %v1745 = vand.u32 %v330, 4294901760
        %1746 = vmatprep.subr.mxu0 %v1745
        %v1747 = vand.u32 %v329, 4294901760
        %1748 = vmatpush1.msra.mxu0 %v1747
        %v1749 = vand.u32 %v334, 4294901760
        %1750 = vmatprep.subr.mxu0 %v1749
        %v1751 = vand.u32 %v333, 4294901760
        %1752 = vmatpush1.msra.mxu0 %v1751
        %v1753 = vand.u32 %v338, 4294901760
        %1754 = vmatprep.subr.mxu0 %v1753
        %v1755 = vand.u32 %v337, 4294901760
        %1756 = vmatpush1.msra.mxu0 %v1755
        %v1757 = vand.u32 %v342, 4294901760
        %1758 = vmatprep.subr.mxu0 %v1757
        %v1759 = vand.u32 %v341, 4294901760
        %1760 = vmatpush1.msra.mxu0 %v1759
        %v1761 = vand.u32 %v346, 4294901760
        %1762 = vmatprep.subr.mxu0 %v1761
        %v1763 = vand.u32 %v345, 4294901760
        %1764 = vmatpush1.msra.mxu0 %v1763
        %v1765 = vand.u32 %v350, 4294901760
        %1766 = vmatprep.subr.mxu0 %v1765
        %v1767 = vand.u32 %v349, 4294901760
        %1768 = vmatpush1.msra.mxu0 %v1767
        %v1769 = vand.u32 %v354, 4294901760
        %1770 = vmatprep.subr.mxu0 %v1769
        %v1771 = vand.u32 %v353, 4294901760
        %1772 = vmatpush1.msra.mxu0 %v1771
        %v1773 = vand.u32 %v358, 4294901760
        %1774 = vmatprep.subr.mxu0 %v1773
        %v1775 = vand.u32 %v357, 4294901760
        %1776 = vmatpush1.msra.mxu0 %v1775
        %v1777 = vand.u32 %v362, 4294901760
        %1778 = vmatprep.subr.mxu0 %v1777
        %v1779 = vand.u32 %v361, 4294901760
        %1780 = vmatpush1.msra.mxu0 %v1779
        %v1781 = vand.u32 %v366, 4294901760
        %1782 = vmatprep.subr.mxu0 %v1781
        %v1783 = vand.u32 %v365, 4294901760
        %1784 = vmatpush1.msra.mxu0 %v1783
        %v1785 = vand.u32 %v370, 4294901760
        %1786 = vmatprep.subr.mxu0 %v1785
        %v1787 = vand.u32 %v369, 4294901760
        %1788 = vmatpush1.msra.mxu0 %v1787
        %v1789 = vand.u32 %v374, 4294901760
        %1790 = vmatprep.subr.mxu0 %v1789
        %v1791 = vand.u32 %v373, 4294901760
        %1792 = vmatpush1.msra.mxu0 %v1791
        %v1793 = vand.u32 %v378, 4294901760
        %1794 = vmatprep.subr.mxu0 %v1793
        %v1795 = vand.u32 %v377, 4294901760
        %1796 = vmatpush1.msra.mxu0 %v1795
        %v1797 = vand.u32 %v382, 4294901760
        %1798 = vmatprep.subr.mxu0 %v1797
        %v1799 = vand.u32 %v381, 4294901760
        %1800 = vmatpush1.msra.mxu0 %v1799
        %1801 = vmatprep.subr.mxu0 0.0
        %1802 = vmatpush1.msra.mxu0 0.0
        %1803 = vmatprep.subr.mxu0 0.0
        %1804 = vmatpush1.msra.mxu0 0.0
        %1805 = vmatprep.subr.mxu0 0.0
        %1806 = vmatpush1.msra.mxu0 0.0
        %1807 = vmatprep.subr.mxu0 0.0
        %1808 = vmatpush1.msra.mxu0 0.0
        %1809 = vmatprep.subr.mxu0 0.0
        %1810 = vmatpush1.msra.mxu0 0.0
        %1811 = vmatprep.subr.mxu0 0.0
        %1812 = vmatpush1.msra.mxu0 0.0
        %1813 = vmatprep.subr.mxu0 0.0
        %1814 = vmatpush1.msra.mxu0 0.0
        %1815 = vmatprep.subr.mxu0 0.0
        %1816 = vmatpush1.msra.mxu0 0.0
        %1817 = vmatprep.subr.mxu0 0.0
        %1818 = vmatpush1.msra.mxu0 0.0
        %1819 = vmatprep.subr.mxu0 0.0
        %1820 = vmatpush1.msra.mxu0 0.0
        %1821 = vmatprep.subr.mxu0 0.0
        %1822 = vmatpush1.msra.mxu0 0.0
        %1823 = vmatprep.subr.mxu0 0.0
        %1824 = vmatpush1.msra.mxu0 0.0
        %1825 = vmatprep.subr.mxu0 0.0
        %1826 = vmatpush1.msra.mxu0 0.0
        %1827 = vmatprep.subr.mxu0 0.0
        %1828 = vmatpush1.msra.mxu0 0.0
        %1829 = vmatprep.subr.mxu0 0.0
        %1830 = vmatpush1.msra.mxu0 0.0
        %1831 = vmatprep.subr.mxu0 0.0
        %1832 = vmatpush1.msra.mxu0 0.0
        %1833 = vmatprep.mubr.f32.mxu0 0.0
        %v1834 = vand.u32 %v317, 4294901760
        %v1835 = vsub.f32 %v317, %v1834
        %v1836 = vand.u32 %v1835, 4294901760
        %1837 = vmatmul.mubr.f32.gmra.mrb[0].mxu0 %v1836
        %v1838 = vpop.f32.mrb[0].mxu0
        %v1839 = vadd.f32 %v1733, %v1838
        %v1840 = vpop.f32.mrb[0].mxu0
        %v1841 = vadd.f32 %v1735, %v1840
        %1842 = vdwg.mxu0
        %v1843 = vand.u32 %v322, 4294901760
        %v1844 = vsub.f32 %v322, %v1843
        %v1845 = vand.u32 %v1844, 4294901760
        %1846 = vmatprep.subr.mxu0 %v1845
        %v1847 = vand.u32 %v321, 4294901760
        %v1848 = vsub.f32 %v321, %v1847
        %v1849 = vand.u32 %v1848, 4294901760
        %1850 = vmatpush1.msra.mxu0 %v1849
        %v1851 = vand.u32 %v326, 4294901760
        %v1852 = vsub.f32 %v326, %v1851
        %v1853 = vand.u32 %v1852, 4294901760
        %1854 = vmatprep.subr.mxu0 %v1853
        %v1855 = vand.u32 %v325, 4294901760
        %v1856 = vsub.f32 %v325, %v1855
        %v1857 = vand.u32 %v1856, 4294901760
        %1858 = vmatpush1.msra.mxu0 %v1857
        %v1859 = vand.u32 %v330, 4294901760
        %v1860 = vsub.f32 %v330, %v1859
        %v1861 = vand.u32 %v1860, 4294901760
        %1862 = vmatprep.subr.mxu0 %v1861
        %v1863 = vand.u32 %v329, 4294901760
        %v1864 = vsub.f32 %v329, %v1863
        %v1865 = vand.u32 %v1864, 4294901760
        %1866 = vmatpush1.msra.mxu0 %v1865
        %v1867 = vand.u32 %v334, 4294901760
        %v1868 = vsub.f32 %v334, %v1867
        %v1869 = vand.u32 %v1868, 4294901760
        %1870 = vmatprep.subr.mxu0 %v1869
        %v1871 = vand.u32 %v333, 4294901760
        %v1872 = vsub.f32 %v333, %v1871
        %v1873 = vand.u32 %v1872, 4294901760
        %1874 = vmatpush1.msra.mxu0 %v1873
        %v1875 = vand.u32 %v338, 4294901760
        %v1876 = vsub.f32 %v338, %v1875
        %v1877 = vand.u32 %v1876, 4294901760
        %1878 = vmatprep.subr.mxu0 %v1877
        %v1879 = vand.u32 %v337, 4294901760
        %v1880 = vsub.f32 %v337, %v1879
        %v1881 = vand.u32 %v1880, 4294901760
        %1882 = vmatpush1.msra.mxu0 %v1881
        %v1883 = vand.u32 %v342, 4294901760
        %v1884 = vsub.f32 %v342, %v1883
        %v1885 = vand.u32 %v1884, 4294901760
        %1886 = vmatprep.subr.mxu0 %v1885
        %v1887 = vand.u32 %v341, 4294901760
        %v1888 = vsub.f32 %v341, %v1887
        %v1889 = vand.u32 %v1888, 4294901760
        %1890 = vmatpush1.msra.mxu0 %v1889
        %v1891 = vand.u32 %v346, 4294901760
        %v1892 = vsub.f32 %v346, %v1891
        %v1893 = vand.u32 %v1892, 4294901760
        %1894 = vmatprep.subr.mxu0 %v1893
        %v1895 = vand.u32 %v345, 4294901760
        %v1896 = vsub.f32 %v345, %v1895
        %v1897 = vand.u32 %v1896, 4294901760
        %1898 = vmatpush1.msra.mxu0 %v1897
        %v1899 = vand.u32 %v350, 4294901760
        %v1900 = vsub.f32 %v350, %v1899
        %v1901 = vand.u32 %v1900, 4294901760
        %1902 = vmatprep.subr.mxu0 %v1901
        %v1903 = vand.u32 %v349, 4294901760
        %v1904 = vsub.f32 %v349, %v1903
        %v1905 = vand.u32 %v1904, 4294901760
        %1906 = vmatpush1.msra.mxu0 %v1905
        %v1907 = vand.u32 %v354, 4294901760
        %v1908 = vsub.f32 %v354, %v1907
        %v1909 = vand.u32 %v1908, 4294901760
        %1910 = vmatprep.subr.mxu0 %v1909
        %v1911 = vand.u32 %v353, 4294901760
        %v1912 = vsub.f32 %v353, %v1911
        %v1913 = vand.u32 %v1912, 4294901760
        %1914 = vmatpush1.msra.mxu0 %v1913
        %v1915 = vand.u32 %v358, 4294901760
        %v1916 = vsub.f32 %v358, %v1915
        %v1917 = vand.u32 %v1916, 4294901760
        %1918 = vmatprep.subr.mxu0 %v1917
        %v1919 = vand.u32 %v357, 4294901760
        %v1920 = vsub.f32 %v357, %v1919
        %v1921 = vand.u32 %v1920, 4294901760
        %1922 = vmatpush1.msra.mxu0 %v1921
        %v1923 = vand.u32 %v362, 4294901760
        %v1924 = vsub.f32 %v362, %v1923
        %v1925 = vand.u32 %v1924, 4294901760
        %1926 = vmatprep.subr.mxu0 %v1925
        %v1927 = vand.u32 %v361, 4294901760
        %v1928 = vsub.f32 %v361, %v1927
        %v1929 = vand.u32 %v1928, 4294901760
        %1930 = vmatpush1.msra.mxu0 %v1929
        %v1931 = vand.u32 %v366, 4294901760
        %v1932 = vsub.f32 %v366, %v1931
        %v1933 = vand.u32 %v1932, 4294901760
        %1934 = vmatprep.subr.mxu0 %v1933
        %v1935 = vand.u32 %v365, 4294901760
        %v1936 = vsub.f32 %v365, %v1935
        %v1937 = vand.u32 %v1936, 4294901760
        %1938 = vmatpush1.msra.mxu0 %v1937
        %v1939 = vand.u32 %v370, 4294901760
        %v1940 = vsub.f32 %v370, %v1939
        %v1941 = vand.u32 %v1940, 4294901760
        %1942 = vmatprep.subr.mxu0 %v1941
        %v1943 = vand.u32 %v369, 4294901760
        %v1944 = vsub.f32 %v369, %v1943
        %v1945 = vand.u32 %v1944, 4294901760
        %1946 = vmatpush1.msra.mxu0 %v1945
        %v1947 = vand.u32 %v374, 4294901760
        %v1948 = vsub.f32 %v374, %v1947
        %v1949 = vand.u32 %v1948, 4294901760
        %1950 = vmatprep.subr.mxu0 %v1949
        %v1951 = vand.u32 %v373, 4294901760
        %v1952 = vsub.f32 %v373, %v1951
        %v1953 = vand.u32 %v1952, 4294901760
        %1954 = vmatpush1.msra.mxu0 %v1953
        %v1955 = vand.u32 %v378, 4294901760
        %v1956 = vsub.f32 %v378, %v1955
        %v1957 = vand.u32 %v1956, 4294901760
        %1958 = vmatprep.subr.mxu0 %v1957
        %v1959 = vand.u32 %v377, 4294901760
        %v1960 = vsub.f32 %v377, %v1959
        %v1961 = vand.u32 %v1960, 4294901760
        %1962 = vmatpush1.msra.mxu0 %v1961
        %v1963 = vand.u32 %v382, 4294901760
        %v1964 = vsub.f32 %v382, %v1963
        %v1965 = vand.u32 %v1964, 4294901760
        %1966 = vmatprep.subr.mxu0 %v1965
        %v1967 = vand.u32 %v381, 4294901760
        %v1968 = vsub.f32 %v381, %v1967
        %v1969 = vand.u32 %v1968, 4294901760
        %1970 = vmatpush1.msra.mxu0 %v1969
        %1971 = vmatprep.subr.mxu0 0.0
        %1972 = vmatpush1.msra.mxu0 0.0
        %1973 = vmatprep.subr.mxu0 0.0
        %1974 = vmatpush1.msra.mxu0 0.0
        %1975 = vmatprep.subr.mxu0 0.0
        %1976 = vmatpush1.msra.mxu0 0.0
        %1977 = vmatprep.subr.mxu0 0.0
        %1978 = vmatpush1.msra.mxu0 0.0
        %1979 = vmatprep.subr.mxu0 0.0
        %1980 = vmatpush1.msra.mxu0 0.0
        %1981 = vmatprep.subr.mxu0 0.0
        %1982 = vmatpush1.msra.mxu0 0.0
        %1983 = vmatprep.subr.mxu0 0.0
        %1984 = vmatpush1.msra.mxu0 0.0
        %1985 = vmatprep.subr.mxu0 0.0
        %1986 = vmatpush1.msra.mxu0 0.0
        %1987 = vmatprep.subr.mxu0 0.0
        %1988 = vmatpush1.msra.mxu0 0.0
        %1989 = vmatprep.subr.mxu0 0.0
        %1990 = vmatpush1.msra.mxu0 0.0
        %1991 = vmatprep.subr.mxu0 0.0
        %1992 = vmatpush1.msra.mxu0 0.0
        %1993 = vmatprep.subr.mxu0 0.0
        %1994 = vmatpush1.msra.mxu0 0.0
        %1995 = vmatprep.subr.mxu0 0.0
        %1996 = vmatpush1.msra.mxu0 0.0
        %1997 = vmatprep.subr.mxu0 0.0
        %1998 = vmatpush1.msra.mxu0 0.0
        %1999 = vmatprep.subr.mxu0 0.0
        %2000 = vmatpush1.msra.mxu0 0.0
        %2001 = vmatprep.subr.mxu0 0.0
        %2002 = vmatpush1.msra.mxu0 0.0
        %2003 = vmatprep.mubr.f32.mxu0 0.0
        %v2004 = vand.u32 %v317, 4294901760
        %2005 = vmatmul.mubr.f32.gmra.mrb[0].mxu0 %v2004
        %v2006 = vpop.f32.mrb[0].mxu0
        %v2007 = vadd.f32 %v1839, %v2006
        %v2008 = vpop.f32.mrb[0].mxu0
        %v2009 = vadd.f32 %v1841, %v2008
        %2010 = vdwg.mxu0
        %v2011 = vand.u32 %v322, 4294901760
        %2012 = vmatprep.subr.mxu0 %v2011
        %v2013 = vand.u32 %v321, 4294901760
        %2014 = vmatpush1.msra.mxu0 %v2013
        %v2015 = vand.u32 %v326, 4294901760
        %2016 = vmatprep.subr.mxu0 %v2015
        %v2017 = vand.u32 %v325, 4294901760
        %2018 = vmatpush1.msra.mxu0 %v2017
        %v2019 = vand.u32 %v330, 4294901760
        %2020 = vmatprep.subr.mxu0 %v2019
        %v2021 = vand.u32 %v329, 4294901760
        %2022 = vmatpush1.msra.mxu0 %v2021
        %v2023 = vand.u32 %v334, 4294901760
        %2024 = vmatprep.subr.mxu0 %v2023
        %v2025 = vand.u32 %v333, 4294901760
        %2026 = vmatpush1.msra.mxu0 %v2025
        %v2027 = vand.u32 %v338, 4294901760
        %2028 = vmatprep.subr.mxu0 %v2027
        %v2029 = vand.u32 %v337, 4294901760
        %2030 = vmatpush1.msra.mxu0 %v2029
        %v2031 = vand.u32 %v342, 4294901760
        %2032 = vmatprep.subr.mxu0 %v2031
        %v2033 = vand.u32 %v341, 4294901760
        %2034 = vmatpush1.msra.mxu0 %v2033
        %v2035 = vand.u32 %v346, 4294901760
        %2036 = vmatprep.subr.mxu0 %v2035
        %v2037 = vand.u32 %v345, 4294901760
        %2038 = vmatpush1.msra.mxu0 %v2037
        %v2039 = vand.u32 %v350, 4294901760
        %2040 = vmatprep.subr.mxu0 %v2039
        %v2041 = vand.u32 %v349, 4294901760
        %2042 = vmatpush1.msra.mxu0 %v2041
        %v2043 = vand.u32 %v354, 4294901760
        %2044 = vmatprep.subr.mxu0 %v2043
        %v2045 = vand.u32 %v353, 4294901760
        %2046 = vmatpush1.msra.mxu0 %v2045
        %v2047 = vand.u32 %v358, 4294901760
        %2048 = vmatprep.subr.mxu0 %v2047
        %v2049 = vand.u32 %v357, 4294901760
        %2050 = vmatpush1.msra.mxu0 %v2049
        %v2051 = vand.u32 %v362, 4294901760
        %2052 = vmatprep.subr.mxu0 %v2051
        %v2053 = vand.u32 %v361, 4294901760
        %2054 = vmatpush1.msra.mxu0 %v2053
        %v2055 = vand.u32 %v366, 4294901760
        %2056 = vmatprep.subr.mxu0 %v2055
        %v2057 = vand.u32 %v365, 4294901760
        %2058 = vmatpush1.msra.mxu0 %v2057
        %v2059 = vand.u32 %v370, 4294901760
        %2060 = vmatprep.subr.mxu0 %v2059
        %v2061 = vand.u32 %v369, 4294901760
        %2062 = vmatpush1.msra.mxu0 %v2061
        %v2063 = vand.u32 %v374, 4294901760
        %2064 = vmatprep.subr.mxu0 %v2063
        %v2065 = vand.u32 %v373, 4294901760
        %2066 = vmatpush1.msra.mxu0 %v2065
        %v2067 = vand.u32 %v378, 4294901760
        %2068 = vmatprep.subr.mxu0 %v2067
        %v2069 = vand.u32 %v377, 4294901760
        %2070 = vmatpush1.msra.mxu0 %v2069
        %v2071 = vand.u32 %v382, 4294901760
        %2072 = vmatprep.subr.mxu0 %v2071
        %v2073 = vand.u32 %v381, 4294901760
        %2074 = vmatpush1.msra.mxu0 %v2073
        %2075 = vmatprep.subr.mxu0 0.0
        %2076 = vmatpush1.msra.mxu0 0.0
        %2077 = vmatprep.subr.mxu0 0.0
        %2078 = vmatpush1.msra.mxu0 0.0
        %2079 = vmatprep.subr.mxu0 0.0
        %2080 = vmatpush1.msra.mxu0 0.0
        %2081 = vmatprep.subr.mxu0 0.0
        %2082 = vmatpush1.msra.mxu0 0.0
        %2083 = vmatprep.subr.mxu0 0.0
        %2084 = vmatpush1.msra.mxu0 0.0
        %2085 = vmatprep.subr.mxu0 0.0
        %2086 = vmatpush1.msra.mxu0 0.0
        %2087 = vmatprep.subr.mxu0 0.0
        %2088 = vmatpush1.msra.mxu0 0.0
        %2089 = vmatprep.subr.mxu0 0.0
        %2090 = vmatpush1.msra.mxu0 0.0
        %2091 = vmatprep.subr.mxu0 0.0
        %2092 = vmatpush1.msra.mxu0 0.0
        %2093 = vmatprep.subr.mxu0 0.0
        %2094 = vmatpush1.msra.mxu0 0.0
        %2095 = vmatprep.subr.mxu0 0.0
        %2096 = vmatpush1.msra.mxu0 0.0
        %2097 = vmatprep.subr.mxu0 0.0
        %2098 = vmatpush1.msra.mxu0 0.0
        %2099 = vmatprep.subr.mxu0 0.0
        %2100 = vmatpush1.msra.mxu0 0.0
        %2101 = vmatprep.subr.mxu0 0.0
        %2102 = vmatpush1.msra.mxu0 0.0
        %2103 = vmatprep.subr.mxu0 0.0
        %2104 = vmatpush1.msra.mxu0 0.0
        %2105 = vmatprep.subr.mxu0 0.0
        %2106 = vmatpush1.msra.mxu0 0.0
        %2107 = vmatprep.mubr.f32.mxu0 0.0
        %v2108 = vand.u32 %v317, 4294901760
        %2109 = vmatmul.mubr.f32.gmra.mrb[0].mxu0 %v2108
        %v2110 = vpop.f32.mrb[0].mxu0
        %v2111 = vadd.f32 %v2007, %v2110
        %v2112 = vpop.f32.mrb[0].mxu0
        %v2113 = vadd.f32 %v2009, %v2112
        %2114 = vdwg.mxu0
        %v2115 = vmax.f32 %v1256, 0.0
        %v2116 = vmax.f32 %v1258, 0.0
        %v2117 = vmax.f32 %v2111, 0.0
        %v2118 = vmax.f32 %v2113, 0.0
        %v2119 = vld [vmem:[%s3] sm:$0xff]
        %v2120 = vld [vmem:[%s3 + $0x8] sm:$0xff]
        %v2121 = vld [vmem:[%s3 + $0x10] sm:$0xff]
        %v2122 = vld [vmem:[%s3 + $0x18] sm:$0xff]
        %v2123 = vld [vmem:[%s3 + $0x20] sm:$0xff]
        %v2124 = vld [vmem:[%s3 + $0x28] sm:$0xff]
        %v2125 = vld [vmem:[%s3 + $0x30] sm:$0xff]
        %v2126 = vld [vmem:[%s3 + $0x38] sm:$0xff]
        %v2127 = vld [vmem:[%s3 + $0x40] sm:$0xff]
        %v2128 = vld [vmem:[%s3 + $0x48] sm:$0xff]
        %v2129 = vld [vmem:[%s3 + $0x50] sm:$0xff]
        %v2130 = vld [vmem:[%s3 + $0x58] sm:$0xff]
        %v2131 = vld [vmem:[%s3 + $0x60] sm:$0xff]
        %v2132 = vld [vmem:[%s3 + $0x68] sm:$0xff]
        %v2133 = vld [vmem:[%s3 + $0x70] sm:$0xff]
        %v2134 = vld [vmem:[%s3 + $0x78] sm:$0xff]
        %v2135 = vld [vmem:[%s3 + $0x80] sm:$0xff]
        %v2136 = vld [vmem:[%s3 + $0x88] sm:$0xff]
        %v2137 = vld [vmem:[%s3 + $0x90] sm:$0xff]
        %v2138 = vld [vmem:[%s3 + $0x98] sm:$0xff]
        %v2139 = vld [vmem:[%s3 + $0xa0] sm:$0xff]
        %v2140 = vld [vmem:[%s3 + $0xa8] sm:$0xff]
        %v2141 = vld [vmem:[%s3 + $0xb0] sm:$0xff]
        %v2142 = vld [vmem:[%s3 + $0xb8] sm:$0xff]
        %v2143 = vld [vmem:[%s3 + $0xc0] sm:$0xff]
        %v2144 = vld [vmem:[%s3 + $0xc8] sm:$0xff]
        %v2145 = vld [vmem:[%s3 + $0xd0] sm:$0xff]
        %v2146 = vld [vmem:[%s3 + $0xd8] sm:$0xff]
        %v2147 = vld [vmem:[%s3 + $0xe0] sm:$0xff]
        %v2148 = vld [vmem:[%s3 + $0xe8] sm:$0xff]
        %v2149 = vld [vmem:[%s3 + $0xf0] sm:$0xff]
        %v2150 = vld [vmem:[%s3 + $0xf8] sm:$0xff]
        %v2151 = vld [vmem:[%s3 + $0x100] sm:$0xff]
        %v2152 = vld [vmem:[%s3 + $0x108] sm:$0xff]
        %v2153 = vld [vmem:[%s3 + $0x110] sm:$0xff]
        %v2154 = vld [vmem:[%s3 + $0x118] sm:$0xff]
        %v2155 = vld [vmem:[%s3 + $0x120] sm:$0xff]
        %v2156 = vld [vmem:[%s3 + $0x128] sm:$0xff]
        %v2157 = vld [vmem:[%s3 + $0x130] sm:$0xff]
        %v2158 = vld [vmem:[%s3 + $0x138] sm:$0xff]
        %v2159 = vld [vmem:[%s3 + $0x140] sm:$0xff]
        %v2160 = vld [vmem:[%s3 + $0x148] sm:$0xff]
        %v2161 = vld [vmem:[%s3 + $0x150] sm:$0xff]
        %v2162 = vld [vmem:[%s3 + $0x158] sm:$0xff]
        %v2163 = vld [vmem:[%s3 + $0x160] sm:$0xff]
        %v2164 = vld [vmem:[%s3 + $0x168] sm:$0xff]
        %v2165 = vld [vmem:[%s3 + $0x170] sm:$0xff]
        %v2166 = vld [vmem:[%s3 + $0x178] sm:$0xff]
        %v2167 = vld [vmem:[%s3 + $0x180] sm:$0xff]
        %v2168 = vld [vmem:[%s3 + $0x188] sm:$0xff]
        %v2169 = vld [vmem:[%s3 + $0x190] sm:$0xff]
        %v2170 = vld [vmem:[%s3 + $0x198] sm:$0xff]
        %v2171 = vld [vmem:[%s3 + $0x1a0] sm:$0xff]
        %v2172 = vld [vmem:[%s3 + $0x1a8] sm:$0xff]
        %v2173 = vld [vmem:[%s3 + $0x1b0] sm:$0xff]
        %v2174 = vld [vmem:[%s3 + $0x1b8] sm:$0xff]
        %v2175 = vld [vmem:[%s3 + $0x1c0] sm:$0xff]
        %v2176 = vld [vmem:[%s3 + $0x1c8] sm:$0xff]
        %v2177 = vld [vmem:[%s3 + $0x1d0] sm:$0xff]
        %v2178 = vld [vmem:[%s3 + $0x1d8] sm:$0xff]
        %v2179 = vld [vmem:[%s3 + $0x1e0] sm:$0xff]
        %v2180 = vld [vmem:[%s3 + $0x1e8] sm:$0xff]
        %v2181 = vld [vmem:[%s3 + $0x1f0] sm:$0xff]
        %v2182 = vld [vmem:[%s3 + $0x1f8] sm:$0xff]
        %s2183 = sld [smem:[#allocation2]]
        %v2184 = vstv %s2183
        %2185 = vmatprep.subr.mxu0 0.0
        %v2186 = vand.u32 %v2119, 4294901760
        %2187 = vmatpush1.msra.mxu0 %v2186
        %2188 = vmatprep.subr.mxu0 0.0
        %v2189 = vand.u32 %v2120, 4294901760
        %2190 = vmatpush1.msra.mxu0 %v2189
        %2191 = vmatprep.subr.mxu0 0.0
        %v2192 = vand.u32 %v2121, 4294901760
        %2193 = vmatpush1.msra.mxu0 %v2192
        %2194 = vmatprep.subr.mxu0 0.0
        %v2195 = vand.u32 %v2122, 4294901760
        %2196 = vmatpush1.msra.mxu0 %v2195
        %2197 = vmatprep.subr.mxu0 0.0
        %v2198 = vand.u32 %v2123, 4294901760
        %2199 = vmatpush1.msra.mxu0 %v2198
        %2200 = vmatprep.subr.mxu0 0.0
        %v2201 = vand.u32 %v2124, 4294901760
        %2202 = vmatpush1.msra.mxu0 %v2201
        %2203 = vmatprep.subr.mxu0 0.0
        %v2204 = vand.u32 %v2125, 4294901760
        %2205 = vmatpush1.msra.mxu0 %v2204
        %2206 = vmatprep.subr.mxu0 0.0
        %v2207 = vand.u32 %v2126, 4294901760
        %2208 = vmatpush1.msra.mxu0 %v2207
        %2209 = vmatprep.subr.mxu0 0.0
        %v2210 = vand.u32 %v2127, 4294901760
        %2211 = vmatpush1.msra.mxu0 %v2210
        %2212 = vmatprep.subr.mxu0 0.0
        %v2213 = vand.u32 %v2128, 4294901760
        %2214 = vmatpush1.msra.mxu0 %v2213
        %2215 = vmatprep.subr.mxu0 0.0
        %v2216 = vand.u32 %v2129, 4294901760
        %2217 = vmatpush1.msra.mxu0 %v2216
        %2218 = vmatprep.subr.mxu0 0.0
        %v2219 = vand.u32 %v2130, 4294901760
        %2220 = vmatpush1.msra.mxu0 %v2219
        %2221 = vmatprep.subr.mxu0 0.0
        %v2222 = vand.u32 %v2131, 4294901760
        %2223 = vmatpush1.msra.mxu0 %v2222
        %2224 = vmatprep.subr.mxu0 0.0
        %v2225 = vand.u32 %v2132, 4294901760
        %2226 = vmatpush1.msra.mxu0 %v2225
        %2227 = vmatprep.subr.mxu0 0.0
        %v2228 = vand.u32 %v2133, 4294901760
        %2229 = vmatpush1.msra.mxu0 %v2228
        %2230 = vmatprep.subr.mxu0 0.0
        %v2231 = vand.u32 %v2134, 4294901760
        %2232 = vmatpush1.msra.mxu0 %v2231
        %2233 = vmatprep.subr.mxu0 0.0
        %v2234 = vand.u32 %v2135, 4294901760
        %2235 = vmatpush1.msra.mxu0 %v2234
        %2236 = vmatprep.subr.mxu0 0.0
        %v2237 = vand.u32 %v2136, 4294901760
        %2238 = vmatpush1.msra.mxu0 %v2237
        %2239 = vmatprep.subr.mxu0 0.0
        %v2240 = vand.u32 %v2137, 4294901760
        %2241 = vmatpush1.msra.mxu0 %v2240
        %2242 = vmatprep.subr.mxu0 0.0
        %v2243 = vand.u32 %v2138, 4294901760
        %2244 = vmatpush1.msra.mxu0 %v2243
        %2245 = vmatprep.subr.mxu0 0.0
        %v2246 = vand.u32 %v2139, 4294901760
        %2247 = vmatpush1.msra.mxu0 %v2246
        %2248 = vmatprep.subr.mxu0 0.0
        %v2249 = vand.u32 %v2140, 4294901760
        %2250 = vmatpush1.msra.mxu0 %v2249
        %2251 = vmatprep.subr.mxu0 0.0
        %v2252 = vand.u32 %v2141, 4294901760
        %2253 = vmatpush1.msra.mxu0 %v2252
        %2254 = vmatprep.subr.mxu0 0.0
        %v2255 = vand.u32 %v2142, 4294901760
        %2256 = vmatpush1.msra.mxu0 %v2255
        %2257 = vmatprep.subr.mxu0 0.0
        %v2258 = vand.u32 %v2143, 4294901760
        %2259 = vmatpush1.msra.mxu0 %v2258
        %2260 = vmatprep.subr.mxu0 0.0
        %v2261 = vand.u32 %v2144, 4294901760
        %2262 = vmatpush1.msra.mxu0 %v2261
        %2263 = vmatprep.subr.mxu0 0.0
        %v2264 = vand.u32 %v2145, 4294901760
        %2265 = vmatpush1.msra.mxu0 %v2264
        %2266 = vmatprep.subr.mxu0 0.0
        %v2267 = vand.u32 %v2146, 4294901760
        %2268 = vmatpush1.msra.mxu0 %v2267
        %2269 = vmatprep.subr.mxu0 0.0
        %v2270 = vand.u32 %v2147, 4294901760
        %2271 = vmatpush1.msra.mxu0 %v2270
        %2272 = vmatprep.subr.mxu0 0.0
        %v2273 = vand.u32 %v2148, 4294901760
        %2274 = vmatpush1.msra.mxu0 %v2273
        %2275 = vmatprep.subr.mxu0 0.0
        %v2276 = vand.u32 %v2149, 4294901760
        %2277 = vmatpush1.msra.mxu0 %v2276
        %2278 = vmatprep.subr.mxu0 0.0
        %v2279 = vand.u32 %v2150, 4294901760
        %2280 = vmatpush1.msra.mxu0 %v2279
        %v2281 = vand.u32 %v2116, 4294901760
        %v2282 = vsub.f32 %v2116, %v2281
        %v2283 = vand.u32 %v2282, 4294901760
        %v2284 = vsub.f32 %v2282, %v2283
        %v2285 = vand.u32 %v2284, 4294901760
        %2286 = vmatprep.mubr.f32.mxu0 %v2285
        %v2287 = vand.u32 %v2115, 4294901760
        %v2288 = vsub.f32 %v2115, %v2287
        %v2289 = vand.u32 %v2288, 4294901760
        %v2290 = vsub.f32 %v2288, %v2289
        %v2291 = vand.u32 %v2290, 4294901760
        %2292 = vmatmul.mubr.f32.gmra.mrb[0].mxu0 %v2291
        %v2293 = vpop.f32.mrb[0].mxu0
        %v2294 = vadd.f32 %v2184, %v2293
        %v2295 = vpop.f32.mrb[0].mxu0
        %2296 = vdwg.mxu0
        %2297 = vmatprep.subr.mxu0 0.0
        %v2298 = vand.u32 %v2119, 4294901760
        %v2299 = vsub.f32 %v2119, %v2298
        %v2300 = vand.u32 %v2299, 4294901760
        %v2301 = vsub.f32 %v2299, %v2300
        %v2302 = vand.u32 %v2301, 4294901760
        %2303 = vmatpush1.msra.mxu0 %v2302
        %2304 = vmatprep.subr.mxu0 0.0
        %v2305 = vand.u32 %v2120, 4294901760
        %v2306 = vsub.f32 %v2120, %v2305
        %v2307 = vand.u32 %v2306, 4294901760
        %v2308 = vsub.f32 %v2306, %v2307
        %v2309 = vand.u32 %v2308, 4294901760
        %2310 = vmatpush1.msra.mxu0 %v2309
        %2311 = vmatprep.subr.mxu0 0.0
        %v2312 = vand.u32 %v2121, 4294901760
        %v2313 = vsub.f32 %v2121, %v2312
        %v2314 = vand.u32 %v2313, 4294901760
        %v2315 = vsub.f32 %v2313, %v2314
        %v2316 = vand.u32 %v2315, 4294901760
        %2317 = vmatpush1.msra.mxu0 %v2316
        %2318 = vmatprep.subr.mxu0 0.0
        %v2319 = vand.u32 %v2122, 4294901760
        %v2320 = vsub.f32 %v2122, %v2319
        %v2321 = vand.u32 %v2320, 4294901760
        %v2322 = vsub.f32 %v2320, %v2321
        %v2323 = vand.u32 %v2322, 4294901760
        %2324 = vmatpush1.msra.mxu0 %v2323
        %2325 = vmatprep.subr.mxu0 0.0
        %v2326 = vand.u32 %v2123, 4294901760
        %v2327 = vsub.f32 %v2123, %v2326
        %v2328 = vand.u32 %v2327, 4294901760
        %v2329 = vsub.f32 %v2327, %v2328
        %v2330 = vand.u32 %v2329, 4294901760
        %2331 = vmatpush1.msra.mxu0 %v2330
        %2332 = vmatprep.subr.mxu0 0.0
        %v2333 = vand.u32 %v2124, 4294901760
        %v2334 = vsub.f32 %v2124, %v2333
        %v2335 = vand.u32 %v2334, 4294901760
        %v2336 = vsub.f32 %v2334, %v2335
        %v2337 = vand.u32 %v2336, 4294901760
        %2338 = vmatpush1.msra.mxu0 %v2337
        %2339 = vmatprep.subr.mxu0 0.0
        %v2340 = vand.u32 %v2125, 4294901760
        %v2341 = vsub.f32 %v2125, %v2340
        %v2342 = vand.u32 %v2341, 4294901760
        %v2343 = vsub.f32 %v2341, %v2342
        %v2344 = vand.u32 %v2343, 4294901760
        %2345 = vmatpush1.msra.mxu0 %v2344
        %2346 = vmatprep.subr.mxu0 0.0
        %v2347 = vand.u32 %v2126, 4294901760
        %v2348 = vsub.f32 %v2126, %v2347
        %v2349 = vand.u32 %v2348, 4294901760
        %v2350 = vsub.f32 %v2348, %v2349
        %v2351 = vand.u32 %v2350, 4294901760
        %2352 = vmatpush1.msra.mxu0 %v2351
        %2353 = vmatprep.subr.mxu0 0.0
        %v2354 = vand.u32 %v2127, 4294901760
        %v2355 = vsub.f32 %v2127, %v2354
        %v2356 = vand.u32 %v2355, 4294901760
        %v2357 = vsub.f32 %v2355, %v2356
        %v2358 = vand.u32 %v2357, 4294901760
        %2359 = vmatpush1.msra.mxu0 %v2358
        %2360 = vmatprep.subr.mxu0 0.0
        %v2361 = vand.u32 %v2128, 4294901760
        %v2362 = vsub.f32 %v2128, %v2361
        %v2363 = vand.u32 %v2362, 4294901760
        %v2364 = vsub.f32 %v2362, %v2363
        %v2365 = vand.u32 %v2364, 4294901760
        %2366 = vmatpush1.msra.mxu0 %v2365
        %2367 = vmatprep.subr.mxu0 0.0
        %v2368 = vand.u32 %v2129, 4294901760
        %v2369 = vsub.f32 %v2129, %v2368
        %v2370 = vand.u32 %v2369, 4294901760
        %v2371 = vsub.f32 %v2369, %v2370
        %v2372 = vand.u32 %v2371, 4294901760
        %2373 = vmatpush1.msra.mxu0 %v2372
        %2374 = vmatprep.subr.mxu0 0.0
        %v2375 = vand.u32 %v2130, 4294901760
        %v2376 = vsub.f32 %v2130, %v2375
        %v2377 = vand.u32 %v2376, 4294901760
        %v2378 = vsub.f32 %v2376, %v2377
        %v2379 = vand.u32 %v2378, 4294901760
        %2380 = vmatpush1.msra.mxu0 %v2379
        %2381 = vmatprep.subr.mxu0 0.0
        %v2382 = vand.u32 %v2131, 4294901760
        %v2383 = vsub.f32 %v2131, %v2382
        %v2384 = vand.u32 %v2383, 4294901760
        %v2385 = vsub.f32 %v2383, %v2384
        %v2386 = vand.u32 %v2385, 4294901760
        %2387 = vmatpush1.msra.mxu0 %v2386
        %2388 = vmatprep.subr.mxu0 0.0
        %v2389 = vand.u32 %v2132, 4294901760
        %v2390 = vsub.f32 %v2132, %v2389
        %v2391 = vand.u32 %v2390, 4294901760
        %v2392 = vsub.f32 %v2390, %v2391
        %v2393 = vand.u32 %v2392, 4294901760
        %2394 = vmatpush1.msra.mxu0 %v2393
        %2395 = vmatprep.subr.mxu0 0.0
        %v2396 = vand.u32 %v2133, 4294901760
        %v2397 = vsub.f32 %v2133, %v2396
        %v2398 = vand.u32 %v2397, 4294901760
        %v2399 = vsub.f32 %v2397, %v2398
        %v2400 = vand.u32 %v2399, 4294901760
        %2401 = vmatpush1.msra.mxu0 %v2400
        %2402 = vmatprep.subr.mxu0 0.0
        %v2403 = vand.u32 %v2134, 4294901760
        %v2404 = vsub.f32 %v2134, %v2403
        %v2405 = vand.u32 %v2404, 4294901760
        %v2406 = vsub.f32 %v2404, %v2405
        %v2407 = vand.u32 %v2406, 4294901760
        %2408 = vmatpush1.msra.mxu0 %v2407
        %2409 = vmatprep.subr.mxu0 0.0
        %v2410 = vand.u32 %v2135, 4294901760
        %v2411 = vsub.f32 %v2135, %v2410
        %v2412 = vand.u32 %v2411, 4294901760
        %v2413 = vsub.f32 %v2411, %v2412
        %v2414 = vand.u32 %v2413, 4294901760
        %2415 = vmatpush1.msra.mxu0 %v2414
        %2416 = vmatprep.subr.mxu0 0.0
        %v2417 = vand.u32 %v2136, 4294901760
        %v2418 = vsub.f32 %v2136, %v2417
        %v2419 = vand.u32 %v2418, 4294901760
        %v2420 = vsub.f32 %v2418, %v2419
        %v2421 = vand.u32 %v2420, 4294901760
        %2422 = vmatpush1.msra.mxu0 %v2421
        %2423 = vmatprep.subr.mxu0 0.0
        %v2424 = vand.u32 %v2137, 4294901760
        %v2425 = vsub.f32 %v2137, %v2424
        %v2426 = vand.u32 %v2425, 4294901760
        %v2427 = vsub.f32 %v2425, %v2426
        %v2428 = vand.u32 %v2427, 4294901760
        %2429 = vmatpush1.msra.mxu0 %v2428
        %2430 = vmatprep.subr.mxu0 0.0
        %v2431 = vand.u32 %v2138, 4294901760
        %v2432 = vsub.f32 %v2138, %v2431
        %v2433 = vand.u32 %v2432, 4294901760
        %v2434 = vsub.f32 %v2432, %v2433
        %v2435 = vand.u32 %v2434, 4294901760
        %2436 = vmatpush1.msra.mxu0 %v2435
        %2437 = vmatprep.subr.mxu0 0.0
        %v2438 = vand.u32 %v2139, 4294901760
        %v2439 = vsub.f32 %v2139, %v2438
        %v2440 = vand.u32 %v2439, 4294901760
        %v2441 = vsub.f32 %v2439, %v2440
        %v2442 = vand.u32 %v2441, 4294901760
        %2443 = vmatpush1.msra.mxu0 %v2442
        %2444 = vmatprep.subr.mxu0 0.0
        %v2445 = vand.u32 %v2140, 4294901760
        %v2446 = vsub.f32 %v2140, %v2445
        %v2447 = vand.u32 %v2446, 4294901760
        %v2448 = vsub.f32 %v2446, %v2447
        %v2449 = vand.u32 %v2448, 4294901760
        %2450 = vmatpush1.msra.mxu0 %v2449
        %2451 = vmatprep.subr.mxu0 0.0
        %v2452 = vand.u32 %v2141, 4294901760
        %v2453 = vsub.f32 %v2141, %v2452
        %v2454 = vand.u32 %v2453, 4294901760
        %v2455 = vsub.f32 %v2453, %v2454
        %v2456 = vand.u32 %v2455, 4294901760
        %2457 = vmatpush1.msra.mxu0 %v2456
        %2458 = vmatprep.subr.mxu0 0.0
        %v2459 = vand.u32 %v2142, 4294901760
        %v2460 = vsub.f32 %v2142, %v2459
        %v2461 = vand.u32 %v2460, 4294901760
        %v2462 = vsub.f32 %v2460, %v2461
        %v2463 = vand.u32 %v2462, 4294901760
        %2464 = vmatpush1.msra.mxu0 %v2463
        %2465 = vmatprep.subr.mxu0 0.0
        %v2466 = vand.u32 %v2143, 4294901760
        %v2467 = vsub.f32 %v2143, %v2466
        %v2468 = vand.u32 %v2467, 4294901760
        %v2469 = vsub.f32 %v2467, %v2468
        %v2470 = vand.u32 %v2469, 4294901760
        %2471 = vmatpush1.msra.mxu0 %v2470
        %2472 = vmatprep.subr.mxu0 0.0
        %v2473 = vand.u32 %v2144, 4294901760
        %v2474 = vsub.f32 %v2144, %v2473
        %v2475 = vand.u32 %v2474, 4294901760
        %v2476 = vsub.f32 %v2474, %v2475
        %v2477 = vand.u32 %v2476, 4294901760
        %2478 = vmatpush1.msra.mxu0 %v2477
        %2479 = vmatprep.subr.mxu0 0.0
        %v2480 = vand.u32 %v2145, 4294901760
        %v2481 = vsub.f32 %v2145, %v2480
        %v2482 = vand.u32 %v2481, 4294901760
        %v2483 = vsub.f32 %v2481, %v2482
        %v2484 = vand.u32 %v2483, 4294901760
        %2485 = vmatpush1.msra.mxu0 %v2484
        %2486 = vmatprep.subr.mxu0 0.0
        %v2487 = vand.u32 %v2146, 4294901760
        %v2488 = vsub.f32 %v2146, %v2487
        %v2489 = vand.u32 %v2488, 4294901760
        %v2490 = vsub.f32 %v2488, %v2489
        %v2491 = vand.u32 %v2490, 4294901760
        %2492 = vmatpush1.msra.mxu0 %v2491
        %2493 = vmatprep.subr.mxu0 0.0
        %v2494 = vand.u32 %v2147, 4294901760
        %v2495 = vsub.f32 %v2147, %v2494
        %v2496 = vand.u32 %v2495, 4294901760
        %v2497 = vsub.f32 %v2495, %v2496
        %v2498 = vand.u32 %v2497, 4294901760
        %2499 = vmatpush1.msra.mxu0 %v2498
        %2500 = vmatprep.subr.mxu0 0.0
        %v2501 = vand.u32 %v2148, 4294901760
        %v2502 = vsub.f32 %v2148, %v2501
        %v2503 = vand.u32 %v2502, 4294901760
        %v2504 = vsub.f32 %v2502, %v2503
        %v2505 = vand.u32 %v2504, 4294901760
        %2506 = vmatpush1.msra.mxu0 %v2505
        %2507 = vmatprep.subr.mxu0 0.0
        %v2508 = vand.u32 %v2149, 4294901760
        %v2509 = vsub.f32 %v2149, %v2508
        %v2510 = vand.u32 %v2509, 4294901760
        %v2511 = vsub.f32 %v2509, %v2510
        %v2512 = vand.u32 %v2511, 4294901760
        %2513 = vmatpush1.msra.mxu0 %v2512
        %2514 = vmatprep.subr.mxu0 0.0
        %v2515 = vand.u32 %v2150, 4294901760
        %v2516 = vsub.f32 %v2150, %v2515
        %v2517 = vand.u32 %v2516, 4294901760
        %v2518 = vsub.f32 %v2516, %v2517
        %v2519 = vand.u32 %v2518, 4294901760
        %2520 = vmatpush1.msra.mxu0 %v2519
        %v2521 = vand.u32 %v2116, 4294901760
        %2522 = vmatprep.mubr.f32.mxu0 %v2521
        %v2523 = vand.u32 %v2115, 4294901760
        %2524 = vmatmul.mubr.f32.gmra.mrb[0].mxu0 %v2523
        %v2525 = vpop.f32.mrb[0].mxu0
        %v2526 = vadd.f32 %v2294, %v2525
        %v2527 = vpop.f32.mrb[0].mxu0
        %2528 = vdwg.mxu0
        %2529 = vmatprep.subr.mxu0 0.0
        %v2530 = vand.u32 %v2119, 4294901760
        %v2531 = vsub.f32 %v2119, %v2530
        %2532 = vmatpush1.msra.mxu0 %v2531
        %2533 = vmatprep.subr.mxu0 0.0
        %v2534 = vand.u32 %v2120, 4294901760
        %v2535 = vsub.f32 %v2120, %v2534
        %2536 = vmatpush1.msra.mxu0 %v2535
        %2537 = vmatprep.subr.mxu0 0.0
        %v2538 = vand.u32 %v2121, 4294901760
        %v2539 = vsub.f32 %v2121, %v2538
        %2540 = vmatpush1.msra.mxu0 %v2539
        %2541 = vmatprep.subr.mxu0 0.0
        %v2542 = vand.u32 %v2122, 4294901760
        %v2543 = vsub.f32 %v2122, %v2542
        %2544 = vmatpush1.msra.mxu0 %v2543
        %2545 = vmatprep.subr.mxu0 0.0
        %v2546 = vand.u32 %v2123, 4294901760
        %v2547 = vsub.f32 %v2123, %v2546
        %2548 = vmatpush1.msra.mxu0 %v2547
        %2549 = vmatprep.subr.mxu0 0.0
        %v2550 = vand.u32 %v2124, 4294901760
        %v2551 = vsub.f32 %v2124, %v2550
        %2552 = vmatpush1.msra.mxu0 %v2551
        %2553 = vmatprep.subr.mxu0 0.0
        %v2554 = vand.u32 %v2125, 4294901760
        %v2555 = vsub.f32 %v2125, %v2554
        %2556 = vmatpush1.msra.mxu0 %v2555
        %2557 = vmatprep.subr.mxu0 0.0
        %v2558 = vand.u32 %v2126, 4294901760
        %v2559 = vsub.f32 %v2126, %v2558
        %2560 = vmatpush1.msra.mxu0 %v2559
        %2561 = vmatprep.subr.mxu0 0.0
        %v2562 = vand.u32 %v2127, 4294901760
        %v2563 = vsub.f32 %v2127, %v2562
        %2564 = vmatpush1.msra.mxu0 %v2563
        %2565 = vmatprep.subr.mxu0 0.0
        %v2566 = vand.u32 %v2128, 4294901760
        %v2567 = vsub.f32 %v2128, %v2566
        %2568 = vmatpush1.msra.mxu0 %v2567
        %2569 = vmatprep.subr.mxu0 0.0
        %v2570 = vand.u32 %v2129, 4294901760
        %v2571 = vsub.f32 %v2129, %v2570
        %2572 = vmatpush1.msra.mxu0 %v2571
        %2573 = vmatprep.subr.mxu0 0.0
        %v2574 = vand.u32 %v2130, 4294901760
        %v2575 = vsub.f32 %v2130, %v2574
        %2576 = vmatpush1.msra.mxu0 %v2575
        %2577 = vmatprep.subr.mxu0 0.0
        %v2578 = vand.u32 %v2131, 4294901760
        %v2579 = vsub.f32 %v2131, %v2578
        %2580 = vmatpush1.msra.mxu0 %v2579
        %2581 = vmatprep.subr.mxu0 0.0
        %v2582 = vand.u32 %v2132, 4294901760
        %v2583 = vsub.f32 %v2132, %v2582
        %2584 = vmatpush1.msra.mxu0 %v2583
        %2585 = vmatprep.subr.mxu0 0.0
        %v2586 = vand.u32 %v2133, 4294901760
        %v2587 = vsub.f32 %v2133, %v2586
        %2588 = vmatpush1.msra.mxu0 %v2587
        %2589 = vmatprep.subr.mxu0 0.0
        %v2590 = vand.u32 %v2134, 4294901760
        %v2591 = vsub.f32 %v2134, %v2590
        %2592 = vmatpush1.msra.mxu0 %v2591
        %2593 = vmatprep.subr.mxu0 0.0
        %v2594 = vand.u32 %v2135, 4294901760
        %v2595 = vsub.f32 %v2135, %v2594
        %2596 = vmatpush1.msra.mxu0 %v2595
        %2597 = vmatprep.subr.mxu0 0.0
        %v2598 = vand.u32 %v2136, 4294901760
        %v2599 = vsub.f32 %v2136, %v2598
        %2600 = vmatpush1.msra.mxu0 %v2599
        %2601 = vmatprep.subr.mxu0 0.0
        %v2602 = vand.u32 %v2137, 4294901760
        %v2603 = vsub.f32 %v2137, %v2602
        %2604 = vmatpush1.msra.mxu0 %v2603
        %2605 = vmatprep.subr.mxu0 0.0
        %v2606 = vand.u32 %v2138, 4294901760
        %v2607 = vsub.f32 %v2138, %v2606
        %2608 = vmatpush1.msra.mxu0 %v2607
        %2609 = vmatprep.subr.mxu0 0.0
        %v2610 = vand.u32 %v2139, 4294901760
        %v2611 = vsub.f32 %v2139, %v2610
        %2612 = vmatpush1.msra.mxu0 %v2611
        %2613 = vmatprep.subr.mxu0 0.0
        %v2614 = vand.u32 %v2140, 4294901760
        %v2615 = vsub.f32 %v2140, %v2614
        %2616 = vmatpush1.msra.mxu0 %v2615
        %2617 = vmatprep.subr.mxu0 0.0
        %v2618 = vand.u32 %v2141, 4294901760
        %v2619 = vsub.f32 %v2141, %v2618
        %2620 = vmatpush1.msra.mxu0 %v2619
        %2621 = vmatprep.subr.mxu0 0.0
        %v2622 = vand.u32 %v2142, 4294901760
        %v2623 = vsub.f32 %v2142, %v2622
        %2624 = vmatpush1.msra.mxu0 %v2623
        %2625 = vmatprep.subr.mxu0 0.0
        %v2626 = vand.u32 %v2143, 4294901760
        %v2627 = vsub.f32 %v2143, %v2626
        %2628 = vmatpush1.msra.mxu0 %v2627
        %2629 = vmatprep.subr.mxu0 0.0
        %v2630 = vand.u32 %v2144, 4294901760
        %v2631 = vsub.f32 %v2144, %v2630
        %2632 = vmatpush1.msra.mxu0 %v2631
        %2633 = vmatprep.subr.mxu0 0.0
        %v2634 = vand.u32 %v2145, 4294901760
        %v2635 = vsub.f32 %v2145, %v2634
        %2636 = vmatpush1.msra.mxu0 %v2635
        %2637 = vmatprep.subr.mxu0 0.0
        %v2638 = vand.u32 %v2146, 4294901760
        %v2639 = vsub.f32 %v2146, %v2638
        %2640 = vmatpush1.msra.mxu0 %v2639
        %2641 = vmatprep.subr.mxu0 0.0
        %v2642 = vand.u32 %v2147, 4294901760
        %v2643 = vsub.f32 %v2147, %v2642
        %2644 = vmatpush1.msra.mxu0 %v2643
        %2645 = vmatprep.subr.mxu0 0.0
        %v2646 = vand.u32 %v2148, 4294901760
        %v2647 = vsub.f32 %v2148, %v2646
        %2648 = vmatpush1.msra.mxu0 %v2647
        %2649 = vmatprep.subr.mxu0 0.0
        %v2650 = vand.u32 %v2149, 4294901760
        %v2651 = vsub.f32 %v2149, %v2650
        %2652 = vmatpush1.msra.mxu0 %v2651
        %2653 = vmatprep.subr.mxu0 0.0
        %v2654 = vand.u32 %v2150, 4294901760
        %v2655 = vsub.f32 %v2150, %v2654
        %2656 = vmatpush1.msra.mxu0 %v2655
        %v2657 = vand.u32 %v2116, 4294901760
        %v2658 = vsub.f32 %v2116, %v2657
        %2659 = vmatprep.mubr.f32.mxu0 %v2658
        %v2660 = vand.u32 %v2115, 4294901760
        %v2661 = vsub.f32 %v2115, %v2660
        %2662 = vmatmul.mubr.f32.gmra.mrb[0].mxu0 %v2661
        %v2663 = vpop.f32.mrb[0].mxu0
        %v2664 = vadd.f32 %v2526, %v2663
        %v2665 = vpop.f32.mrb[0].mxu0
        %2666 = vdwg.mxu0
        %2667 = vmatprep.subr.mxu0 0.0
        %v2668 = vand.u32 %v2119, 4294901760
        %2669 = vmatpush1.msra.mxu0 %v2668
        %2670 = vmatprep.subr.mxu0 0.0
        %v2671 = vand.u32 %v2120, 4294901760
        %2672 = vmatpush1.msra.mxu0 %v2671
        %2673 = vmatprep.subr.mxu0 0.0
        %v2674 = vand.u32 %v2121, 4294901760
        %2675 = vmatpush1.msra.mxu0 %v2674
        %2676 = vmatprep.subr.mxu0 0.0
        %v2677 = vand.u32 %v2122, 4294901760
        %2678 = vmatpush1.msra.mxu0 %v2677
        %2679 = vmatprep.subr.mxu0 0.0
        %v2680 = vand.u32 %v2123, 4294901760
        %2681 = vmatpush1.msra.mxu0 %v2680
        %2682 = vmatprep.subr.mxu0 0.0
        %v2683 = vand.u32 %v2124, 4294901760
        %2684 = vmatpush1.msra.mxu0 %v2683
        %2685 = vmatprep.subr.mxu0 0.0
        %v2686 = vand.u32 %v2125, 4294901760
        %2687 = vmatpush1.msra.mxu0 %v2686
        %2688 = vmatprep.subr.mxu0 0.0
        %v2689 = vand.u32 %v2126, 4294901760
        %2690 = vmatpush1.msra.mxu0 %v2689
        %2691 = vmatprep.subr.mxu0 0.0
        %v2692 = vand.u32 %v2127, 4294901760
        %2693 = vmatpush1.msra.mxu0 %v2692
        %2694 = vmatprep.subr.mxu0 0.0
        %v2695 = vand.u32 %v2128, 4294901760
        %2696 = vmatpush1.msra.mxu0 %v2695
        %2697 = vmatprep.subr.mxu0 0.0
        %v2698 = vand.u32 %v2129, 4294901760
        %2699 = vmatpush1.msra.mxu0 %v2698
        %2700 = vmatprep.subr.mxu0 0.0
        %v2701 = vand.u32 %v2130, 4294901760
        %2702 = vmatpush1.msra.mxu0 %v2701
        %2703 = vmatprep.subr.mxu0 0.0
        %v2704 = vand.u32 %v2131, 4294901760
        %2705 = vmatpush1.msra.mxu0 %v2704
        %2706 = vmatprep.subr.mxu0 0.0
        %v2707 = vand.u32 %v2132, 4294901760
        %2708 = vmatpush1.msra.mxu0 %v2707
        %2709 = vmatprep.subr.mxu0 0.0
        %v2710 = vand.u32 %v2133, 4294901760
        %2711 = vmatpush1.msra.mxu0 %v2710
        %2712 = vmatprep.subr.mxu0 0.0
        %v2713 = vand.u32 %v2134, 4294901760
        %2714 = vmatpush1.msra.mxu0 %v2713
        %2715 = vmatprep.subr.mxu0 0.0
        %v2716 = vand.u32 %v2135, 4294901760
        %2717 = vmatpush1.msra.mxu0 %v2716
        %2718 = vmatprep.subr.mxu0 0.0
        %v2719 = vand.u32 %v2136, 4294901760
        %2720 = vmatpush1.msra.mxu0 %v2719
        %2721 = vmatprep.subr.mxu0 0.0
        %v2722 = vand.u32 %v2137, 4294901760
        %2723 = vmatpush1.msra.mxu0 %v2722
        %2724 = vmatprep.subr.mxu0 0.0
        %v2725 = vand.u32 %v2138, 4294901760
        %2726 = vmatpush1.msra.mxu0 %v2725
        %2727 = vmatprep.subr.mxu0 0.0
        %v2728 = vand.u32 %v2139, 4294901760
        %2729 = vmatpush1.msra.mxu0 %v2728
        %2730 = vmatprep.subr.mxu0 0.0
        %v2731 = vand.u32 %v2140, 4294901760
        %2732 = vmatpush1.msra.mxu0 %v2731
        %2733 = vmatprep.subr.mxu0 0.0
        %v2734 = vand.u32 %v2141, 4294901760
        %2735 = vmatpush1.msra.mxu0 %v2734
        %2736 = vmatprep.subr.mxu0 0.0
        %v2737 = vand.u32 %v2142, 4294901760
        %2738 = vmatpush1.msra.mxu0 %v2737
        %2739 = vmatprep.subr.mxu0 0.0
        %v2740 = vand.u32 %v2143, 4294901760
        %2741 = vmatpush1.msra.mxu0 %v2740
        %2742 = vmatprep.subr.mxu0 0.0
        %v2743 = vand.u32 %v2144, 4294901760
        %2744 = vmatpush1.msra.mxu0 %v2743
        %2745 = vmatprep.subr.mxu0 0.0
        %v2746 = vand.u32 %v2145, 4294901760
        %2747 = vmatpush1.msra.mxu0 %v2746
        %2748 = vmatprep.subr.mxu0 0.0
        %v2749 = vand.u32 %v2146, 4294901760
        %2750 = vmatpush1.msra.mxu0 %v2749
        %2751 = vmatprep.subr.mxu0 0.0
        %v2752 = vand.u32 %v2147, 4294901760
        %2753 = vmatpush1.msra.mxu0 %v2752
        %2754 = vmatprep.subr.mxu0 0.0
        %v2755 = vand.u32 %v2148, 4294901760
        %2756 = vmatpush1.msra.mxu0 %v2755
        %2757 = vmatprep.subr.mxu0 0.0
        %v2758 = vand.u32 %v2149, 4294901760
        %2759 = vmatpush1.msra.mxu0 %v2758
        %2760 = vmatprep.subr.mxu0 0.0
        %v2761 = vand.u32 %v2150, 4294901760
        %2762 = vmatpush1.msra.mxu0 %v2761
        %v2763 = vand.u32 %v2116, 4294901760
        %v2764 = vsub.f32 %v2116, %v2763
        %v2765 = vand.u32 %v2764, 4294901760
        %2766 = vmatprep.mubr.f32.mxu0 %v2765
        %v2767 = vand.u32 %v2115, 4294901760
        %v2768 = vsub.f32 %v2115, %v2767
        %v2769 = vand.u32 %v2768, 4294901760
        %2770 = vmatmul.mubr.f32.gmra.mrb[0].mxu0 %v2769
        %v2771 = vpop.f32.mrb[0].mxu0
        %v2772 = vadd.f32 %v2664, %v2771
        %v2773 = vpop.f32.mrb[0].mxu0
        %2774 = vdwg.mxu0
        %2775 = vmatprep.subr.mxu0 0.0
        %v2776 = vand.u32 %v2119, 4294901760
        %v2777 = vsub.f32 %v2119, %v2776
        %v2778 = vand.u32 %v2777, 4294901760
        %2779 = vmatpush1.msra.mxu0 %v2778
        %2780 = vmatprep.subr.mxu0 0.0
        %v2781 = vand.u32 %v2120, 4294901760
        %v2782 = vsub.f32 %v2120, %v2781
        %v2783 = vand.u32 %v2782, 4294901760
        %2784 = vmatpush1.msra.mxu0 %v2783
        %2785 = vmatprep.subr.mxu0 0.0
        %v2786 = vand.u32 %v2121, 4294901760
        %v2787 = vsub.f32 %v2121, %v2786
        %v2788 = vand.u32 %v2787, 4294901760
        %2789 = vmatpush1.msra.mxu0 %v2788
        %2790 = vmatprep.subr.mxu0 0.0
        %v2791 = vand.u32 %v2122, 4294901760
        %v2792 = vsub.f32 %v2122, %v2791
        %v2793 = vand.u32 %v2792, 4294901760
        %2794 = vmatpush1.msra.mxu0 %v2793
        %2795 = vmatprep.subr.mxu0 0.0
        %v2796 = vand.u32 %v2123, 4294901760
        %v2797 = vsub.f32 %v2123, %v2796
        %v2798 = vand.u32 %v2797, 4294901760
        %2799 = vmatpush1.msra.mxu0 %v2798
        %2800 = vmatprep.subr.mxu0 0.0
        %v2801 = vand.u32 %v2124, 4294901760
        %v2802 = vsub.f32 %v2124, %v2801
        %v2803 = vand.u32 %v2802, 4294901760
        %2804 = vmatpush1.msra.mxu0 %v2803
        %2805 = vmatprep.subr.mxu0 0.0
        %v2806 = vand.u32 %v2125, 4294901760
        %v2807 = vsub.f32 %v2125, %v2806
        %v2808 = vand.u32 %v2807, 4294901760
        %2809 = vmatpush1.msra.mxu0 %v2808
        %2810 = vmatprep.subr.mxu0 0.0
        %v2811 = vand.u32 %v2126, 4294901760
        %v2812 = vsub.f32 %v2126, %v2811
        %v2813 = vand.u32 %v2812, 4294901760
        %2814 = vmatpush1.msra.mxu0 %v2813
        %2815 = vmatprep.subr.mxu0 0.0
        %v2816 = vand.u32 %v2127, 4294901760
        %v2817 = vsub.f32 %v2127, %v2816
        %v2818 = vand.u32 %v2817, 4294901760
        %2819 = vmatpush1.msra.mxu0 %v2818
        %2820 = vmatprep.subr.mxu0 0.0
        %v2821 = vand.u32 %v2128, 4294901760
        %v2822 = vsub.f32 %v2128, %v2821
        %v2823 = vand.u32 %v2822, 4294901760
        %2824 = vmatpush1.msra.mxu0 %v2823
        %2825 = vmatprep.subr.mxu0 0.0
        %v2826 = vand.u32 %v2129, 4294901760
        %v2827 = vsub.f32 %v2129, %v2826
        %v2828 = vand.u32 %v2827, 4294901760
        %2829 = vmatpush1.msra.mxu0 %v2828
        %2830 = vmatprep.subr.mxu0 0.0
        %v2831 = vand.u32 %v2130, 4294901760
        %v2832 = vsub.f32 %v2130, %v2831
        %v2833 = vand.u32 %v2832, 4294901760
        %2834 = vmatpush1.msra.mxu0 %v2833
        %2835 = vmatprep.subr.mxu0 0.0
        %v2836 = vand.u32 %v2131, 4294901760
        %v2837 = vsub.f32 %v2131, %v2836
        %v2838 = vand.u32 %v2837, 4294901760
        %2839 = vmatpush1.msra.mxu0 %v2838
        %2840 = vmatprep.subr.mxu0 0.0
        %v2841 = vand.u32 %v2132, 4294901760
        %v2842 = vsub.f32 %v2132, %v2841
        %v2843 = vand.u32 %v2842, 4294901760
        %2844 = vmatpush1.msra.mxu0 %v2843
        %2845 = vmatprep.subr.mxu0 0.0
        %v2846 = vand.u32 %v2133, 4294901760
        %v2847 = vsub.f32 %v2133, %v2846
        %v2848 = vand.u32 %v2847, 4294901760
        %2849 = vmatpush1.msra.mxu0 %v2848
        %2850 = vmatprep.subr.mxu0 0.0
        %v2851 = vand.u32 %v2134, 4294901760
        %v2852 = vsub.f32 %v2134, %v2851
        %v2853 = vand.u32 %v2852, 4294901760
        %2854 = vmatpush1.msra.mxu0 %v2853
        %2855 = vmatprep.subr.mxu0 0.0
        %v2856 = vand.u32 %v2135, 4294901760
        %v2857 = vsub.f32 %v2135, %v2856
        %v2858 = vand.u32 %v2857, 4294901760
        %2859 = vmatpush1.msra.mxu0 %v2858
        %2860 = vmatprep.subr.mxu0 0.0
        %v2861 = vand.u32 %v2136, 4294901760
        %v2862 = vsub.f32 %v2136, %v2861
        %v2863 = vand.u32 %v2862, 4294901760
        %2864 = vmatpush1.msra.mxu0 %v2863
        %2865 = vmatprep.subr.mxu0 0.0
        %v2866 = vand.u32 %v2137, 4294901760
        %v2867 = vsub.f32 %v2137, %v2866
        %v2868 = vand.u32 %v2867, 4294901760
        %2869 = vmatpush1.msra.mxu0 %v2868
        %2870 = vmatprep.subr.mxu0 0.0
        %v2871 = vand.u32 %v2138, 4294901760
        %v2872 = vsub.f32 %v2138, %v2871
        %v2873 = vand.u32 %v2872, 4294901760
        %2874 = vmatpush1.msra.mxu0 %v2873
        %2875 = vmatprep.subr.mxu0 0.0
        %v2876 = vand.u32 %v2139, 4294901760
        %v2877 = vsub.f32 %v2139, %v2876
        %v2878 = vand.u32 %v2877, 4294901760
        %2879 = vmatpush1.msra.mxu0 %v2878
        %2880 = vmatprep.subr.mxu0 0.0
        %v2881 = vand.u32 %v2140, 4294901760
        %v2882 = vsub.f32 %v2140, %v2881
        %v2883 = vand.u32 %v2882, 4294901760
        %2884 = vmatpush1.msra.mxu0 %v2883
        %2885 = vmatprep.subr.mxu0 0.0
        %v2886 = vand.u32 %v2141, 4294901760
        %v2887 = vsub.f32 %v2141, %v2886
        %v2888 = vand.u32 %v2887, 4294901760
        %2889 = vmatpush1.msra.mxu0 %v2888
        %2890 = vmatprep.subr.mxu0 0.0
        %v2891 = vand.u32 %v2142, 4294901760
        %v2892 = vsub.f32 %v2142, %v2891
        %v2893 = vand.u32 %v2892, 4294901760
        %2894 = vmatpush1.msra.mxu0 %v2893
        %2895 = vmatprep.subr.mxu0 0.0
        %v2896 = vand.u32 %v2143, 4294901760
        %v2897 = vsub.f32 %v2143, %v2896
        %v2898 = vand.u32 %v2897, 4294901760
        %2899 = vmatpush1.msra.mxu0 %v2898
        %2900 = vmatprep.subr.mxu0 0.0
        %v2901 = vand.u32 %v2144, 4294901760
        %v2902 = vsub.f32 %v2144, %v2901
        %v2903 = vand.u32 %v2902, 4294901760
        %2904 = vmatpush1.msra.mxu0 %v2903
        %2905 = vmatprep.subr.mxu0 0.0
        %v2906 = vand.u32 %v2145, 4294901760
        %v2907 = vsub.f32 %v2145, %v2906
        %v2908 = vand.u32 %v2907, 4294901760
        %2909 = vmatpush1.msra.mxu0 %v2908
        %2910 = vmatprep.subr.mxu0 0.0
        %v2911 = vand.u32 %v2146, 4294901760
        %v2912 = vsub.f32 %v2146, %v2911
        %v2913 = vand.u32 %v2912, 4294901760
        %2914 = vmatpush1.msra.mxu0 %v2913
        %2915 = vmatprep.subr.mxu0 0.0
        %v2916 = vand.u32 %v2147, 4294901760
        %v2917 = vsub.f32 %v2147, %v2916
        %v2918 = vand.u32 %v2917, 4294901760
        %2919 = vmatpush1.msra.mxu0 %v2918
        %2920 = vmatprep.subr.mxu0 0.0
        %v2921 = vand.u32 %v2148, 4294901760
        %v2922 = vsub.f32 %v2148, %v2921
        %v2923 = vand.u32 %v2922, 4294901760
        %2924 = vmatpush1.msra.mxu0 %v2923
        %2925 = vmatprep.subr.mxu0 0.0
        %v2926 = vand.u32 %v2149, 4294901760
        %v2927 = vsub.f32 %v2149, %v2926
        %v2928 = vand.u32 %v2927, 4294901760
        %2929 = vmatpush1.msra.mxu0 %v2928
        %2930 = vmatprep.subr.mxu0 0.0
        %v2931 = vand.u32 %v2150, 4294901760
        %v2932 = vsub.f32 %v2150, %v2931
        %v2933 = vand.u32 %v2932, 4294901760
        %2934 = vmatpush1.msra.mxu0 %v2933
        %v2935 = vand.u32 %v2116, 4294901760
        %2936 = vmatprep.mubr.f32.mxu0 %v2935
        %v2937 = vand.u32 %v2115, 4294901760
        %2938 = vmatmul.mubr.f32.gmra.mrb[0].mxu0 %v2937
        %v2939 = vpop.f32.mrb[0].mxu0
        %v2940 = vadd.f32 %v2772, %v2939
        %v2941 = vpop.f32.mrb[0].mxu0
        %2942 = vdwg.mxu0
        %2943 = vmatprep.subr.mxu0 0.0
        %v2944 = vand.u32 %v2119, 4294901760
        %2945 = vmatpush1.msra.mxu0 %v2944
        %2946 = vmatprep.subr.mxu0 0.0
        %v2947 = vand.u32 %v2120, 4294901760
        %2948 = vmatpush1.msra.mxu0 %v2947
        %2949 = vmatprep.subr.mxu0 0.0
        %v2950 = vand.u32 %v2121, 4294901760
        %2951 = vmatpush1.msra.mxu0 %v2950
        %2952 = vmatprep.subr.mxu0 0.0
        %v2953 = vand.u32 %v2122, 4294901760
        %2954 = vmatpush1.msra.mxu0 %v2953
        %2955 = vmatprep.subr.mxu0 0.0
        %v2956 = vand.u32 %v2123, 4294901760
        %2957 = vmatpush1.msra.mxu0 %v2956
        %2958 = vmatprep.subr.mxu0 0.0
        %v2959 = vand.u32 %v2124, 4294901760
        %2960 = vmatpush1.msra.mxu0 %v2959
        %2961 = vmatprep.subr.mxu0 0.0
        %v2962 = vand.u32 %v2125, 4294901760
        %2963 = vmatpush1.msra.mxu0 %v2962
        %2964 = vmatprep.subr.mxu0 0.0
        %v2965 = vand.u32 %v2126, 4294901760
        %2966 = vmatpush1.msra.mxu0 %v2965
        %2967 = vmatprep.subr.mxu0 0.0
        %v2968 = vand.u32 %v2127, 4294901760
        %2969 = vmatpush1.msra.mxu0 %v2968
        %2970 = vmatprep.subr.mxu0 0.0
        %v2971 = vand.u32 %v2128, 4294901760
        %2972 = vmatpush1.msra.mxu0 %v2971
        %2973 = vmatprep.subr.mxu0 0.0
        %v2974 = vand.u32 %v2129, 4294901760
        %2975 = vmatpush1.msra.mxu0 %v2974
        %2976 = vmatprep.subr.mxu0 0.0
        %v2977 = vand.u32 %v2130, 4294901760
        %2978 = vmatpush1.msra.mxu0 %v2977
        %2979 = vmatprep.subr.mxu0 0.0
        %v2980 = vand.u32 %v2131, 4294901760
        %2981 = vmatpush1.msra.mxu0 %v2980
        %2982 = vmatprep.subr.mxu0 0.0
        %v2983 = vand.u32 %v2132, 4294901760
        %2984 = vmatpush1.msra.mxu0 %v2983
        %2985 = vmatprep.subr.mxu0 0.0
        %v2986 = vand.u32 %v2133, 4294901760
        %2987 = vmatpush1.msra.mxu0 %v2986
        %2988 = vmatprep.subr.mxu0 0.0
        %v2989 = vand.u32 %v2134, 4294901760
        %2990 = vmatpush1.msra.mxu0 %v2989
        %2991 = vmatprep.subr.mxu0 0.0
        %v2992 = vand.u32 %v2135, 4294901760
        %2993 = vmatpush1.msra.mxu0 %v2992
        %2994 = vmatprep.subr.mxu0 0.0
        %v2995 = vand.u32 %v2136, 4294901760
        %2996 = vmatpush1.msra.mxu0 %v2995
        %2997 = vmatprep.subr.mxu0 0.0
        %v2998 = vand.u32 %v2137, 4294901760
        %2999 = vmatpush1.msra.mxu0 %v2998
        %3000 = vmatprep.subr.mxu0 0.0
        %v3001 = vand.u32 %v2138, 4294901760
        %3002 = vmatpush1.msra.mxu0 %v3001
        %3003 = vmatprep.subr.mxu0 0.0
        %v3004 = vand.u32 %v2139, 4294901760
        %3005 = vmatpush1.msra.mxu0 %v3004
        %3006 = vmatprep.subr.mxu0 0.0
        %v3007 = vand.u32 %v2140, 4294901760
        %3008 = vmatpush1.msra.mxu0 %v3007
        %3009 = vmatprep.subr.mxu0 0.0
        %v3010 = vand.u32 %v2141, 4294901760
        %3011 = vmatpush1.msra.mxu0 %v3010
        %3012 = vmatprep.subr.mxu0 0.0
        %v3013 = vand.u32 %v2142, 4294901760
        %3014 = vmatpush1.msra.mxu0 %v3013
        %3015 = vmatprep.subr.mxu0 0.0
        %v3016 = vand.u32 %v2143, 4294901760
        %3017 = vmatpush1.msra.mxu0 %v3016
        %3018 = vmatprep.subr.mxu0 0.0
        %v3019 = vand.u32 %v2144, 4294901760
        %3020 = vmatpush1.msra.mxu0 %v3019
        %3021 = vmatprep.subr.mxu0 0.0
        %v3022 = vand.u32 %v2145, 4294901760
        %3023 = vmatpush1.msra.mxu0 %v3022
        %3024 = vmatprep.subr.mxu0 0.0
        %v3025 = vand.u32 %v2146, 4294901760
        %3026 = vmatpush1.msra.mxu0 %v3025
        %3027 = vmatprep.subr.mxu0 0.0
        %v3028 = vand.u32 %v2147, 4294901760
        %3029 = vmatpush1.msra.mxu0 %v3028
        %3030 = vmatprep.subr.mxu0 0.0
        %v3031 = vand.u32 %v2148, 4294901760
        %3032 = vmatpush1.msra.mxu0 %v3031
        %3033 = vmatprep.subr.mxu0 0.0
        %v3034 = vand.u32 %v2149, 4294901760
        %3035 = vmatpush1.msra.mxu0 %v3034
        %3036 = vmatprep.subr.mxu0 0.0
        %v3037 = vand.u32 %v2150, 4294901760
        %3038 = vmatpush1.msra.mxu0 %v3037
        %v3039 = vand.u32 %v2116, 4294901760
        %3040 = vmatprep.mubr.f32.mxu0 %v3039
        %v3041 = vand.u32 %v2115, 4294901760
        %3042 = vmatmul.mubr.f32.gmra.mrb[0].mxu0 %v3041
        %v3043 = vpop.f32.mrb[0].mxu0
        %v3044 = vadd.f32 %v2940, %v3043
        %v3045 = vpop.f32.mrb[0].mxu0
        %3046 = vdwg.mxu0
        %3047 = vmatprep.subr.mxu0 0.0
        %v3048 = vand.u32 %v2151, 4294901760
        %3049 = vmatpush1.msra.mxu0 %v3048
        %3050 = vmatprep.subr.mxu0 0.0
        %v3051 = vand.u32 %v2152, 4294901760
        %3052 = vmatpush1.msra.mxu0 %v3051
        %3053 = vmatprep.subr.mxu0 0.0
        %v3054 = vand.u32 %v2153, 4294901760
        %3055 = vmatpush1.msra.mxu0 %v3054
        %3056 = vmatprep.subr.mxu0 0.0
        %v3057 = vand.u32 %v2154, 4294901760
        %3058 = vmatpush1.msra.mxu0 %v3057
        %3059 = vmatprep.subr.mxu0 0.0
        %v3060 = vand.u32 %v2155, 4294901760
        %3061 = vmatpush1.msra.mxu0 %v3060
        %3062 = vmatprep.subr.mxu0 0.0
        %v3063 = vand.u32 %v2156, 4294901760
        %3064 = vmatpush1.msra.mxu0 %v3063
        %3065 = vmatprep.subr.mxu0 0.0
        %v3066 = vand.u32 %v2157, 4294901760
        %3067 = vmatpush1.msra.mxu0 %v3066
        %3068 = vmatprep.subr.mxu0 0.0
        %v3069 = vand.u32 %v2158, 4294901760
        %3070 = vmatpush1.msra.mxu0 %v3069
        %3071 = vmatprep.subr.mxu0 0.0
        %v3072 = vand.u32 %v2159, 4294901760
        %3073 = vmatpush1.msra.mxu0 %v3072
        %3074 = vmatprep.subr.mxu0 0.0
        %v3075 = vand.u32 %v2160, 4294901760
        %3076 = vmatpush1.msra.mxu0 %v3075
        %3077 = vmatprep.subr.mxu0 0.0
        %v3078 = vand.u32 %v2161, 4294901760
        %3079 = vmatpush1.msra.mxu0 %v3078
        %3080 = vmatprep.subr.mxu0 0.0
        %v3081 = vand.u32 %v2162, 4294901760
        %3082 = vmatpush1.msra.mxu0 %v3081
        %3083 = vmatprep.subr.mxu0 0.0
        %v3084 = vand.u32 %v2163, 4294901760
        %3085 = vmatpush1.msra.mxu0 %v3084
        %3086 = vmatprep.subr.mxu0 0.0
        %v3087 = vand.u32 %v2164, 4294901760
        %3088 = vmatpush1.msra.mxu0 %v3087
        %3089 = vmatprep.subr.mxu0 0.0
        %v3090 = vand.u32 %v2165, 4294901760
        %3091 = vmatpush1.msra.mxu0 %v3090
        %3092 = vmatprep.subr.mxu0 0.0
        %v3093 = vand.u32 %v2166, 4294901760
        %3094 = vmatpush1.msra.mxu0 %v3093
        %3095 = vmatprep.subr.mxu0 0.0
        %v3096 = vand.u32 %v2167, 4294901760
        %3097 = vmatpush1.msra.mxu0 %v3096
        %3098 = vmatprep.subr.mxu0 0.0
        %v3099 = vand.u32 %v2168, 4294901760
        %3100 = vmatpush1.msra.mxu0 %v3099
        %3101 = vmatprep.subr.mxu0 0.0
        %v3102 = vand.u32 %v2169, 4294901760
        %3103 = vmatpush1.msra.mxu0 %v3102
        %3104 = vmatprep.subr.mxu0 0.0
        %v3105 = vand.u32 %v2170, 4294901760
        %3106 = vmatpush1.msra.mxu0 %v3105
        %3107 = vmatprep.subr.mxu0 0.0
        %v3108 = vand.u32 %v2171, 4294901760
        %3109 = vmatpush1.msra.mxu0 %v3108
        %3110 = vmatprep.subr.mxu0 0.0
        %v3111 = vand.u32 %v2172, 4294901760
        %3112 = vmatpush1.msra.mxu0 %v3111
        %3113 = vmatprep.subr.mxu0 0.0
        %v3114 = vand.u32 %v2173, 4294901760
        %3115 = vmatpush1.msra.mxu0 %v3114
        %3116 = vmatprep.subr.mxu0 0.0
        %v3117 = vand.u32 %v2174, 4294901760
        %3118 = vmatpush1.msra.mxu0 %v3117
        %3119 = vmatprep.subr.mxu0 0.0
        %v3120 = vand.u32 %v2175, 4294901760
        %3121 = vmatpush1.msra.mxu0 %v3120
        %3122 = vmatprep.subr.mxu0 0.0
        %v3123 = vand.u32 %v2176, 4294901760
        %3124 = vmatpush1.msra.mxu0 %v3123
        %3125 = vmatprep.subr.mxu0 0.0
        %v3126 = vand.u32 %v2177, 4294901760
        %3127 = vmatpush1.msra.mxu0 %v3126
        %3128 = vmatprep.subr.mxu0 0.0
        %v3129 = vand.u32 %v2178, 4294901760
        %3130 = vmatpush1.msra.mxu0 %v3129
        %3131 = vmatprep.subr.mxu0 0.0
        %v3132 = vand.u32 %v2179, 4294901760
        %3133 = vmatpush1.msra.mxu0 %v3132
        %3134 = vmatprep.subr.mxu0 0.0
        %v3135 = vand.u32 %v2180, 4294901760
        %3136 = vmatpush1.msra.mxu0 %v3135
        %3137 = vmatprep.subr.mxu0 0.0
        %v3138 = vand.u32 %v2181, 4294901760
        %3139 = vmatpush1.msra.mxu0 %v3138
        %3140 = vmatprep.subr.mxu0 0.0
        %v3141 = vand.u32 %v2182, 4294901760
        %3142 = vmatpush1.msra.mxu0 %v3141
        %v3143 = vand.u32 %v2118, 4294901760
        %v3144 = vsub.f32 %v2118, %v3143
        %v3145 = vand.u32 %v3144, 4294901760
        %v3146 = vsub.f32 %v3144, %v3145
        %v3147 = vand.u32 %v3146, 4294901760
        %3148 = vmatprep.mubr.f32.mxu0 %v3147
        %v3149 = vand.u32 %v2117, 4294901760
        %v3150 = vsub.f32 %v2117, %v3149
        %v3151 = vand.u32 %v3150, 4294901760
        %v3152 = vsub.f32 %v3150, %v3151
        %v3153 = vand.u32 %v3152, 4294901760
        %3154 = vmatmul.mubr.f32.gmra.mrb[0].mxu0 %v3153
        %v3155 = vpop.f32.mrb[0].mxu0
        %v3156 = vadd.f32 %v3044, %v3155
        %v3157 = vpop.f32.mrb[0].mxu0
        %3158 = vdwg.mxu0
        %3159 = vmatprep.subr.mxu0 0.0
        %v3160 = vand.u32 %v2151, 4294901760
        %v3161 = vsub.f32 %v2151, %v3160
        %v3162 = vand.u32 %v3161, 4294901760
        %v3163 = vsub.f32 %v3161, %v3162
        %v3164 = vand.u32 %v3163, 4294901760
        %3165 = vmatpush1.msra.mxu0 %v3164
        %3166 = vmatprep.subr.mxu0 0.0
        %v3167 = vand.u32 %v2152, 4294901760
        %v3168 = vsub.f32 %v2152, %v3167
        %v3169 = vand.u32 %v3168, 4294901760
        %v3170 = vsub.f32 %v3168, %v3169
        %v3171 = vand.u32 %v3170, 4294901760
        %3172 = vmatpush1.msra.mxu0 %v3171
        %3173 = vmatprep.subr.mxu0 0.0
        %v3174 = vand.u32 %v2153, 4294901760
        %v3175 = vsub.f32 %v2153, %v3174
        %v3176 = vand.u32 %v3175, 4294901760
        %v3177 = vsub.f32 %v3175, %v3176
        %v3178 = vand.u32 %v3177, 4294901760
        %3179 = vmatpush1.msra.mxu0 %v3178
        %3180 = vmatprep.subr.mxu0 0.0
        %v3181 = vand.u32 %v2154, 4294901760
        %v3182 = vsub.f32 %v2154, %v3181
        %v3183 = vand.u32 %v3182, 4294901760
        %v3184 = vsub.f32 %v3182, %v3183
        %v3185 = vand.u32 %v3184, 4294901760
        %3186 = vmatpush1.msra.mxu0 %v3185
        %3187 = vmatprep.subr.mxu0 0.0
        %v3188 = vand.u32 %v2155, 4294901760
        %v3189 = vsub.f32 %v2155, %v3188
        %v3190 = vand.u32 %v3189, 4294901760
        %v3191 = vsub.f32 %v3189, %v3190
        %v3192 = vand.u32 %v3191, 4294901760
        %3193 = vmatpush1.msra.mxu0 %v3192
        %3194 = vmatprep.subr.mxu0 0.0
        %v3195 = vand.u32 %v2156, 4294901760
        %v3196 = vsub.f32 %v2156, %v3195
        %v3197 = vand.u32 %v3196, 4294901760
        %v3198 = vsub.f32 %v3196, %v3197
        %v3199 = vand.u32 %v3198, 4294901760
        %3200 = vmatpush1.msra.mxu0 %v3199
        %3201 = vmatprep.subr.mxu0 0.0
        %v3202 = vand.u32 %v2157, 4294901760
        %v3203 = vsub.f32 %v2157, %v3202
        %v3204 = vand.u32 %v3203, 4294901760
        %v3205 = vsub.f32 %v3203, %v3204
        %v3206 = vand.u32 %v3205, 4294901760
        %3207 = vmatpush1.msra.mxu0 %v3206
        %3208 = vmatprep.subr.mxu0 0.0
        %v3209 = vand.u32 %v2158, 4294901760
        %v3210 = vsub.f32 %v2158, %v3209
        %v3211 = vand.u32 %v3210, 4294901760
        %v3212 = vsub.f32 %v3210, %v3211
        %v3213 = vand.u32 %v3212, 4294901760
        %3214 = vmatpush1.msra.mxu0 %v3213
        %3215 = vmatprep.subr.mxu0 0.0
        %v3216 = vand.u32 %v2159, 4294901760
        %v3217 = vsub.f32 %v2159, %v3216
        %v3218 = vand.u32 %v3217, 4294901760
        %v3219 = vsub.f32 %v3217, %v3218
        %v3220 = vand.u32 %v3219, 4294901760
        %3221 = vmatpush1.msra.mxu0 %v3220
        %3222 = vmatprep.subr.mxu0 0.0
        %v3223 = vand.u32 %v2160, 4294901760
        %v3224 = vsub.f32 %v2160, %v3223
        %v3225 = vand.u32 %v3224, 4294901760
        %v3226 = vsub.f32 %v3224, %v3225
        %v3227 = vand.u32 %v3226, 4294901760
        %3228 = vmatpush1.msra.mxu0 %v3227
        %3229 = vmatprep.subr.mxu0 0.0
        %v3230 = vand.u32 %v2161, 4294901760
        %v3231 = vsub.f32 %v2161, %v3230
        %v3232 = vand.u32 %v3231, 4294901760
        %v3233 = vsub.f32 %v3231, %v3232
        %v3234 = vand.u32 %v3233, 4294901760
        %3235 = vmatpush1.msra.mxu0 %v3234
        %3236 = vmatprep.subr.mxu0 0.0
        %v3237 = vand.u32 %v2162, 4294901760
        %v3238 = vsub.f32 %v2162, %v3237
        %v3239 = vand.u32 %v3238, 4294901760
        %v3240 = vsub.f32 %v3238, %v3239
        %v3241 = vand.u32 %v3240, 4294901760
        %3242 = vmatpush1.msra.mxu0 %v3241
        %3243 = vmatprep.subr.mxu0 0.0
        %v3244 = vand.u32 %v2163, 4294901760
        %v3245 = vsub.f32 %v2163, %v3244
        %v3246 = vand.u32 %v3245, 4294901760
        %v3247 = vsub.f32 %v3245, %v3246
        %v3248 = vand.u32 %v3247, 4294901760
        %3249 = vmatpush1.msra.mxu0 %v3248
        %3250 = vmatprep.subr.mxu0 0.0
        %v3251 = vand.u32 %v2164, 4294901760
        %v3252 = vsub.f32 %v2164, %v3251
        %v3253 = vand.u32 %v3252, 4294901760
        %v3254 = vsub.f32 %v3252, %v3253
        %v3255 = vand.u32 %v3254, 4294901760
        %3256 = vmatpush1.msra.mxu0 %v3255
        %3257 = vmatprep.subr.mxu0 0.0
        %v3258 = vand.u32 %v2165, 4294901760
        %v3259 = vsub.f32 %v2165, %v3258
        %v3260 = vand.u32 %v3259, 4294901760
        %v3261 = vsub.f32 %v3259, %v3260
        %v3262 = vand.u32 %v3261, 4294901760
        %3263 = vmatpush1.msra.mxu0 %v3262
        %3264 = vmatprep.subr.mxu0 0.0
        %v3265 = vand.u32 %v2166, 4294901760
        %v3266 = vsub.f32 %v2166, %v3265
        %v3267 = vand.u32 %v3266, 4294901760
        %v3268 = vsub.f32 %v3266, %v3267
        %v3269 = vand.u32 %v3268, 4294901760
        %3270 = vmatpush1.msra.mxu0 %v3269
        %3271 = vmatprep.subr.mxu0 0.0
        %v3272 = vand.u32 %v2167, 4294901760
        %v3273 = vsub.f32 %v2167, %v3272
        %v3274 = vand.u32 %v3273, 4294901760
        %v3275 = vsub.f32 %v3273, %v3274
        %v3276 = vand.u32 %v3275, 4294901760
        %3277 = vmatpush1.msra.mxu0 %v3276
        %3278 = vmatprep.subr.mxu0 0.0
        %v3279 = vand.u32 %v2168, 4294901760
        %v3280 = vsub.f32 %v2168, %v3279
        %v3281 = vand.u32 %v3280, 4294901760
        %v3282 = vsub.f32 %v3280, %v3281
        %v3283 = vand.u32 %v3282, 4294901760
        %3284 = vmatpush1.msra.mxu0 %v3283
        %3285 = vmatprep.subr.mxu0 0.0
        %v3286 = vand.u32 %v2169, 4294901760
        %v3287 = vsub.f32 %v2169, %v3286
        %v3288 = vand.u32 %v3287, 4294901760
        %v3289 = vsub.f32 %v3287, %v3288
        %v3290 = vand.u32 %v3289, 4294901760
        %3291 = vmatpush1.msra.mxu0 %v3290
        %3292 = vmatprep.subr.mxu0 0.0
        %v3293 = vand.u32 %v2170, 4294901760
        %v3294 = vsub.f32 %v2170, %v3293
        %v3295 = vand.u32 %v3294, 4294901760
        %v3296 = vsub.f32 %v3294, %v3295
        %v3297 = vand.u32 %v3296, 4294901760
        %3298 = vmatpush1.msra.mxu0 %v3297
        %3299 = vmatprep.subr.mxu0 0.0
        %v3300 = vand.u32 %v2171, 4294901760
        %v3301 = vsub.f32 %v2171, %v3300
        %v3302 = vand.u32 %v3301, 4294901760
        %v3303 = vsub.f32 %v3301, %v3302
        %v3304 = vand.u32 %v3303, 4294901760
        %3305 = vmatpush1.msra.mxu0 %v3304
        %3306 = vmatprep.subr.mxu0 0.0
        %v3307 = vand.u32 %v2172, 4294901760
        %v3308 = vsub.f32 %v2172, %v3307
        %v3309 = vand.u32 %v3308, 4294901760
        %v3310 = vsub.f32 %v3308, %v3309
        %v3311 = vand.u32 %v3310, 4294901760
        %3312 = vmatpush1.msra.mxu0 %v3311
        %3313 = vmatprep.subr.mxu0 0.0
        %v3314 = vand.u32 %v2173, 4294901760
        %v3315 = vsub.f32 %v2173, %v3314
        %v3316 = vand.u32 %v3315, 4294901760
        %v3317 = vsub.f32 %v3315, %v3316
        %v3318 = vand.u32 %v3317, 4294901760
        %3319 = vmatpush1.msra.mxu0 %v3318
        %3320 = vmatprep.subr.mxu0 0.0
        %v3321 = vand.u32 %v2174, 4294901760
        %v3322 = vsub.f32 %v2174, %v3321
        %v3323 = vand.u32 %v3322, 4294901760
        %v3324 = vsub.f32 %v3322, %v3323
        %v3325 = vand.u32 %v3324, 4294901760
        %3326 = vmatpush1.msra.mxu0 %v3325
        %3327 = vmatprep.subr.mxu0 0.0
        %v3328 = vand.u32 %v2175, 4294901760
        %v3329 = vsub.f32 %v2175, %v3328
        %v3330 = vand.u32 %v3329, 4294901760
        %v3331 = vsub.f32 %v3329, %v3330
        %v3332 = vand.u32 %v3331, 4294901760
        %3333 = vmatpush1.msra.mxu0 %v3332
        %3334 = vmatprep.subr.mxu0 0.0
        %v3335 = vand.u32 %v2176, 4294901760
        %v3336 = vsub.f32 %v2176, %v3335
        %v3337 = vand.u32 %v3336, 4294901760
        %v3338 = vsub.f32 %v3336, %v3337
        %v3339 = vand.u32 %v3338, 4294901760
        %3340 = vmatpush1.msra.mxu0 %v3339
        %3341 = vmatprep.subr.mxu0 0.0
        %v3342 = vand.u32 %v2177, 4294901760
        %v3343 = vsub.f32 %v2177, %v3342
        %v3344 = vand.u32 %v3343, 4294901760
        %v3345 = vsub.f32 %v3343, %v3344
        %v3346 = vand.u32 %v3345, 4294901760
        %3347 = vmatpush1.msra.mxu0 %v3346
        %3348 = vmatprep.subr.mxu0 0.0
        %v3349 = vand.u32 %v2178, 4294901760
        %v3350 = vsub.f32 %v2178, %v3349
        %v3351 = vand.u32 %v3350, 4294901760
        %v3352 = vsub.f32 %v3350, %v3351
        %v3353 = vand.u32 %v3352, 4294901760
        %3354 = vmatpush1.msra.mxu0 %v3353
        %3355 = vmatprep.subr.mxu0 0.0
        %v3356 = vand.u32 %v2179, 4294901760
        %v3357 = vsub.f32 %v2179, %v3356
        %v3358 = vand.u32 %v3357, 4294901760
        %v3359 = vsub.f32 %v3357, %v3358
        %v3360 = vand.u32 %v3359, 4294901760
        %3361 = vmatpush1.msra.mxu0 %v3360
        %3362 = vmatprep.subr.mxu0 0.0
        %v3363 = vand.u32 %v2180, 4294901760
        %v3364 = vsub.f32 %v2180, %v3363
        %v3365 = vand.u32 %v3364, 4294901760
        %v3366 = vsub.f32 %v3364, %v3365
        %v3367 = vand.u32 %v3366, 4294901760
        %3368 = vmatpush1.msra.mxu0 %v3367
        %3369 = vmatprep.subr.mxu0 0.0
        %v3370 = vand.u32 %v2181, 4294901760
        %v3371 = vsub.f32 %v2181, %v3370
        %v3372 = vand.u32 %v3371, 4294901760
        %v3373 = vsub.f32 %v3371, %v3372
        %v3374 = vand.u32 %v3373, 4294901760
        %3375 = vmatpush1.msra.mxu0 %v3374
        %3376 = vmatprep.subr.mxu0 0.0
        %v3377 = vand.u32 %v2182, 4294901760
        %v3378 = vsub.f32 %v2182, %v3377
        %v3379 = vand.u32 %v3378, 4294901760
        %v3380 = vsub.f32 %v3378, %v3379
        %v3381 = vand.u32 %v3380, 4294901760
        %3382 = vmatpush1.msra.mxu0 %v3381
        %v3383 = vand.u32 %v2118, 4294901760
        %3384 = vmatprep.mubr.f32.mxu0 %v3383
        %v3385 = vand.u32 %v2117, 4294901760
        %3386 = vmatmul.mubr.f32.gmra.mrb[0].mxu0 %v3385
        %v3387 = vpop.f32.mrb[0].mxu0
        %v3388 = vadd.f32 %v3156, %v3387
        %v3389 = vpop.f32.mrb[0].mxu0
        %3390 = vdwg.mxu0
        %3391 = vmatprep.subr.mxu0 0.0
        %v3392 = vand.u32 %v2151, 4294901760
        %v3393 = vsub.f32 %v2151, %v3392
        %3394 = vmatpush1.msra.mxu0 %v3393
        %3395 = vmatprep.subr.mxu0 0.0
        %v3396 = vand.u32 %v2152, 4294901760
        %v3397 = vsub.f32 %v2152, %v3396
        %3398 = vmatpush1.msra.mxu0 %v3397
        %3399 = vmatprep.subr.mxu0 0.0
        %v3400 = vand.u32 %v2153, 4294901760
        %v3401 = vsub.f32 %v2153, %v3400
        %3402 = vmatpush1.msra.mxu0 %v3401
        %3403 = vmatprep.subr.mxu0 0.0
        %v3404 = vand.u32 %v2154, 4294901760
        %v3405 = vsub.f32 %v2154, %v3404
        %3406 = vmatpush1.msra.mxu0 %v3405
        %3407 = vmatprep.subr.mxu0 0.0
        %v3408 = vand.u32 %v2155, 4294901760
        %v3409 = vsub.f32 %v2155, %v3408
        %3410 = vmatpush1.msra.mxu0 %v3409
        %3411 = vmatprep.subr.mxu0 0.0
        %v3412 = vand.u32 %v2156, 4294901760
        %v3413 = vsub.f32 %v2156, %v3412
        %3414 = vmatpush1.msra.mxu0 %v3413
        %3415 = vmatprep.subr.mxu0 0.0
        %v3416 = vand.u32 %v2157, 4294901760
        %v3417 = vsub.f32 %v2157, %v3416
        %3418 = vmatpush1.msra.mxu0 %v3417
        %3419 = vmatprep.subr.mxu0 0.0
        %v3420 = vand.u32 %v2158, 4294901760
        %v3421 = vsub.f32 %v2158, %v3420
        %3422 = vmatpush1.msra.mxu0 %v3421
        %3423 = vmatprep.subr.mxu0 0.0
        %v3424 = vand.u32 %v2159, 4294901760
        %v3425 = vsub.f32 %v2159, %v3424
        %3426 = vmatpush1.msra.mxu0 %v3425
        %3427 = vmatprep.subr.mxu0 0.0
        %v3428 = vand.u32 %v2160, 4294901760
        %v3429 = vsub.f32 %v2160, %v3428
        %3430 = vmatpush1.msra.mxu0 %v3429
        %3431 = vmatprep.subr.mxu0 0.0
        %v3432 = vand.u32 %v2161, 4294901760
        %v3433 = vsub.f32 %v2161, %v3432
        %3434 = vmatpush1.msra.mxu0 %v3433
        %3435 = vmatprep.subr.mxu0 0.0
        %v3436 = vand.u32 %v2162, 4294901760
        %v3437 = vsub.f32 %v2162, %v3436
        %3438 = vmatpush1.msra.mxu0 %v3437
        %3439 = vmatprep.subr.mxu0 0.0
        %v3440 = vand.u32 %v2163, 4294901760
        %v3441 = vsub.f32 %v2163, %v3440
        %3442 = vmatpush1.msra.mxu0 %v3441
        %3443 = vmatprep.subr.mxu0 0.0
        %v3444 = vand.u32 %v2164, 4294901760
        %v3445 = vsub.f32 %v2164, %v3444
        %3446 = vmatpush1.msra.mxu0 %v3445
        %3447 = vmatprep.subr.mxu0 0.0
        %v3448 = vand.u32 %v2165, 4294901760
        %v3449 = vsub.f32 %v2165, %v3448
        %3450 = vmatpush1.msra.mxu0 %v3449
        %3451 = vmatprep.subr.mxu0 0.0
        %v3452 = vand.u32 %v2166, 4294901760
        %v3453 = vsub.f32 %v2166, %v3452
        %3454 = vmatpush1.msra.mxu0 %v3453
        %3455 = vmatprep.subr.mxu0 0.0
        %v3456 = vand.u32 %v2167, 4294901760
        %v3457 = vsub.f32 %v2167, %v3456
        %3458 = vmatpush1.msra.mxu0 %v3457
        %3459 = vmatprep.subr.mxu0 0.0
        %v3460 = vand.u32 %v2168, 4294901760
        %v3461 = vsub.f32 %v2168, %v3460
        %3462 = vmatpush1.msra.mxu0 %v3461
        %3463 = vmatprep.subr.mxu0 0.0
        %v3464 = vand.u32 %v2169, 4294901760
        %v3465 = vsub.f32 %v2169, %v3464
        %3466 = vmatpush1.msra.mxu0 %v3465
        %3467 = vmatprep.subr.mxu0 0.0
        %v3468 = vand.u32 %v2170, 4294901760
        %v3469 = vsub.f32 %v2170, %v3468
        %3470 = vmatpush1.msra.mxu0 %v3469
        %3471 = vmatprep.subr.mxu0 0.0
        %v3472 = vand.u32 %v2171, 4294901760
        %v3473 = vsub.f32 %v2171, %v3472
        %3474 = vmatpush1.msra.mxu0 %v3473
        %3475 = vmatprep.subr.mxu0 0.0
        %v3476 = vand.u32 %v2172, 4294901760
        %v3477 = vsub.f32 %v2172, %v3476
        %3478 = vmatpush1.msra.mxu0 %v3477
        %3479 = vmatprep.subr.mxu0 0.0
        %v3480 = vand.u32 %v2173, 4294901760
        %v3481 = vsub.f32 %v2173, %v3480
        %3482 = vmatpush1.msra.mxu0 %v3481
        %3483 = vmatprep.subr.mxu0 0.0
        %v3484 = vand.u32 %v2174, 4294901760
        %v3485 = vsub.f32 %v2174, %v3484
        %3486 = vmatpush1.msra.mxu0 %v3485
        %3487 = vmatprep.subr.mxu0 0.0
        %v3488 = vand.u32 %v2175, 4294901760
        %v3489 = vsub.f32 %v2175, %v3488
        %3490 = vmatpush1.msra.mxu0 %v3489
        %3491 = vmatprep.subr.mxu0 0.0
        %v3492 = vand.u32 %v2176, 4294901760
        %v3493 = vsub.f32 %v2176, %v3492
        %3494 = vmatpush1.msra.mxu0 %v3493
        %3495 = vmatprep.subr.mxu0 0.0
        %v3496 = vand.u32 %v2177, 4294901760
        %v3497 = vsub.f32 %v2177, %v3496
        %3498 = vmatpush1.msra.mxu0 %v3497
        %3499 = vmatprep.subr.mxu0 0.0
        %v3500 = vand.u32 %v2178, 4294901760
        %v3501 = vsub.f32 %v2178, %v3500
        %3502 = vmatpush1.msra.mxu0 %v3501
        %3503 = vmatprep.subr.mxu0 0.0
        %v3504 = vand.u32 %v2179, 4294901760
        %v3505 = vsub.f32 %v2179, %v3504
        %3506 = vmatpush1.msra.mxu0 %v3505
        %3507 = vmatprep.subr.mxu0 0.0
        %v3508 = vand.u32 %v2180, 4294901760
        %v3509 = vsub.f32 %v2180, %v3508
        %3510 = vmatpush1.msra.mxu0 %v3509
        %3511 = vmatprep.subr.mxu0 0.0
        %v3512 = vand.u32 %v2181, 4294901760
        %v3513 = vsub.f32 %v2181, %v3512
        %3514 = vmatpush1.msra.mxu0 %v3513
        %3515 = vmatprep.subr.mxu0 0.0
        %v3516 = vand.u32 %v2182, 4294901760
        %v3517 = vsub.f32 %v2182, %v3516
        %3518 = vmatpush1.msra.mxu0 %v3517
        %v3519 = vand.u32 %v2118, 4294901760
        %v3520 = vsub.f32 %v2118, %v3519
        %3521 = vmatprep.mubr.f32.mxu0 %v3520
        %v3522 = vand.u32 %v2117, 4294901760
        %v3523 = vsub.f32 %v2117, %v3522
        %3524 = vmatmul.mubr.f32.gmra.mrb[0].mxu0 %v3523
        %v3525 = vpop.f32.mrb[0].mxu0
        %v3526 = vadd.f32 %v3388, %v3525
        %v3527 = vpop.f32.mrb[0].mxu0
        %3528 = vdwg.mxu0
        %3529 = vmatprep.subr.mxu0 0.0
        %v3530 = vand.u32 %v2151, 4294901760
        %3531 = vmatpush1.msra.mxu0 %v3530
        %3532 = vmatprep.subr.mxu0 0.0
        %v3533 = vand.u32 %v2152, 4294901760
        %3534 = vmatpush1.msra.mxu0 %v3533
        %3535 = vmatprep.subr.mxu0 0.0
        %v3536 = vand.u32 %v2153, 4294901760
        %3537 = vmatpush1.msra.mxu0 %v3536
        %3538 = vmatprep.subr.mxu0 0.0
        %v3539 = vand.u32 %v2154, 4294901760
        %3540 = vmatpush1.msra.mxu0 %v3539
        %3541 = vmatprep.subr.mxu0 0.0
        %v3542 = vand.u32 %v2155, 4294901760
        %3543 = vmatpush1.msra.mxu0 %v3542
        %3544 = vmatprep.subr.mxu0 0.0
        %v3545 = vand.u32 %v2156, 4294901760
        %3546 = vmatpush1.msra.mxu0 %v3545
        %3547 = vmatprep.subr.mxu0 0.0
        %v3548 = vand.u32 %v2157, 4294901760
        %3549 = vmatpush1.msra.mxu0 %v3548
        %3550 = vmatprep.subr.mxu0 0.0
        %v3551 = vand.u32 %v2158, 4294901760
        %3552 = vmatpush1.msra.mxu0 %v3551
        %3553 = vmatprep.subr.mxu0 0.0
        %v3554 = vand.u32 %v2159, 4294901760
        %3555 = vmatpush1.msra.mxu0 %v3554
        %3556 = vmatprep.subr.mxu0 0.0
        %v3557 = vand.u32 %v2160, 4294901760
        %3558 = vmatpush1.msra.mxu0 %v3557
        %3559 = vmatprep.subr.mxu0 0.0
        %v3560 = vand.u32 %v2161, 4294901760
        %3561 = vmatpush1.msra.mxu0 %v3560
        %3562 = vmatprep.subr.mxu0 0.0
        %v3563 = vand.u32 %v2162, 4294901760
        %3564 = vmatpush1.msra.mxu0 %v3563
        %3565 = vmatprep.subr.mxu0 0.0
        %v3566 = vand.u32 %v2163, 4294901760
        %3567 = vmatpush1.msra.mxu0 %v3566
        %3568 = vmatprep.subr.mxu0 0.0
        %v3569 = vand.u32 %v2164, 4294901760
        %3570 = vmatpush1.msra.mxu0 %v3569
        %3571 = vmatprep.subr.mxu0 0.0
        %v3572 = vand.u32 %v2165, 4294901760
        %3573 = vmatpush1.msra.mxu0 %v3572
        %3574 = vmatprep.subr.mxu0 0.0
        %v3575 = vand.u32 %v2166, 4294901760
        %3576 = vmatpush1.msra.mxu0 %v3575
        %3577 = vmatprep.subr.mxu0 0.0
        %v3578 = vand.u32 %v2167, 4294901760
        %3579 = vmatpush1.msra.mxu0 %v3578
        %3580 = vmatprep.subr.mxu0 0.0
        %v3581 = vand.u32 %v2168, 4294901760
        %3582 = vmatpush1.msra.mxu0 %v3581
        %3583 = vmatprep.subr.mxu0 0.0
        %v3584 = vand.u32 %v2169, 4294901760
        %3585 = vmatpush1.msra.mxu0 %v3584
        %3586 = vmatprep.subr.mxu0 0.0
        %v3587 = vand.u32 %v2170, 4294901760
        %3588 = vmatpush1.msra.mxu0 %v3587
        %3589 = vmatprep.subr.mxu0 0.0
        %v3590 = vand.u32 %v2171, 4294901760
        %3591 = vmatpush1.msra.mxu0 %v3590
        %3592 = vmatprep.subr.mxu0 0.0
        %v3593 = vand.u32 %v2172, 4294901760
        %3594 = vmatpush1.msra.mxu0 %v3593
        %3595 = vmatprep.subr.mxu0 0.0
        %v3596 = vand.u32 %v2173, 4294901760
        %3597 = vmatpush1.msra.mxu0 %v3596
        %3598 = vmatprep.subr.mxu0 0.0
        %v3599 = vand.u32 %v2174, 4294901760
        %3600 = vmatpush1.msra.mxu0 %v3599
        %3601 = vmatprep.subr.mxu0 0.0
        %v3602 = vand.u32 %v2175, 4294901760
        %3603 = vmatpush1.msra.mxu0 %v3602
        %3604 = vmatprep.subr.mxu0 0.0
        %v3605 = vand.u32 %v2176, 4294901760
        %3606 = vmatpush1.msra.mxu0 %v3605
        %3607 = vmatprep.subr.mxu0 0.0
        %v3608 = vand.u32 %v2177, 4294901760
        %3609 = vmatpush1.msra.mxu0 %v3608
        %3610 = vmatprep.subr.mxu0 0.0
        %v3611 = vand.u32 %v2178, 4294901760
        %3612 = vmatpush1.msra.mxu0 %v3611
        %3613 = vmatprep.subr.mxu0 0.0
        %v3614 = vand.u32 %v2179, 4294901760
        %3615 = vmatpush1.msra.mxu0 %v3614
        %3616 = vmatprep.subr.mxu0 0.0
        %v3617 = vand.u32 %v2180, 4294901760
        %3618 = vmatpush1.msra.mxu0 %v3617
        %3619 = vmatprep.subr.mxu0 0.0
        %v3620 = vand.u32 %v2181, 4294901760
        %3621 = vmatpush1.msra.mxu0 %v3620
        %3622 = vmatprep.subr.mxu0 0.0
        %v3623 = vand.u32 %v2182, 4294901760
        %3624 = vmatpush1.msra.mxu0 %v3623
        %v3625 = vand.u32 %v2118, 4294901760
        %v3626 = vsub.f32 %v2118, %v3625
        %v3627 = vand.u32 %v3626, 4294901760
        %3628 = vmatprep.mubr.f32.mxu0 %v3627
        %v3629 = vand.u32 %v2117, 4294901760
        %v3630 = vsub.f32 %v2117, %v3629
        %v3631 = vand.u32 %v3630, 4294901760
        %3632 = vmatmul.mubr.f32.gmra.mrb[0].mxu0 %v3631
        %v3633 = vpop.f32.mrb[0].mxu0
        %v3634 = vadd.f32 %v3526, %v3633
        %v3635 = vpop.f32.mrb[0].mxu0
        %3636 = vdwg.mxu0
        %3637 = vmatprep.subr.mxu0 0.0
        %v3638 = vand.u32 %v2151, 4294901760
        %v3639 = vsub.f32 %v2151, %v3638
        %v3640 = vand.u32 %v3639, 4294901760
        %3641 = vmatpush1.msra.mxu0 %v3640
        %3642 = vmatprep.subr.mxu0 0.0
        %v3643 = vand.u32 %v2152, 4294901760
        %v3644 = vsub.f32 %v2152, %v3643
        %v3645 = vand.u32 %v3644, 4294901760
        %3646 = vmatpush1.msra.mxu0 %v3645
        %3647 = vmatprep.subr.mxu0 0.0
        %v3648 = vand.u32 %v2153, 4294901760
        %v3649 = vsub.f32 %v2153, %v3648
        %v3650 = vand.u32 %v3649, 4294901760
        %3651 = vmatpush1.msra.mxu0 %v3650
        %3652 = vmatprep.subr.mxu0 0.0
        %v3653 = vand.u32 %v2154, 4294901760
        %v3654 = vsub.f32 %v2154, %v3653
        %v3655 = vand.u32 %v3654, 4294901760
        %3656 = vmatpush1.msra.mxu0 %v3655
        %3657 = vmatprep.subr.mxu0 0.0
        %v3658 = vand.u32 %v2155, 4294901760
        %v3659 = vsub.f32 %v2155, %v3658
        %v3660 = vand.u32 %v3659, 4294901760
        %3661 = vmatpush1.msra.mxu0 %v3660
        %3662 = vmatprep.subr.mxu0 0.0
        %v3663 = vand.u32 %v2156, 4294901760
        %v3664 = vsub.f32 %v2156, %v3663
        %v3665 = vand.u32 %v3664, 4294901760
        %3666 = vmatpush1.msra.mxu0 %v3665
        %3667 = vmatprep.subr.mxu0 0.0
        %v3668 = vand.u32 %v2157, 4294901760
        %v3669 = vsub.f32 %v2157, %v3668
        %v3670 = vand.u32 %v3669, 4294901760
        %3671 = vmatpush1.msra.mxu0 %v3670
        %3672 = vmatprep.subr.mxu0 0.0
        %v3673 = vand.u32 %v2158, 4294901760
        %v3674 = vsub.f32 %v2158, %v3673
        %v3675 = vand.u32 %v3674, 4294901760
        %3676 = vmatpush1.msra.mxu0 %v3675
        %3677 = vmatprep.subr.mxu0 0.0
        %v3678 = vand.u32 %v2159, 4294901760
        %v3679 = vsub.f32 %v2159, %v3678
        %v3680 = vand.u32 %v3679, 4294901760
        %3681 = vmatpush1.msra.mxu0 %v3680
        %3682 = vmatprep.subr.mxu0 0.0
        %v3683 = vand.u32 %v2160, 4294901760
        %v3684 = vsub.f32 %v2160, %v3683
        %v3685 = vand.u32 %v3684, 4294901760
        %3686 = vmatpush1.msra.mxu0 %v3685
        %3687 = vmatprep.subr.mxu0 0.0
        %v3688 = vand.u32 %v2161, 4294901760
        %v3689 = vsub.f32 %v2161, %v3688
        %v3690 = vand.u32 %v3689, 4294901760
        %3691 = vmatpush1.msra.mxu0 %v3690
        %3692 = vmatprep.subr.mxu0 0.0
        %v3693 = vand.u32 %v2162, 4294901760
        %v3694 = vsub.f32 %v2162, %v3693
        %v3695 = vand.u32 %v3694, 4294901760
        %3696 = vmatpush1.msra.mxu0 %v3695
        %3697 = vmatprep.subr.mxu0 0.0
        %v3698 = vand.u32 %v2163, 4294901760
        %v3699 = vsub.f32 %v2163, %v3698
        %v3700 = vand.u32 %v3699, 4294901760
        %3701 = vmatpush1.msra.mxu0 %v3700
        %3702 = vmatprep.subr.mxu0 0.0
        %v3703 = vand.u32 %v2164, 4294901760
        %v3704 = vsub.f32 %v2164, %v3703
        %v3705 = vand.u32 %v3704, 4294901760
        %3706 = vmatpush1.msra.mxu0 %v3705
        %3707 = vmatprep.subr.mxu0 0.0
        %v3708 = vand.u32 %v2165, 4294901760
        %v3709 = vsub.f32 %v2165, %v3708
        %v3710 = vand.u32 %v3709, 4294901760
        %3711 = vmatpush1.msra.mxu0 %v3710
        %3712 = vmatprep.subr.mxu0 0.0
        %v3713 = vand.u32 %v2166, 4294901760
        %v3714 = vsub.f32 %v2166, %v3713
        %v3715 = vand.u32 %v3714, 4294901760
        %3716 = vmatpush1.msra.mxu0 %v3715
        %3717 = vmatprep.subr.mxu0 0.0
        %v3718 = vand.u32 %v2167, 4294901760
        %v3719 = vsub.f32 %v2167, %v3718
        %v3720 = vand.u32 %v3719, 4294901760
        %3721 = vmatpush1.msra.mxu0 %v3720
        %3722 = vmatprep.subr.mxu0 0.0
        %v3723 = vand.u32 %v2168, 4294901760
        %v3724 = vsub.f32 %v2168, %v3723
        %v3725 = vand.u32 %v3724, 4294901760
        %3726 = vmatpush1.msra.mxu0 %v3725
        %3727 = vmatprep.subr.mxu0 0.0
        %v3728 = vand.u32 %v2169, 4294901760
        %v3729 = vsub.f32 %v2169, %v3728
        %v3730 = vand.u32 %v3729, 4294901760
        %3731 = vmatpush1.msra.mxu0 %v3730
        %3732 = vmatprep.subr.mxu0 0.0
        %v3733 = vand.u32 %v2170, 4294901760
        %v3734 = vsub.f32 %v2170, %v3733
        %v3735 = vand.u32 %v3734, 4294901760
        %3736 = vmatpush1.msra.mxu0 %v3735
        %3737 = vmatprep.subr.mxu0 0.0
        %v3738 = vand.u32 %v2171, 4294901760
        %v3739 = vsub.f32 %v2171, %v3738
        %v3740 = vand.u32 %v3739, 4294901760
        %3741 = vmatpush1.msra.mxu0 %v3740
        %3742 = vmatprep.subr.mxu0 0.0
        %v3743 = vand.u32 %v2172, 4294901760
        %v3744 = vsub.f32 %v2172, %v3743
        %v3745 = vand.u32 %v3744, 4294901760
        %3746 = vmatpush1.msra.mxu0 %v3745
        %3747 = vmatprep.subr.mxu0 0.0
        %v3748 = vand.u32 %v2173, 4294901760
        %v3749 = vsub.f32 %v2173, %v3748
        %v3750 = vand.u32 %v3749, 4294901760
        %3751 = vmatpush1.msra.mxu0 %v3750
        %3752 = vmatprep.subr.mxu0 0.0
        %v3753 = vand.u32 %v2174, 4294901760
        %v3754 = vsub.f32 %v2174, %v3753
        %v3755 = vand.u32 %v3754, 4294901760
        %3756 = vmatpush1.msra.mxu0 %v3755
        %3757 = vmatprep.subr.mxu0 0.0
        %v3758 = vand.u32 %v2175, 4294901760
        %v3759 = vsub.f32 %v2175, %v3758
        %v3760 = vand.u32 %v3759, 4294901760
        %3761 = vmatpush1.msra.mxu0 %v3760
        %3762 = vmatprep.subr.mxu0 0.0
        %v3763 = vand.u32 %v2176, 4294901760
        %v3764 = vsub.f32 %v2176, %v3763
        %v3765 = vand.u32 %v3764, 4294901760
        %3766 = vmatpush1.msra.mxu0 %v3765
        %3767 = vmatprep.subr.mxu0 0.0
        %v3768 = vand.u32 %v2177, 4294901760
        %v3769 = vsub.f32 %v2177, %v3768
        %v3770 = vand.u32 %v3769, 4294901760
        %3771 = vmatpush1.msra.mxu0 %v3770
        %3772 = vmatprep.subr.mxu0 0.0
        %v3773 = vand.u32 %v2178, 4294901760
        %v3774 = vsub.f32 %v2178, %v3773
        %v3775 = vand.u32 %v3774, 4294901760
        %3776 = vmatpush1.msra.mxu0 %v3775
        %3777 = vmatprep.subr.mxu0 0.0
        %v3778 = vand.u32 %v2179, 4294901760
        %v3779 = vsub.f32 %v2179, %v3778
        %v3780 = vand.u32 %v3779, 4294901760
        %3781 = vmatpush1.msra.mxu0 %v3780
        %3782 = vmatprep.subr.mxu0 0.0
        %v3783 = vand.u32 %v2180, 4294901760
        %v3784 = vsub.f32 %v2180, %v3783
        %v3785 = vand.u32 %v3784, 4294901760
        %3786 = vmatpush1.msra.mxu0 %v3785
        %3787 = vmatprep.subr.mxu0 0.0
        %v3788 = vand.u32 %v2181, 4294901760
        %v3789 = vsub.f32 %v2181, %v3788
        %v3790 = vand.u32 %v3789, 4294901760
        %3791 = vmatpush1.msra.mxu0 %v3790
        %3792 = vmatprep.subr.mxu0 0.0
        %v3793 = vand.u32 %v2182, 4294901760
        %v3794 = vsub.f32 %v2182, %v3793
        %v3795 = vand.u32 %v3794, 4294901760
        %3796 = vmatpush1.msra.mxu0 %v3795
        %v3797 = vand.u32 %v2118, 4294901760
        %3798 = vmatprep.mubr.f32.mxu0 %v3797
        %v3799 = vand.u32 %v2117, 4294901760
        %3800 = vmatmul.mubr.f32.gmra.mrb[0].mxu0 %v3799
        %v3801 = vpop.f32.mrb[0].mxu0
        %v3802 = vadd.f32 %v3634, %v3801
        %v3803 = vpop.f32.mrb[0].mxu0
        %3804 = vdwg.mxu0
        %3805 = vmatprep.subr.mxu0 0.0
        %v3806 = vand.u32 %v2151, 4294901760
        %3807 = vmatpush1.msra.mxu0 %v3806
        %3808 = vmatprep.subr.mxu0 0.0
        %v3809 = vand.u32 %v2152, 4294901760
        %3810 = vmatpush1.msra.mxu0 %v3809
        %3811 = vmatprep.subr.mxu0 0.0
        %v3812 = vand.u32 %v2153, 4294901760
        %3813 = vmatpush1.msra.mxu0 %v3812
        %3814 = vmatprep.subr.mxu0 0.0
        %v3815 = vand.u32 %v2154, 4294901760
        %3816 = vmatpush1.msra.mxu0 %v3815
        %3817 = vmatprep.subr.mxu0 0.0
        %v3818 = vand.u32 %v2155, 4294901760
        %3819 = vmatpush1.msra.mxu0 %v3818
        %3820 = vmatprep.subr.mxu0 0.0
        %v3821 = vand.u32 %v2156, 4294901760
        %3822 = vmatpush1.msra.mxu0 %v3821
        %3823 = vmatprep.subr.mxu0 0.0
        %v3824 = vand.u32 %v2157, 4294901760
        %3825 = vmatpush1.msra.mxu0 %v3824
        %3826 = vmatprep.subr.mxu0 0.0
        %v3827 = vand.u32 %v2158, 4294901760
        %3828 = vmatpush1.msra.mxu0 %v3827
        %3829 = vmatprep.subr.mxu0 0.0
        %v3830 = vand.u32 %v2159, 4294901760
        %3831 = vmatpush1.msra.mxu0 %v3830
        %3832 = vmatprep.subr.mxu0 0.0
        %v3833 = vand.u32 %v2160, 4294901760
        %3834 = vmatpush1.msra.mxu0 %v3833
        %3835 = vmatprep.subr.mxu0 0.0
        %v3836 = vand.u32 %v2161, 4294901760
        %3837 = vmatpush1.msra.mxu0 %v3836
        %3838 = vmatprep.subr.mxu0 0.0
        %v3839 = vand.u32 %v2162, 4294901760
        %3840 = vmatpush1.msra.mxu0 %v3839
        %3841 = vmatprep.subr.mxu0 0.0
        %v3842 = vand.u32 %v2163, 4294901760
        %3843 = vmatpush1.msra.mxu0 %v3842
        %3844 = vmatprep.subr.mxu0 0.0
        %v3845 = vand.u32 %v2164, 4294901760
        %3846 = vmatpush1.msra.mxu0 %v3845
        %3847 = vmatprep.subr.mxu0 0.0
        %v3848 = vand.u32 %v2165, 4294901760
        %3849 = vmatpush1.msra.mxu0 %v3848
        %3850 = vmatprep.subr.mxu0 0.0
        %v3851 = vand.u32 %v2166, 4294901760
        %3852 = vmatpush1.msra.mxu0 %v3851
        %3853 = vmatprep.subr.mxu0 0.0
        %v3854 = vand.u32 %v2167, 4294901760
        %3855 = vmatpush1.msra.mxu0 %v3854
        %3856 = vmatprep.subr.mxu0 0.0
        %v3857 = vand.u32 %v2168, 4294901760
        %3858 = vmatpush1.msra.mxu0 %v3857
        %3859 = vmatprep.subr.mxu0 0.0
        %v3860 = vand.u32 %v2169, 4294901760
        %3861 = vmatpush1.msra.mxu0 %v3860
        %3862 = vmatprep.subr.mxu0 0.0
        %v3863 = vand.u32 %v2170, 4294901760
        %3864 = vmatpush1.msra.mxu0 %v3863
        %3865 = vmatprep.subr.mxu0 0.0
        %v3866 = vand.u32 %v2171, 4294901760
        %3867 = vmatpush1.msra.mxu0 %v3866
        %3868 = vmatprep.subr.mxu0 0.0
        %v3869 = vand.u32 %v2172, 4294901760
        %3870 = vmatpush1.msra.mxu0 %v3869
        %3871 = vmatprep.subr.mxu0 0.0
        %v3872 = vand.u32 %v2173, 4294901760
        %3873 = vmatpush1.msra.mxu0 %v3872
        %3874 = vmatprep.subr.mxu0 0.0
        %v3875 = vand.u32 %v2174, 4294901760
        %3876 = vmatpush1.msra.mxu0 %v3875
        %3877 = vmatprep.subr.mxu0 0.0
        %v3878 = vand.u32 %v2175, 4294901760
        %3879 = vmatpush1.msra.mxu0 %v3878
        %3880 = vmatprep.subr.mxu0 0.0
        %v3881 = vand.u32 %v2176, 4294901760
        %3882 = vmatpush1.msra.mxu0 %v3881
        %3883 = vmatprep.subr.mxu0 0.0
        %v3884 = vand.u32 %v2177, 4294901760
        %3885 = vmatpush1.msra.mxu0 %v3884
        %3886 = vmatprep.subr.mxu0 0.0
        %v3887 = vand.u32 %v2178, 4294901760
        %3888 = vmatpush1.msra.mxu0 %v3887
        %3889 = vmatprep.subr.mxu0 0.0
        %v3890 = vand.u32 %v2179, 4294901760
        %3891 = vmatpush1.msra.mxu0 %v3890
        %3892 = vmatprep.subr.mxu0 0.0
        %v3893 = vand.u32 %v2180, 4294901760
        %3894 = vmatpush1.msra.mxu0 %v3893
        %3895 = vmatprep.subr.mxu0 0.0
        %v3896 = vand.u32 %v2181, 4294901760
        %3897 = vmatpush1.msra.mxu0 %v3896
        %3898 = vmatprep.subr.mxu0 0.0
        %v3899 = vand.u32 %v2182, 4294901760
        %3900 = vmatpush1.msra.mxu0 %v3899
        %v3901 = vand.u32 %v2118, 4294901760
        %3902 = vmatprep.mubr.f32.mxu0 %v3901
        %v3903 = vand.u32 %v2117, 4294901760
        %3904 = vmatmul.mubr.f32.gmra.mrb[0].mxu0 %v3903
        %v3905 = vpop.f32.mrb[0].mxu0
        %v3906 = vadd.f32 %v3802, %v3905
        %v3907 = vpop.f32.mrb[0].mxu0
        %3908 = vdwg.mxu0
        %v3909 = vxor.u32 %v3906, 2147483648
        %v3910 = vmul.f32 %v3909, 1.442695
        %v3911 = vpow.pop %v3910
        %v3912 = vadd.f32 %v3911, 1.0
        %v3913 = vrcp.pop %v3912
        %v3914 = vmul.f32 1.0, %v3913
        %vm3915 = vcmask 31744
        %3916 = vst.msk [vmem:[%s258] sm:$0xff] %vm3915, %v3914
        %p3917 = scmp.lt.s32.totalorder %s22, 1
        %s3918 = scalar_select %p3917, %s22, 1
        %s3919 = smul.addr %s3918, 8
        %s3920 = scalar_lea.vmem %s5, %s3919
        %s3921 = sand.u32 %s166, 1
        %s3922 = scalar_lea.sflag [#allocation4], %s3921
        %s3923 = sand.u32 %s166, 1
        %s3924 = smul.addr %s3923, 8
        %s3925 = scalar_lea.vmem [#allocation3], %s3924
        // Predicated region
        $region41: #{tpu_custom_call.1} parent=39 // pred_check
          %p3926 = pneg %p150
        $region42: #{tpu_custom_call.1} parent=39 // pred_check_branch
          %3928 = sbr.rel (%p3926) target = $region44
        $region43: #{tpu_custom_call.1} parent=39 // pred_region
          _
        $region44: #{tpu_custom_call.1} parent=39 // pred_fallthru
          _
        // Predicated region
        $region45: #{tpu_custom_call.1} parent=39 // pred_check
          %p3929 = pneg %p176
        $region46: #{tpu_custom_call.1} parent=39 // pred_check_branch
          %3931 = sbr.rel (%p3929) target = $region48
        $region47: #{tpu_custom_call.1} parent=39 // pred_region
          %s3933 = ssub.s32 128, 128
          %3934 = vsyncadd %s3922, %s3933
          %s3935 = smul.addr %s22, 128
          %s3936 = scalar_lea.hbm %s6, %s3935
          %s3938 = sshll.u32 %s3925, 4
          %s3939 = int_to_ptr.vmem [resolvable:$true] %s3938
          %3941 = dma.vmem_to_hbm [thread:$0]  %s3939, 128, %s3936, %s3922
        $region48: #{tpu_custom_call.1} parent=39 // pred_fallthru
          _
      $region40: #{tpu_custom_call.1} parent=5 // pred_fallthru
        _
      %p3942 = scmp.le.s32.totalorder 2, %s17
      // Predicated region
      $region49: #{tpu_custom_call.1} parent=5 // pred_check
        %p3943 = pneg %p3942
      $region50: #{tpu_custom_call.1} parent=5 // pred_check_branch
        %3945 = sbr.rel (%p3943) target = $region52
      $region51: #{tpu_custom_call.1} parent=5 // pred_region
        %s3946 = ssub.s32 %s17, 2
        // Predicated region
        $region53: #{tpu_custom_call.1} parent=51 // pred_check
          %p3947 = pneg %p156
        $region54: #{tpu_custom_call.1} parent=51 // pred_check_branch
          %3949 = sbr.rel (%p3947) target = $region56
        $region55: #{tpu_custom_call.1} parent=51 // pred_region
          %p3950 = scmp.lt.s32.totalorder %s23, 1
          %s3951 = scalar_select %p3950, %s23, 1
          %s3952 = smul.addr %s3951, 8
          %s3953 = scalar_lea.vmem %s5, %s3952
        $region56: #{tpu_custom_call.1} parent=51 // pred_fallthru
          _
        // Predicated region
        $region57: #{tpu_custom_call.1} parent=51 // pred_check
          %p3954 = pneg %p182
        $region58: #{tpu_custom_call.1} parent=51 // pred_check_branch
          %3956 = sbr.rel (%p3954) target = $region60
        $region59: #{tpu_custom_call.1} parent=51 // pred_region
          %s3957 = sand.u32 %s167, 1
          %s3958 = scalar_lea.sflag [#allocation4], %s3957
          %s3959 = sand.u32 %s167, 1
          %s3960 = smul.addr %s3959, 8
          %s3961 = scalar_lea.vmem [#allocation3], %s3960
          %3962 = dma.done %s3958, 128
        $region60: #{tpu_custom_call.1} parent=51 // pred_fallthru
          _
      $region52: #{tpu_custom_call.1} parent=5 // pred_fallthru
        _
    $region6: #{tpu_custom_call.1} parent=1 // loop_footer
      %s21 = sadd.s32 1, %s17
    $region7: #{tpu_custom_call.1} parent=1 // loop_footer_branch
      %16 = sbr.rel target = $region3
    $region8: #{tpu_custom_call.1} parent=1 // loop_exit
      _
    %3963 = vsyncpa [#allocation4], 1
    %s3964 = scalar_lea.sflag [#allocation4], 1
    %3965 = vsyncpa %s3964, 1

</llo_original>
